<compile_context>
chip_gen: v7x
topology: tpu7x:2x2x1
jax: 0.10.0
libtpu: 0.0.40
codegen_flags: <defaults>
</compile_context>

<pallas_src>
import functools

import jax
import jax.numpy as jnp
from jax import lax
from jax.experimental import pallas as pl
from jax.experimental.pallas import tpu as pltpu


# ----------------------------------------------------------------------------
# Single fused kernel
# ----------------------------------------------------------------------------
def do_kernel(x_idx_ref, c_idx_ref, raw_tab_ref,
              wchar_ref, bchar_ref, whc_ref,
              wi1_ref, b1_ref, whblk1_ref,
              wi2_ref, b2_ref, whblk2_ref,
              whead_ref, bhead_ref,
              gf_ref, betaf_ref, ge_ref, betae_ref,
              out_ref, *, d, n, nch):
    f32 = jnp.float32
    TB = n * d                       # encoder rows, time-major (row = t*d + b)
    Bc, Tc = TB, nch                 # char LSTM: batch = all words, time = chars
    vsize = raw_tab_ref.shape[0]
    csize = wchar_ref.shape[0]
    Hc = whc_ref.shape[0]
    H = whblk1_ref.shape[0] // 2
    F = gf_ref.shape[1]

    # ---- embedding gathers as one-hot MXU matmuls (tables are tiny) --------
    x_idx = x_idx_ref[...]                                         # (TB, 1) i32
    oh_x = jnp.where(
        x_idx == lax.broadcasted_iota(jnp.int32, (TB, vsize), 1), 1.0, 0.0)
    raw_emb = jnp.dot(oh_x, raw_tab_ref[...],
                      preferred_element_type=f32)                  # (TB, raw)

    c_idx = c_idx_ref[...]                                         # (Tc*Bc, 1)
    oh_c = jnp.where(
        c_idx == lax.broadcasted_iota(jnp.int32, (Tc * Bc, csize), 1), 1.0, 0.0)
    # char_table is pre-folded into wchar: gather + input->gate proj = 1 matmul.
    gxc = (jnp.dot(oh_c, wchar_ref[...], preferred_element_type=f32)
           + bchar_ref[...])                                       # (Tc*Bc, 8Hc)

    # ---- char forward recurrence (gate column order i,f,o,g) ---------------
    whc = whc_ref[...]
    hf = jnp.zeros((Bc, Hc), f32)
    cf = jnp.zeros((Bc, Hc), f32)
    gxcf = gxc[:, :4 * Hc]
    for t in range(Tc):                                            # unrolled
        g = gxcf[t * Bc:(t + 1) * Bc, :] + jnp.dot(
            hf, whc, preferred_element_type=f32)
        s = jax.nn.sigmoid(g[:, :3 * Hc])          # one EUP stream: i, f, o
        gg = jnp.tanh(g[:, 3 * Hc:])
        cf = s[:, Hc:2 * Hc] * cf + s[:, :Hc] * gg
        hf = s[:, 2 * Hc:3 * Hc] * jnp.tanh(cf)

    # Char backward: only output[:, -1, :] is consumed downstream, i.e. the
    # backward cell after its FIRST step (char position Tc-1) from zero state,
    # so h_prev = c_prev = 0 and the recurrent matmul / forget term vanish.
    gb = gxc[(Tc - 1) * Bc:Tc * Bc, 4 * Hc:]
    sb = jax.nn.sigmoid(gb[:, :3 * Hc])
    cb = sb[:, :Hc] * jnp.tanh(gb[:, 3 * Hc:])
    hb = sb[:, 2 * Hc:3 * Hc] * jnp.tanh(cb)

    word_repr = jnp.concatenate([raw_emb, hf, hb], axis=-1)        # (TB, we)

    # ---- 2-layer bidirectional encoder, fwd+bwd fused per step -------------
    B, T = d, n

    def bilstm(gx, whblk_ref):
        # gx (T*B, 16H): forward gates live in blocks {0,2,4,6} of gx[:, :8H],
        # backward gates in (local) blocks {1,3,5,7} of gx[:, 8H:] (zero
        # padded elsewhere), so the per-step sum gives the interleaved layout
        # [i_f,i_b,f_f,f_b,o_f,o_b,g_f,g_b] matching the block-diag whblk.
        gxf = gx[:, :8 * H]
        gxb = gx[:, 8 * H:]
        whblk = whblk_ref[...]                                     # (2H, 8H)
        h = jnp.zeros((B, 2 * H), f32)
        c = jnp.zeros((B, 2 * H), f32)
        outs_f = [None] * T
        outs_b = [None] * T
        for t in range(T):                                         # unrolled
            tb = T - 1 - t
            g = (gxf[t * B:(t + 1) * B, :] + gxb[tb * B:(tb + 1) * B, :]
                 + jnp.dot(h, whblk, preferred_element_type=f32))  # (B, 8H)
            s = jax.nn.sigmoid(g[:, :6 * H])       # one sigmoid: i, f, o
            gg = jnp.tanh(g[:, 6 * H:])            # one tanh: g
            c = s[:, 2 * H:4 * H] * c + s[:, :2 * H] * gg
            h = s[:, 4 * H:6 * H] * jnp.tanh(c)
            outs_f[t] = h[:, :H]
            outs_b[tb] = h[:, H:]
        # Two contiguous time-major stacks; never lane-concatenated.
        return (jnp.concatenate(outs_f, axis=0),
                jnp.concatenate(outs_b, axis=0))                   # (T*B, H) x2

    gx1 = (jnp.dot(word_repr, wi1_ref[...], preferred_element_type=f32)
           + b1_ref[...])
    hf1, hb1 = bilstm(gx1, whblk1_ref)

    wi2 = wi2_ref[...]
    gx2 = (jnp.dot(hf1, wi2[:H, :], preferred_element_type=f32)
           + jnp.dot(hb1, wi2[H:, :], preferred_element_type=f32)
           + b2_ref[...])
    hf2, hb2 = bilstm(gx2, whblk2_ref)

    # ---- fused heads on row-split hidden (no [hf|hb] lane concat) ----------
    whead = whead_ref[...]
    y = (jnp.dot(hf2, whead[:H, :], preferred_element_type=f32)
         + jnp.dot(hb2, whead[H:, :], preferred_element_type=f32)
         + bhead_ref[...])                                         # (TB, F+nl)
    yf = y[:, :F]
    ye = y[:, F:]

    def layernorm(v, gamma, beta):
        mu = jnp.mean(v, axis=-1, keepdims=True)
        var = jnp.mean(jnp.square(v - mu), axis=-1, keepdims=True)
        return (v - mu) * lax.rsqrt(var + 1e-5) * gamma + beta

    # TODO(synk): nn.Dropout after each LayerNorm is stochastic; treated as
    # identity (inference semantics).
    feat = layernorm(yf, gf_ref[...], betaf_ref[...])
    ye_n = layernorm(ye, ge_ref[...], betae_ref[...])

    m = jnp.max(ye_n, axis=-1, keepdims=True)
    e = jnp.exp(ye_n - m)
    probs = e / jnp.sum(e, axis=-1, keepdims=True)   # exact softmax division
    pmax = jnp.max(probs, axis=-1, keepdims=True)
    probs = jnp.where(probs == pmax, probs, 0.0)     # tie-keeping mask (= ref)

    # Single lane-contiguous output slab: [word_repr | features | probs].
    out_ref[...] = jnp.concatenate([word_repr, feat, probs], axis=-1)


# ----------------------------------------------------------------------------
# One-time weight packing (outside the per-call path)
# ----------------------------------------------------------------------------
def _split4(w, h):
    # PyTorch LSTM gate column order: i, f, g, o
    return w[:, 0:h], w[:, h:2 * h], w[:, 2 * h:3 * h], w[:, 3 * h:4 * h]


def pack_params(params):
    char_table = params["char_table"]
    cp = params["char_lstm"]
    Hc = cp["whf"].shape[0]
    i_f, f_f, g_f, o_f = _split4(cp["wif"], Hc)
    i_b, f_b, g_b, o_b = _split4(cp["wib"], Hc)
    # Fold the char embedding table into the input->gate weights; gate order
    # i,f,o,g so one sigmoid covers i,f,o.
    wchar = char_table @ jnp.concatenate(
        [i_f, f_f, o_f, g_f, i_b, f_b, o_b, g_b], axis=1)           # (48, 8Hc)
    bi_f, bf_f, bg_f, bo_f = _split4(cp["bf"], Hc)
    bi_b, bf_b, bg_b, bo_b = _split4(cp["bb"], Hc)
    bchar = jnp.concatenate(
        [bi_f, bf_f, bo_f, bg_f, bi_b, bf_b, bo_b, bg_b], axis=1)   # (1, 8Hc)
    hi, hff, hg, ho = _split4(cp["whf"], Hc)
    whc = jnp.concatenate([hi, hff, ho, hg], axis=1)                # (Hc, 4Hc)

    def pack_enc(lp):
        H = lp["whf"].shape[0]
        I = lp["wif"].shape[0]
        zI = jnp.zeros((I, H), jnp.float32)
        zb = jnp.zeros((1, H), jnp.float32)
        zH = jnp.zeros((H, H), jnp.float32)
        i_f, f_f, g_f, o_f = _split4(lp["wif"], H)
        i_b, f_b, g_b, o_b = _split4(lp["wib"], H)
        wi = jnp.concatenate(
            [i_f, zI, f_f, zI, o_f, zI, g_f, zI,      # fwd -> blocks 0,2,4,6
             zI, i_b, zI, f_b, zI, o_b, zI, g_b],     # bwd -> blocks 1,3,5,7
            axis=1)                                                  # (I, 16H)
        bi_f, bf_f, bg_f, bo_f = _split4(lp["bf"], H)
        bi_b, bf_b, bg_b, bo_b = _split4(lp["bb"], H)
        b = jnp.concatenate(
            [bi_f, zb, bf_f, zb, bo_f, zb, bg_f, zb,
             zb, bi_b, zb, bf_b, zb, bo_b, zb, bg_b], axis=1)        # (1, 16H)
        hi_f, hf_f, hg_f, ho_f = _split4(lp["whf"], H)
        hi_b, hf_b, hg_b, ho_b = _split4(lp["whb"], H)
        whblk = jnp.concatenate(
            [jnp.concatenate([hi_f, zH, hf_f, zH, ho_f, zH, hg_f, zH], axis=1),
             jnp.concatenate([zH, hi_b, zH, hf_b, zH, ho_b, zH, hg_b], axis=1)],
            axis=0)                                                  # (2H, 8H)
        return wi, b, whblk

    wi1, b1, whblk1 = pack_enc(params["enc_l1"])
    wi2, b2, whblk2 = pack_enc(params["enc_l2"])

    fw, fb, fg, fbeta = params["features_fc"]
    ew, eb, eg, ebeta = params["encoder_fc"]
    whead = jnp.concatenate([fw, ew], axis=1)                        # (we, F+nl)
    bhead = jnp.concatenate([fb, eb], axis=1)

    return dict(raw_table=params["raw_table"], wchar=wchar, bchar=bchar,
                whc=whc, wi1=wi1, b1=b1, whblk1=whblk1,
                wi2=wi2, b2=b2, whblk2=whblk2, whead=whead, bhead=bhead,
                gf=fg, betaf=fbeta, ge=eg, betae=ebeta)


# ----------------------------------------------------------------------------
# Full `Do.forward`
# ----------------------------------------------------------------------------
def do_forward(packed, x, c):
    d, n = x.shape
    nch = c.shape[-1]
    raw = packed["raw_table"].shape[1]
    ce = 2 * packed["whc"].shape[0]
    we = raw + ce
    F = packed["gf"].shape[1]
    nl = packed["ge"].shape[1]
    C = we + F + nl

    # Time-major index layouts; flatten folded into the host-side transpose.
    x_idx = x.T.reshape(n * d, 1).astype(jnp.int32)                  # row = t*d+b
    c_idx = jnp.transpose(c, (2, 1, 0)).reshape(nch * n * d, 1).astype(jnp.int32)

    vmem = pl.BlockSpec(memory_space=pltpu.MemorySpace.VMEM)
    slab = pl.pallas_call(
        functools.partial(do_kernel, d=d, n=n, nch=nch),
        out_shape=jax.ShapeDtypeStruct((n * d, C), jnp.float32),
        in_specs=[vmem] * 18,
        out_specs=vmem,
    )(x_idx, c_idx, packed["raw_table"], packed["wchar"], packed["bchar"],
      packed["whc"], packed["wi1"], packed["b1"], packed["whblk1"],
      packed["wi2"], packed["b2"], packed["whblk2"],
      packed["whead"], packed["bhead"],
      packed["gf"], packed["betaf"], packed["ge"], packed["betae"])

    slab = jnp.transpose(slab.reshape(n, d, C), (1, 0, 2))           # (d, n, C)
    word_repr = slab[:, :, :we]
    features = slab[:, :, we:we + F]
    probs = slab[:, :, we + F:]
    return word_repr, features, probs


# ----------------------------------------------------------------------------
# Pure-JAX reference (mirrors the PyTorch module) for a loose numeric check
# ----------------------------------------------------------------------------
def reference_forward(params, x, c):
    d, n = x.shape
    nch = c.shape[-1]
    raw_emb = jnp.take(params["raw_table"], x, axis=0)
    char_emb = jnp.take(params["char_table"], c, axis=0)
    ce = char_emb.shape[-1]
    char_seq = char_emb.reshape(d * n, nch, ce)

    def lstm_dir(xs, wi, wh, b, reverse):
        Bsz, T, _ = xs.shape
        H = wh.shape[0]
        h = jnp.zeros((Bsz, H), jnp.float32)
        cst = jnp.zeros((Bsz, H), jnp.float32)
        outs = [None] * T
        order = range(T - 1, -1, -1) if reverse else range(T)
        for t in order:
            g = xs[:, t, :] @ wi + h @ wh + b
            i = jax.nn.sigmoid(g[:, :H])
            f = jax.nn.sigmoid(g[:, H:2 * H])
            gg = jnp.tanh(g[:, 2 * H:3 * H])
            o = jax.nn.sigmoid(g[:, 3 * H:])
            cst = f * cst + i * gg
            h = o * jnp.tanh(cst)
            outs[t] = h
        return jnp.stack(outs, axis=1)

    def bilstm(xs, p):
        of = lstm_dir(xs, p["wif"], p["whf"], p["bf"], False)
        ob = lstm_dir(xs, p["wib"], p["whb"], p["bb"], True)
        return jnp.concatenate([of, ob], axis=-1)

    char_out = bilstm(char_seq, params["char_lstm"])
    char_repr = char_out[:, -1, :].reshape(d, n, ce)
    word_repr = jnp.concatenate([raw_emb, char_repr], axis=-1)

    h1 = bilstm(word_repr, params["enc_l1"])
    h2 = bilstm(h1, params["enc_l2"])

    def head(v, w, b, gamma, beta):
        y = v @ w + b
        mu = jnp.mean(y, axis=-1, keepdims=True)
        var = jnp.mean(jnp.square(y - mu), axis=-1, keepdims=True)
        return (y - mu) / jnp.sqrt(var + 1e-5) * gamma + beta

    fw, fb, fg, fbeta = params["features_fc"]
    ew, eb, eg, ebeta = params["encoder_fc"]
    features = head(h2, fw, fb, fg, fbeta)
    probs = jax.nn.softmax(head(h2, ew, eb, eg, ebeta), axis=-1)
    mask = probs == jnp.max(probs, axis=-1, keepdims=True)
    return word_repr, features, mask * probs


# ----------------------------------------------------------------------------
# Deterministic synthetic parameters (shapes per the module __init__)
# ----------------------------------------------------------------------------
def init_params(key, *, vsize=50, raw=16, ce=16, feature_size=32, nl=8):
    we = raw + ce
    keys = iter(jax.random.split(key, 64))

    def rnd(shape, scale=0.1):
        return jax.random.normal(next(keys), shape, jnp.float32) * scale

    def lstm_params(I, H):
        return dict(
            wif=rnd((I, 4 * H)), whf=rnd((H, 4 * H)), bf=rnd((1, 4 * H)),
            wib=rnd((I, 4 * H)), whb=rnd((H, 4 * H)), bb=rnd((1, 4 * H)))

    return dict(
        raw_table=rnd((vsize, raw), 1.0),
        char_table=rnd((48, ce), 1.0),
        char_lstm=lstm_params(ce, ce // 2),
        enc_l1=lstm_params(we, we // 2),
        enc_l2=lstm_params(we, we // 2),
        features_fc=(rnd((we, feature_size)), rnd((1, feature_size)),
                     jnp.ones((1, feature_size), jnp.float32),
                     jnp.zeros((1, feature_size), jnp.float32)),
        encoder_fc=(rnd((we, nl)), rnd((1, nl)),
                    jnp.ones((1, nl), jnp.float32),
                    jnp.zeros((1, nl), jnp.float32)),
    )


if __name__ == "__main__":
    key = jax.random.PRNGKey(0)
    pkey, xkey, ckey = jax.random.split(key, 3)

    d, n, nch = 2, 8, 6
    vsize, nl = 50, 8
    raw, ce, feature_size = 16, 16, 32

    params = init_params(pkey, vsize=vsize, raw=raw, ce=ce,
                         feature_size=feature_size, nl=nl)
    packed = pack_params(params)                     # one-time, outside forward
    x = jax.random.randint(xkey, (d, n), 0, vsize, dtype=jnp.int32)
    c = jax.random.randint(ckey, (d, n, nch), 0, 48, dtype=jnp.int32)

    word_repr, features, probs = jax.jit(do_forward)(packed, x, c)
    jax.block_until_ready((word_repr, features, probs))

    assert word_repr.shape == (d, n, raw + ce)
    assert features.shape == (d, n, feature_size)
    assert probs.shape == (d, n, nl)
    assert bool(jnp.all(jnp.isfinite(word_repr)))
    assert bool(jnp.all(jnp.isfinite(features)))
    assert bool(jnp.all(jnp.isfinite(probs)))
    assert bool(jnp.all(probs >= 0.0))

    # Loose agreement with a pure-JAX reference (tolerance covers matmul
    # precision differences; catches packing / gate-order bugs).
    ref_w, ref_f, ref_p = jax.jit(reference_forward)(params, x, c)
    assert bool(jnp.allclose(word_repr, ref_w, atol=1e-1, rtol=1e-1))
    assert bool(jnp.allclose(features, ref_f, atol=1e-1, rtol=1e-1))
    assert bool(jnp.allclose(probs, ref_p, atol=1e-1, rtol=1e-1))

    print("KERNEL_OK")
</pallas_src>

<mosaic_0001>
module attributes {stable_mosaic.version = 11 : i64} {
  func.func @do_kernel(%arg0: memref<16x1xi32, #tpu.memory_space<vmem>>, %arg1: memref<96x1xi32, #tpu.memory_space<vmem>>, %arg2: memref<50x16xf32, #tpu.memory_space<vmem>>, %arg3: memref<48x64xf32, #tpu.memory_space<vmem>>, %arg4: memref<1x64xf32, #tpu.memory_space<vmem>>, %arg5: memref<8x32xf32, #tpu.memory_space<vmem>>, %arg6: memref<32x256xf32, #tpu.memory_space<vmem>>, %arg7: memref<1x256xf32, #tpu.memory_space<vmem>>, %arg8: memref<32x128xf32, #tpu.memory_space<vmem>>, %arg9: memref<32x256xf32, #tpu.memory_space<vmem>>, %arg10: memref<1x256xf32, #tpu.memory_space<vmem>>, %arg11: memref<32x128xf32, #tpu.memory_space<vmem>>, %arg12: memref<32x40xf32, #tpu.memory_space<vmem>>, %arg13: memref<1x40xf32, #tpu.memory_space<vmem>>, %arg14: memref<1x32xf32, #tpu.memory_space<vmem>>, %arg15: memref<1x32xf32, #tpu.memory_space<vmem>>, %arg16: memref<1x8xf32, #tpu.memory_space<vmem>>, %arg17: memref<1x8xf32, #tpu.memory_space<vmem>>, %arg18: memref<16x72xf32, #tpu.memory_space<vmem>>) attributes {dimension_semantics = [], scalar_prefetch = 0 : i64, scratch_operands = 0 : i64, tpu.core_type = #tpu.core_type<tc>} {
    %c0 = arith.constant 0 : index
    %c0_0 = arith.constant 0 : index
    %0 = vector.load %arg0[%c0, %c0_0] : memref<16x1xi32, #tpu.memory_space<vmem>>, vector<16x1xi32>
    %1 = tpu.iota {dimensions = array<i32: 1>} : vector<16x50xi32>
    %2 = vector.broadcast %0 : vector<16x1xi32> to vector<16x50xi32>
    %3 = arith.cmpi eq, %2, %1 : vector<16x50xi32>
    %cst = arith.constant 1.000000e+00 : f32
    %cst_1 = arith.constant 0.000000e+00 : f32
    %4 = vector.broadcast %cst : f32 to vector<16x50xf32>
    %5 = vector.broadcast %cst_1 : f32 to vector<16x50xf32>
    %6 = arith.select %3, %4, %5 : vector<16x50xi1>, vector<16x50xf32>
    %c0_2 = arith.constant 0 : index
    %c0_3 = arith.constant 0 : index
    %7 = vector.load %arg2[%c0_2, %c0_3] : memref<50x16xf32, #tpu.memory_space<vmem>>, vector<50x16xf32>
    %cst_4 = arith.constant dense<0.000000e+00> : vector<16x16xf32>
    %8 = tpu.matmul %6, %7, %cst_4 {dimension_numbers = #tpu.dot_dimension_numbers<[1], [0], [0], [1], [0, 0, 1, 1], [], []>} : vector<16x50xf32>, vector<50x16xf32>, vector<16x16xf32> -> vector<16x16xf32>
    %c0_5 = arith.constant 0 : index
    %c0_6 = arith.constant 0 : index
    %9 = vector.load %arg1[%c0_5, %c0_6] : memref<96x1xi32, #tpu.memory_space<vmem>>, vector<96x1xi32>
    %10 = tpu.iota {dimensions = array<i32: 1>} : vector<96x48xi32>
    %11 = vector.broadcast %9 : vector<96x1xi32> to vector<96x48xi32>
    %12 = arith.cmpi eq, %11, %10 : vector<96x48xi32>
    %cst_7 = arith.constant 1.000000e+00 : f32
    %cst_8 = arith.constant 0.000000e+00 : f32
    %13 = vector.broadcast %cst_7 : f32 to vector<96x48xf32>
    %14 = vector.broadcast %cst_8 : f32 to vector<96x48xf32>
    %15 = arith.select %12, %13, %14 : vector<96x48xi1>, vector<96x48xf32>
    %c0_9 = arith.constant 0 : index
    %c0_10 = arith.constant 0 : index
    %16 = vector.load %arg3[%c0_9, %c0_10] : memref<48x64xf32, #tpu.memory_space<vmem>>, vector<48x64xf32>
    %cst_11 = arith.constant dense<0.000000e+00> : vector<96x64xf32>
    %17 = tpu.matmul %15, %16, %cst_11 {dimension_numbers = #tpu.dot_dimension_numbers<[1], [0], [0], [1], [0, 0, 1, 1], [], []>} : vector<96x48xf32>, vector<48x64xf32>, vector<96x64xf32> -> vector<96x64xf32>
    %c0_12 = arith.constant 0 : index
    %c0_13 = arith.constant 0 : index
    %18 = vector.load %arg4[%c0_12, %c0_13] : memref<1x64xf32, #tpu.memory_space<vmem>>, vector<1x64xf32>
    %19 = vector.broadcast %18 : vector<1x64xf32> to vector<96x64xf32>
    %20 = arith.addf %17, %19 : vector<96x64xf32>
    %c0_14 = arith.constant 0 : index
    %c0_15 = arith.constant 0 : index
    %21 = vector.load %arg5[%c0_14, %c0_15] : memref<8x32xf32, #tpu.memory_space<vmem>>, vector<8x32xf32>
    %cst_16 = arith.constant 0.000000e+00 : f32
    %22 = vector.broadcast %cst_16 : f32 to vector<16x8xf32>
    %cst_17 = arith.constant 0.000000e+00 : f32
    %23 = vector.broadcast %cst_17 : f32 to vector<16x8xf32>
    %24 = vector.extract_strided_slice %20 {offsets = [0, 0], sizes = [96, 32], strides = [1, 1]} : vector<96x64xf32> to vector<96x32xf32>
    %25 = vector.extract_strided_slice %24 {offsets = [0, 0], sizes = [16, 32], strides = [1, 1]} : vector<96x32xf32> to vector<16x32xf32>
    %cst_18 = arith.constant dense<0.000000e+00> : vector<16x32xf32>
    %26 = tpu.matmul %22, %21, %cst_18 {dimension_numbers = #tpu.dot_dimension_numbers<[1], [0], [0], [1], [0, 0, 1, 1], [], []>} : vector<16x8xf32>, vector<8x32xf32>, vector<16x32xf32> -> vector<16x32xf32>
    %27 = arith.addf %25, %26 : vector<16x32xf32>
    %28 = vector.extract_strided_slice %27 {offsets = [0, 0], sizes = [16, 24], strides = [1, 1]} : vector<16x32xf32> to vector<16x24xf32>
    %29 = arith.negf %28 : vector<16x24xf32>
    %30 = math.exp %29 : vector<16x24xf32>
    %cst_19 = arith.constant 1.000000e+00 : f32
    %31 = vector.broadcast %cst_19 : f32 to vector<16x24xf32>
    %32 = arith.addf %31, %30 : vector<16x24xf32>
    %33 = arith.divf %31, %32 : vector<16x24xf32>
    %34 = vector.extract_strided_slice %27 {offsets = [0, 24], sizes = [16, 8], strides = [1, 1]} : vector<16x32xf32> to vector<16x8xf32>
    %35 = math.tanh %34 : vector<16x8xf32>
    %36 = vector.extract_strided_slice %33 {offsets = [0, 8], sizes = [16, 8], strides = [1, 1]} : vector<16x24xf32> to vector<16x8xf32>
    %37 = arith.mulf %36, %23 : vector<16x8xf32>
    %38 = vector.extract_strided_slice %33 {offsets = [0, 0], sizes = [16, 8], strides = [1, 1]} : vector<16x24xf32> to vector<16x8xf32>
    %39 = arith.mulf %38, %35 : vector<16x8xf32>
    %40 = arith.addf %37, %39 : vector<16x8xf32>
    %41 = vector.extract_strided_slice %33 {offsets = [0, 16], sizes = [16, 8], strides = [1, 1]} : vector<16x24xf32> to vector<16x8xf32>
    %42 = math.tanh %40 : vector<16x8xf32>
    %43 = arith.mulf %41, %42 : vector<16x8xf32>
    %44 = vector.extract_strided_slice %24 {offsets = [16, 0], sizes = [16, 32], strides = [1, 1]} : vector<96x32xf32> to vector<16x32xf32>
    %cst_20 = arith.constant dense<0.000000e+00> : vector<16x32xf32>
    %45 = tpu.matmul %43, %21, %cst_20 {dimension_numbers = #tpu.dot_dimension_numbers<[1], [0], [0], [1], [0, 0, 1, 1], [], []>} : vector<16x8xf32>, vector<8x32xf32>, vector<16x32xf32> -> vector<16x32xf32>
    %46 = arith.addf %44, %45 : vector<16x32xf32>
    %47 = vector.extract_strided_slice %46 {offsets = [0, 0], sizes = [16, 24], strides = [1, 1]} : vector<16x32xf32> to vector<16x24xf32>
    %48 = arith.negf %47 : vector<16x24xf32>
    %49 = math.exp %48 : vector<16x24xf32>
    %cst_21 = arith.constant 1.000000e+00 : f32
    %50 = vector.broadcast %cst_21 : f32 to vector<16x24xf32>
    %51 = arith.addf %50, %49 : vector<16x24xf32>
    %52 = arith.divf %50, %51 : vector<16x24xf32>
    %53 = vector.extract_strided_slice %46 {offsets = [0, 24], sizes = [16, 8], strides = [1, 1]} : vector<16x32xf32> to vector<16x8xf32>
    %54 = math.tanh %53 : vector<16x8xf32>
    %55 = vector.extract_strided_slice %52 {offsets = [0, 8], sizes = [16, 8], strides = [1, 1]} : vector<16x24xf32> to vector<16x8xf32>
    %56 = arith.mulf %55, %40 : vector<16x8xf32>
    %57 = vector.extract_strided_slice %52 {offsets = [0, 0], sizes = [16, 8], strides = [1, 1]} : vector<16x24xf32> to vector<16x8xf32>
    %58 = arith.mulf %57, %54 : vector<16x8xf32>
    %59 = arith.addf %56, %58 : vector<16x8xf32>
    %60 = vector.extract_strided_slice %52 {offsets = [0, 16], sizes = [16, 8], strides = [1, 1]} : vector<16x24xf32> to vector<16x8xf32>
    %61 = math.tanh %59 : vector<16x8xf32>
    %62 = arith.mulf %60, %61 : vector<16x8xf32>
    %63 = vector.extract_strided_slice %24 {offsets = [32, 0], sizes = [16, 32], strides = [1, 1]} : vector<96x32xf32> to vector<16x32xf32>
    %cst_22 = arith.constant dense<0.000000e+00> : vector<16x32xf32>
    %64 = tpu.matmul %62, %21, %cst_22 {dimension_numbers = #tpu.dot_dimension_numbers<[1], [0], [0], [1], [0, 0, 1, 1], [], []>} : vector<16x8xf32>, vector<8x32xf32>, vector<16x32xf32> -> vector<16x32xf32>
    %65 = arith.addf %63, %64 : vector<16x32xf32>
    %66 = vector.extract_strided_slice %65 {offsets = [0, 0], sizes = [16, 24], strides = [1, 1]} : vector<16x32xf32> to vector<16x24xf32>
    %67 = arith.negf %66 : vector<16x24xf32>
    %68 = math.exp %67 : vector<16x24xf32>
    %cst_23 = arith.constant 1.000000e+00 : f32
    %69 = vector.broadcast %cst_23 : f32 to vector<16x24xf32>
    %70 = arith.addf %69, %68 : vector<16x24xf32>
    %71 = arith.divf %69, %70 : vector<16x24xf32>
    %72 = vector.extract_strided_slice %65 {offsets = [0, 24], sizes = [16, 8], strides = [1, 1]} : vector<16x32xf32> to vector<16x8xf32>
    %73 = math.tanh %72 : vector<16x8xf32>
    %74 = vector.extract_strided_slice %71 {offsets = [0, 8], sizes = [16, 8], strides = [1, 1]} : vector<16x24xf32> to vector<16x8xf32>
    %75 = arith.mulf %74, %59 : vector<16x8xf32>
    %76 = vector.extract_strided_slice %71 {offsets = [0, 0], sizes = [16, 8], strides = [1, 1]} : vector<16x24xf32> to vector<16x8xf32>
    %77 = arith.mulf %76, %73 : vector<16x8xf32>
    %78 = arith.addf %75, %77 : vector<16x8xf32>
    %79 = vector.extract_strided_slice %71 {offsets = [0, 16], sizes = [16, 8], strides = [1, 1]} : vector<16x24xf32> to vector<16x8xf32>
    %80 = math.tanh %78 : vector<16x8xf32>
    %81 = arith.mulf %79, %80 : vector<16x8xf32>
    %82 = vector.extract_strided_slice %24 {offsets = [48, 0], sizes = [16, 32], strides = [1, 1]} : vector<96x32xf32> to vector<16x32xf32>
    %cst_24 = arith.constant dense<0.000000e+00> : vector<16x32xf32>
    %83 = tpu.matmul %81, %21, %cst_24 {dimension_numbers = #tpu.dot_dimension_numbers<[1], [0], [0], [1], [0, 0, 1, 1], [], []>} : vector<16x8xf32>, vector<8x32xf32>, vector<16x32xf32> -> vector<16x32xf32>
    %84 = arith.addf %82, %83 : vector<16x32xf32>
    %85 = vector.extract_strided_slice %84 {offsets = [0, 0], sizes = [16, 24], strides = [1, 1]} : vector<16x32xf32> to vector<16x24xf32>
    %86 = arith.negf %85 : vector<16x24xf32>
    %87 = math.exp %86 : vector<16x24xf32>
    %cst_25 = arith.constant 1.000000e+00 : f32
    %88 = vector.broadcast %cst_25 : f32 to vector<16x24xf32>
    %89 = arith.addf %88, %87 : vector<16x24xf32>
    %90 = arith.divf %88, %89 : vector<16x24xf32>
    %91 = vector.extract_strided_slice %84 {offsets = [0, 24], sizes = [16, 8], strides = [1, 1]} : vector<16x32xf32> to vector<16x8xf32>
    %92 = math.tanh %91 : vector<16x8xf32>
    %93 = vector.extract_strided_slice %90 {offsets = [0, 8], sizes = [16, 8], strides = [1, 1]} : vector<16x24xf32> to vector<16x8xf32>
    %94 = arith.mulf %93, %78 : vector<16x8xf32>
    %95 = vector.extract_strided_slice %90 {offsets = [0, 0], sizes = [16, 8], strides = [1, 1]} : vector<16x24xf32> to vector<16x8xf32>
    %96 = arith.mulf %95, %92 : vector<16x8xf32>
    %97 = arith.addf %94, %96 : vector<16x8xf32>
    %98 = vector.extract_strided_slice %90 {offsets = [0, 16], sizes = [16, 8], strides = [1, 1]} : vector<16x24xf32> to vector<16x8xf32>
    %99 = math.tanh %97 : vector<16x8xf32>
    %100 = arith.mulf %98, %99 : vector<16x8xf32>
    %101 = vector.extract_strided_slice %24 {offsets = [64, 0], sizes = [16, 32], strides = [1, 1]} : vector<96x32xf32> to vector<16x32xf32>
    %cst_26 = arith.constant dense<0.000000e+00> : vector<16x32xf32>
    %102 = tpu.matmul %100, %21, %cst_26 {dimension_numbers = #tpu.dot_dimension_numbers<[1], [0], [0], [1], [0, 0, 1, 1], [], []>} : vector<16x8xf32>, vector<8x32xf32>, vector<16x32xf32> -> vector<16x32xf32>
    %103 = arith.addf %101, %102 : vector<16x32xf32>
    %104 = vector.extract_strided_slice %103 {offsets = [0, 0], sizes = [16, 24], strides = [1, 1]} : vector<16x32xf32> to vector<16x24xf32>
    %105 = arith.negf %104 : vector<16x24xf32>
    %106 = math.exp %105 : vector<16x24xf32>
    %cst_27 = arith.constant 1.000000e+00 : f32
    %107 = vector.broadcast %cst_27 : f32 to vector<16x24xf32>
    %108 = arith.addf %107, %106 : vector<16x24xf32>
    %109 = arith.divf %107, %108 : vector<16x24xf32>
    %110 = vector.extract_strided_slice %103 {offsets = [0, 24], sizes = [16, 8], strides = [1, 1]} : vector<16x32xf32> to vector<16x8xf32>
    %111 = math.tanh %110 : vector<16x8xf32>
    %112 = vector.extract_strided_slice %109 {offsets = [0, 8], sizes = [16, 8], strides = [1, 1]} : vector<16x24xf32> to vector<16x8xf32>
    %113 = arith.mulf %112, %97 : vector<16x8xf32>
    %114 = vector.extract_strided_slice %109 {offsets = [0, 0], sizes = [16, 8], strides = [1, 1]} : vector<16x24xf32> to vector<16x8xf32>
    %115 = arith.mulf %114, %111 : vector<16x8xf32>
    %116 = arith.addf %113, %115 : vector<16x8xf32>
    %117 = vector.extract_strided_slice %109 {offsets = [0, 16], sizes = [16, 8], strides = [1, 1]} : vector<16x24xf32> to vector<16x8xf32>
    %118 = math.tanh %116 : vector<16x8xf32>
    %119 = arith.mulf %117, %118 : vector<16x8xf32>
    %120 = vector.extract_strided_slice %24 {offsets = [80, 0], sizes = [16, 32], strides = [1, 1]} : vector<96x32xf32> to vector<16x32xf32>
    %cst_28 = arith.constant dense<0.000000e+00> : vector<16x32xf32>
    %121 = tpu.matmul %119, %21, %cst_28 {dimension_numbers = #tpu.dot_dimension_numbers<[1], [0], [0], [1], [0, 0, 1, 1], [], []>} : vector<16x8xf32>, vector<8x32xf32>, vector<16x32xf32> -> vector<16x32xf32>
    %122 = arith.addf %120, %121 : vector<16x32xf32>
    %123 = vector.extract_strided_slice %122 {offsets = [0, 0], sizes = [16, 24], strides = [1, 1]} : vector<16x32xf32> to vector<16x24xf32>
    %124 = arith.negf %123 : vector<16x24xf32>
    %125 = math.exp %124 : vector<16x24xf32>
    %cst_29 = arith.constant 1.000000e+00 : f32
    %126 = vector.broadcast %cst_29 : f32 to vector<16x24xf32>
    %127 = arith.addf %126, %125 : vector<16x24xf32>
    %128 = arith.divf %126, %127 : vector<16x24xf32>
    %129 = vector.extract_strided_slice %122 {offsets = [0, 24], sizes = [16, 8], strides = [1, 1]} : vector<16x32xf32> to vector<16x8xf32>
    %130 = math.tanh %129 : vector<16x8xf32>
    %131 = vector.extract_strided_slice %128 {offsets = [0, 8], sizes = [16, 8], strides = [1, 1]} : vector<16x24xf32> to vector<16x8xf32>
    %132 = arith.mulf %131, %116 : vector<16x8xf32>
    %133 = vector.extract_strided_slice %128 {offsets = [0, 0], sizes = [16, 8], strides = [1, 1]} : vector<16x24xf32> to vector<16x8xf32>
    %134 = arith.mulf %133, %130 : vector<16x8xf32>
    %135 = arith.addf %132, %134 : vector<16x8xf32>
    %136 = vector.extract_strided_slice %128 {offsets = [0, 16], sizes = [16, 8], strides = [1, 1]} : vector<16x24xf32> to vector<16x8xf32>
    %137 = math.tanh %135 : vector<16x8xf32>
    %138 = arith.mulf %136, %137 : vector<16x8xf32>
    %139 = vector.extract_strided_slice %20 {offsets = [80, 32], sizes = [16, 32], strides = [1, 1]} : vector<96x64xf32> to vector<16x32xf32>
    %140 = vector.extract_strided_slice %139 {offsets = [0, 0], sizes = [16, 24], strides = [1, 1]} : vector<16x32xf32> to vector<16x24xf32>
    %141 = arith.negf %140 : vector<16x24xf32>
    %142 = math.exp %141 : vector<16x24xf32>
    %cst_30 = arith.constant 1.000000e+00 : f32
    %143 = vector.broadcast %cst_30 : f32 to vector<16x24xf32>
    %144 = arith.addf %143, %142 : vector<16x24xf32>
    %145 = arith.divf %143, %144 : vector<16x24xf32>
    %146 = vector.extract_strided_slice %145 {offsets = [0, 0], sizes = [16, 8], strides = [1, 1]} : vector<16x24xf32> to vector<16x8xf32>
    %147 = vector.extract_strided_slice %139 {offsets = [0, 24], sizes = [16, 8], strides = [1, 1]} : vector<16x32xf32> to vector<16x8xf32>
    %148 = math.tanh %147 : vector<16x8xf32>
    %149 = arith.mulf %146, %148 : vector<16x8xf32>
    %150 = vector.extract_strided_slice %145 {offsets = [0, 16], sizes = [16, 8], strides = [1, 1]} : vector<16x24xf32> to vector<16x8xf32>
    %151 = math.tanh %149 : vector<16x8xf32>
    %152 = arith.mulf %150, %151 : vector<16x8xf32>
    %153 = tpu.concatenate %8, %138, %152 in 1 : vector<16x16xf32>, vector<16x8xf32>, vector<16x8xf32> -> vector<16x32xf32>
    %c0_31 = arith.constant 0 : index
    %c0_32 = arith.constant 0 : index
    %154 = vector.load %arg6[%c0_31, %c0_32] : memref<32x256xf32, #tpu.memory_space<vmem>>, vector<32x256xf32>
    %cst_33 = arith.constant dense<0.000000e+00> : vector<16x256xf32>
    %155 = tpu.matmul %153, %154, %cst_33 {dimension_numbers = #tpu.dot_dimension_numbers<[1], [0], [0], [1], [0, 0, 1, 1], [], []>} : vector<16x32xf32>, vector<32x256xf32>, vector<16x256xf32> -> vector<16x256xf32>
    %c0_34 = arith.constant 0 : index
    %c0_35 = arith.constant 0 : index
    %156 = vector.load %arg7[%c0_34, %c0_35] : memref<1x256xf32, #tpu.memory_space<vmem>>, vector<1x256xf32>
    %157 = vector.broadcast %156 : vector<1x256xf32> to vector<16x256xf32>
    %158 = arith.addf %155, %157 : vector<16x256xf32>
    %159 = vector.extract_strided_slice %158 {offsets = [0, 0], sizes = [16, 128], strides = [1, 1]} : vector<16x256xf32> to vector<16x128xf32>
    %160 = vector.extract_strided_slice %158 {offsets = [0, 128], sizes = [16, 128], strides = [1, 1]} : vector<16x256xf32> to vector<16x128xf32>
    %c0_36 = arith.constant 0 : index
    %c0_37 = arith.constant 0 : index
    %161 = vector.load %arg8[%c0_36, %c0_37] : memref<32x128xf32, #tpu.memory_space<vmem>>, vector<32x128xf32>
    %cst_38 = arith.constant 0.000000e+00 : f32
    %162 = vector.broadcast %cst_38 : f32 to vector<2x32xf32>
    %cst_39 = arith.constant 0.000000e+00 : f32
    %163 = vector.broadcast %cst_39 : f32 to vector<2x32xf32>
    %164 = vector.extract_strided_slice %159 {offsets = [0, 0], sizes = [2, 128], strides = [1, 1]} : vector<16x128xf32> to vector<2x128xf32>
    %165 = vector.extract_strided_slice %160 {offsets = [14, 0], sizes = [2, 128], strides = [1, 1]} : vector<16x128xf32> to vector<2x128xf32>
    %166 = arith.addf %164, %165 : vector<2x128xf32>
    %cst_40 = arith.constant dense<0.000000e+00> : vector<2x128xf32>
    %167 = tpu.matmul %162, %161, %cst_40 {dimension_numbers = #tpu.dot_dimension_numbers<[1], [0], [0], [1], [0, 0, 1, 1], [], []>} : vector<2x32xf32>, vector<32x128xf32>, vector<2x128xf32> -> vector<2x128xf32>
    %168 = arith.addf %166, %167 : vector<2x128xf32>
    %169 = vector.extract_strided_slice %168 {offsets = [0, 0], sizes = [2, 96], strides = [1, 1]} : vector<2x128xf32> to vector<2x96xf32>
    %170 = arith.negf %169 : vector<2x96xf32>
    %171 = math.exp %170 : vector<2x96xf32>
    %cst_41 = arith.constant 1.000000e+00 : f32
    %172 = vector.broadcast %cst_41 : f32 to vector<2x96xf32>
    %173 = arith.addf %172, %171 : vector<2x96xf32>
    %174 = arith.divf %172, %173 : vector<2x96xf32>
    %175 = vector.extract_strided_slice %168 {offsets = [0, 96], sizes = [2, 32], strides = [1, 1]} : vector<2x128xf32> to vector<2x32xf32>
    %176 = math.tanh %175 : vector<2x32xf32>
    %177 = vector.extract_strided_slice %174 {offsets = [0, 32], sizes = [2, 32], strides = [1, 1]} : vector<2x96xf32> to vector<2x32xf32>
    %178 = arith.mulf %177, %163 : vector<2x32xf32>
    %179 = vector.extract_strided_slice %174 {offsets = [0, 0], sizes = [2, 32], strides = [1, 1]} : vector<2x96xf32> to vector<2x32xf32>
    %180 = arith.mulf %179, %176 : vector<2x32xf32>
    %181 = arith.addf %178, %180 : vector<2x32xf32>
    %182 = vector.extract_strided_slice %174 {offsets = [0, 64], sizes = [2, 32], strides = [1, 1]} : vector<2x96xf32> to vector<2x32xf32>
    %183 = math.tanh %181 : vector<2x32xf32>
    %184 = arith.mulf %182, %183 : vector<2x32xf32>
    %185 = vector.extract_strided_slice %184 {offsets = [0, 0], sizes = [2, 16], strides = [1, 1]} : vector<2x32xf32> to vector<2x16xf32>
    %186 = vector.extract_strided_slice %184 {offsets = [0, 16], sizes = [2, 16], strides = [1, 1]} : vector<2x32xf32> to vector<2x16xf32>
    %187 = vector.extract_strided_slice %159 {offsets = [2, 0], sizes = [2, 128], strides = [1, 1]} : vector<16x128xf32> to vector<2x128xf32>
    %188 = vector.extract_strided_slice %160 {offsets = [12, 0], sizes = [2, 128], strides = [1, 1]} : vector<16x128xf32> to vector<2x128xf32>
    %189 = arith.addf %187, %188 : vector<2x128xf32>
    %cst_42 = arith.constant dense<0.000000e+00> : vector<2x128xf32>
    %190 = tpu.matmul %184, %161, %cst_42 {dimension_numbers = #tpu.dot_dimension_numbers<[1], [0], [0], [1], [0, 0, 1, 1], [], []>} : vector<2x32xf32>, vector<32x128xf32>, vector<2x128xf32> -> vector<2x128xf32>
    %191 = arith.addf %189, %190 : vector<2x128xf32>
    %192 = vector.extract_strided_slice %191 {offsets = [0, 0], sizes = [2, 96], strides = [1, 1]} : vector<2x128xf32> to vector<2x96xf32>
    %193 = arith.negf %192 : vector<2x96xf32>
    %194 = math.exp %193 : vector<2x96xf32>
    %cst_43 = arith.constant 1.000000e+00 : f32
    %195 = vector.broadcast %cst_43 : f32 to vector<2x96xf32>
    %196 = arith.addf %195, %194 : vector<2x96xf32>
    %197 = arith.divf %195, %196 : vector<2x96xf32>
    %198 = vector.extract_strided_slice %191 {offsets = [0, 96], sizes = [2, 32], strides = [1, 1]} : vector<2x128xf32> to vector<2x32xf32>
    %199 = math.tanh %198 : vector<2x32xf32>
    %200 = vector.extract_strided_slice %197 {offsets = [0, 32], sizes = [2, 32], strides = [1, 1]} : vector<2x96xf32> to vector<2x32xf32>
    %201 = arith.mulf %200, %181 : vector<2x32xf32>
    %202 = vector.extract_strided_slice %197 {offsets = [0, 0], sizes = [2, 32], strides = [1, 1]} : vector<2x96xf32> to vector<2x32xf32>
    %203 = arith.mulf %202, %199 : vector<2x32xf32>
    %204 = arith.addf %201, %203 : vector<2x32xf32>
    %205 = vector.extract_strided_slice %197 {offsets = [0, 64], sizes = [2, 32], strides = [1, 1]} : vector<2x96xf32> to vector<2x32xf32>
    %206 = math.tanh %204 : vector<2x32xf32>
    %207 = arith.mulf %205, %206 : vector<2x32xf32>
    %208 = vector.extract_strided_slice %207 {offsets = [0, 0], sizes = [2, 16], strides = [1, 1]} : vector<2x32xf32> to vector<2x16xf32>
    %209 = vector.extract_strided_slice %207 {offsets = [0, 16], sizes = [2, 16], strides = [1, 1]} : vector<2x32xf32> to vector<2x16xf32>
    %210 = vector.extract_strided_slice %159 {offsets = [4, 0], sizes = [2, 128], strides = [1, 1]} : vector<16x128xf32> to vector<2x128xf32>
    %211 = vector.extract_strided_slice %160 {offsets = [10, 0], sizes = [2, 128], strides = [1, 1]} : vector<16x128xf32> to vector<2x128xf32>
    %212 = arith.addf %210, %211 : vector<2x128xf32>
    %cst_44 = arith.constant dense<0.000000e+00> : vector<2x128xf32>
    %213 = tpu.matmul %207, %161, %cst_44 {dimension_numbers = #tpu.dot_dimension_numbers<[1], [0], [0], [1], [0, 0, 1, 1], [], []>} : vector<2x32xf32>, vector<32x128xf32>, vector<2x128xf32> -> vector<2x128xf32>
    %214 = arith.addf %212, %213 : vector<2x128xf32>
    %215 = vector.extract_strided_slice %214 {offsets = [0, 0], sizes = [2, 96], strides = [1, 1]} : vector<2x128xf32> to vector<2x96xf32>
    %216 = arith.negf %215 : vector<2x96xf32>
    %217 = math.exp %216 : vector<2x96xf32>
    %cst_45 = arith.constant 1.000000e+00 : f32
    %218 = vector.broadcast %cst_45 : f32 to vector<2x96xf32>
    %219 = arith.addf %218, %217 : vector<2x96xf32>
    %220 = arith.divf %218, %219 : vector<2x96xf32>
    %221 = vector.extract_strided_slice %214 {offsets = [0, 96], sizes = [2, 32], strides = [1, 1]} : vector<2x128xf32> to vector<2x32xf32>
    %222 = math.tanh %221 : vector<2x32xf32>
    %223 = vector.extract_strided_slice %220 {offsets = [0, 32], sizes = [2, 32], strides = [1, 1]} : vector<2x96xf32> to vector<2x32xf32>
    %224 = arith.mulf %223, %204 : vector<2x32xf32>
    %225 = vector.extract_strided_slice %220 {offsets = [0, 0], sizes = [2, 32], strides = [1, 1]} : vector<2x96xf32> to vector<2x32xf32>
    %226 = arith.mulf %225, %222 : vector<2x32xf32>
    %227 = arith.addf %224, %226 : vector<2x32xf32>
    %228 = vector.extract_strided_slice %220 {offsets = [0, 64], sizes = [2, 32], strides = [1, 1]} : vector<2x96xf32> to vector<2x32xf32>
    %229 = math.tanh %227 : vector<2x32xf32>
    %230 = arith.mulf %228, %229 : vector<2x32xf32>
    %231 = vector.extract_strided_slice %230 {offsets = [0, 0], sizes = [2, 16], strides = [1, 1]} : vector<2x32xf32> to vector<2x16xf32>
    %232 = vector.extract_strided_slice %230 {offsets = [0, 16], sizes = [2, 16], strides = [1, 1]} : vector<2x32xf32> to vector<2x16xf32>
    %233 = vector.extract_strided_slice %159 {offsets = [6, 0], sizes = [2, 128], strides = [1, 1]} : vector<16x128xf32> to vector<2x128xf32>
    %234 = vector.extract_strided_slice %160 {offsets = [8, 0], sizes = [2, 128], strides = [1, 1]} : vector<16x128xf32> to vector<2x128xf32>
    %235 = arith.addf %233, %234 : vector<2x128xf32>
    %cst_46 = arith.constant dense<0.000000e+00> : vector<2x128xf32>
    %236 = tpu.matmul %230, %161, %cst_46 {dimension_numbers = #tpu.dot_dimension_numbers<[1], [0], [0], [1], [0, 0, 1, 1], [], []>} : vector<2x32xf32>, vector<32x128xf32>, vector<2x128xf32> -> vector<2x128xf32>
    %237 = arith.addf %235, %236 : vector<2x128xf32>
    %238 = vector.extract_strided_slice %237 {offsets = [0, 0], sizes = [2, 96], strides = [1, 1]} : vector<2x128xf32> to vector<2x96xf32>
    %239 = arith.negf %238 : vector<2x96xf32>
    %240 = math.exp %239 : vector<2x96xf32>
    %cst_47 = arith.constant 1.000000e+00 : f32
    %241 = vector.broadcast %cst_47 : f32 to vector<2x96xf32>
    %242 = arith.addf %241, %240 : vector<2x96xf32>
    %243 = arith.divf %241, %242 : vector<2x96xf32>
    %244 = vector.extract_strided_slice %237 {offsets = [0, 96], sizes = [2, 32], strides = [1, 1]} : vector<2x128xf32> to vector<2x32xf32>
    %245 = math.tanh %244 : vector<2x32xf32>
    %246 = vector.extract_strided_slice %243 {offsets = [0, 32], sizes = [2, 32], strides = [1, 1]} : vector<2x96xf32> to vector<2x32xf32>
    %247 = arith.mulf %246, %227 : vector<2x32xf32>
    %248 = vector.extract_strided_slice %243 {offsets = [0, 0], sizes = [2, 32], strides = [1, 1]} : vector<2x96xf32> to vector<2x32xf32>
    %249 = arith.mulf %248, %245 : vector<2x32xf32>
    %250 = arith.addf %247, %249 : vector<2x32xf32>
    %251 = vector.extract_strided_slice %243 {offsets = [0, 64], sizes = [2, 32], strides = [1, 1]} : vector<2x96xf32> to vector<2x32xf32>
    %252 = math.tanh %250 : vector<2x32xf32>
    %253 = arith.mulf %251, %252 : vector<2x32xf32>
    %254 = vector.extract_strided_slice %253 {offsets = [0, 0], sizes = [2, 16], strides = [1, 1]} : vector<2x32xf32> to vector<2x16xf32>
    %255 = vector.extract_strided_slice %253 {offsets = [0, 16], sizes = [2, 16], strides = [1, 1]} : vector<2x32xf32> to vector<2x16xf32>
    %256 = vector.extract_strided_slice %159 {offsets = [8, 0], sizes = [2, 128], strides = [1, 1]} : vector<16x128xf32> to vector<2x128xf32>
    %257 = vector.extract_strided_slice %160 {offsets = [6, 0], sizes = [2, 128], strides = [1, 1]} : vector<16x128xf32> to vector<2x128xf32>
    %258 = arith.addf %256, %257 : vector<2x128xf32>
    %cst_48 = arith.constant dense<0.000000e+00> : vector<2x128xf32>
    %259 = tpu.matmul %253, %161, %cst_48 {dimension_numbers = #tpu.dot_dimension_numbers<[1], [0], [0], [1], [0, 0, 1, 1], [], []>} : vector<2x32xf32>, vector<32x128xf32>, vector<2x128xf32> -> vector<2x128xf32>
    %260 = arith.addf %258, %259 : vector<2x128xf32>
    %261 = vector.extract_strided_slice %260 {offsets = [0, 0], sizes = [2, 96], strides = [1, 1]} : vector<2x128xf32> to vector<2x96xf32>
    %262 = arith.negf %261 : vector<2x96xf32>
    %263 = math.exp %262 : vector<2x96xf32>
    %cst_49 = arith.constant 1.000000e+00 : f32
    %264 = vector.broadcast %cst_49 : f32 to vector<2x96xf32>
    %265 = arith.addf %264, %263 : vector<2x96xf32>
    %266 = arith.divf %264, %265 : vector<2x96xf32>
    %267 = vector.extract_strided_slice %260 {offsets = [0, 96], sizes = [2, 32], strides = [1, 1]} : vector<2x128xf32> to vector<2x32xf32>
    %268 = math.tanh %267 : vector<2x32xf32>
    %269 = vector.extract_strided_slice %266 {offsets = [0, 32], sizes = [2, 32], strides = [1, 1]} : vector<2x96xf32> to vector<2x32xf32>
    %270 = arith.mulf %269, %250 : vector<2x32xf32>
    %271 = vector.extract_strided_slice %266 {offsets = [0, 0], sizes = [2, 32], strides = [1, 1]} : vector<2x96xf32> to vector<2x32xf32>
    %272 = arith.mulf %271, %268 : vector<2x32xf32>
    %273 = arith.addf %270, %272 : vector<2x32xf32>
    %274 = vector.extract_strided_slice %266 {offsets = [0, 64], sizes = [2, 32], strides = [1, 1]} : vector<2x96xf32> to vector<2x32xf32>
    %275 = math.tanh %273 : vector<2x32xf32>
    %276 = arith.mulf %274, %275 : vector<2x32xf32>
    %277 = vector.extract_strided_slice %276 {offsets = [0, 0], sizes = [2, 16], strides = [1, 1]} : vector<2x32xf32> to vector<2x16xf32>
    %278 = vector.extract_strided_slice %276 {offsets = [0, 16], sizes = [2, 16], strides = [1, 1]} : vector<2x32xf32> to vector<2x16xf32>
    %279 = vector.extract_strided_slice %159 {offsets = [10, 0], sizes = [2, 128], strides = [1, 1]} : vector<16x128xf32> to vector<2x128xf32>
    %280 = vector.extract_strided_slice %160 {offsets = [4, 0], sizes = [2, 128], strides = [1, 1]} : vector<16x128xf32> to vector<2x128xf32>
    %281 = arith.addf %279, %280 : vector<2x128xf32>
    %cst_50 = arith.constant dense<0.000000e+00> : vector<2x128xf32>
    %282 = tpu.matmul %276, %161, %cst_50 {dimension_numbers = #tpu.dot_dimension_numbers<[1], [0], [0], [1], [0, 0, 1, 1], [], []>} : vector<2x32xf32>, vector<32x128xf32>, vector<2x128xf32> -> vector<2x128xf32>
    %283 = arith.addf %281, %282 : vector<2x128xf32>
    %284 = vector.extract_strided_slice %283 {offsets = [0, 0], sizes = [2, 96], strides = [1, 1]} : vector<2x128xf32> to vector<2x96xf32>
    %285 = arith.negf %284 : vector<2x96xf32>
    %286 = math.exp %285 : vector<2x96xf32>
    %cst_51 = arith.constant 1.000000e+00 : f32
    %287 = vector.broadcast %cst_51 : f32 to vector<2x96xf32>
    %288 = arith.addf %287, %286 : vector<2x96xf32>
    %289 = arith.divf %287, %288 : vector<2x96xf32>
    %290 = vector.extract_strided_slice %283 {offsets = [0, 96], sizes = [2, 32], strides = [1, 1]} : vector<2x128xf32> to vector<2x32xf32>
    %291 = math.tanh %290 : vector<2x32xf32>
    %292 = vector.extract_strided_slice %289 {offsets = [0, 32], sizes = [2, 32], strides = [1, 1]} : vector<2x96xf32> to vector<2x32xf32>
    %293 = arith.mulf %292, %273 : vector<2x32xf32>
    %294 = vector.extract_strided_slice %289 {offsets = [0, 0], sizes = [2, 32], strides = [1, 1]} : vector<2x96xf32> to vector<2x32xf32>
    %295 = arith.mulf %294, %291 : vector<2x32xf32>
    %296 = arith.addf %293, %295 : vector<2x32xf32>
    %297 = vector.extract_strided_slice %289 {offsets = [0, 64], sizes = [2, 32], strides = [1, 1]} : vector<2x96xf32> to vector<2x32xf32>
    %298 = math.tanh %296 : vector<2x32xf32>
    %299 = arith.mulf %297, %298 : vector<2x32xf32>
    %300 = vector.extract_strided_slice %299 {offsets = [0, 0], sizes = [2, 16], strides = [1, 1]} : vector<2x32xf32> to vector<2x16xf32>
    %301 = vector.extract_strided_slice %299 {offsets = [0, 16], sizes = [2, 16], strides = [1, 1]} : vector<2x32xf32> to vector<2x16xf32>
    %302 = vector.extract_strided_slice %159 {offsets = [12, 0], sizes = [2, 128], strides = [1, 1]} : vector<16x128xf32> to vector<2x128xf32>
    %303 = vector.extract_strided_slice %160 {offsets = [2, 0], sizes = [2, 128], strides = [1, 1]} : vector<16x128xf32> to vector<2x128xf32>
    %304 = arith.addf %302, %303 : vector<2x128xf32>
    %cst_52 = arith.constant dense<0.000000e+00> : vector<2x128xf32>
    %305 = tpu.matmul %299, %161, %cst_52 {dimension_numbers = #tpu.dot_dimension_numbers<[1], [0], [0], [1], [0, 0, 1, 1], [], []>} : vector<2x32xf32>, vector<32x128xf32>, vector<2x128xf32> -> vector<2x128xf32>
    %306 = arith.addf %304, %305 : vector<2x128xf32>
    %307 = vector.extract_strided_slice %306 {offsets = [0, 0], sizes = [2, 96], strides = [1, 1]} : vector<2x128xf32> to vector<2x96xf32>
    %308 = arith.negf %307 : vector<2x96xf32>
    %309 = math.exp %308 : vector<2x96xf32>
    %cst_53 = arith.constant 1.000000e+00 : f32
    %310 = vector.broadcast %cst_53 : f32 to vector<2x96xf32>
    %311 = arith.addf %310, %309 : vector<2x96xf32>
    %312 = arith.divf %310, %311 : vector<2x96xf32>
    %313 = vector.extract_strided_slice %306 {offsets = [0, 96], sizes = [2, 32], strides = [1, 1]} : vector<2x128xf32> to vector<2x32xf32>
    %314 = math.tanh %313 : vector<2x32xf32>
    %315 = vector.extract_strided_slice %312 {offsets = [0, 32], sizes = [2, 32], strides = [1, 1]} : vector<2x96xf32> to vector<2x32xf32>
    %316 = arith.mulf %315, %296 : vector<2x32xf32>
    %317 = vector.extract_strided_slice %312 {offsets = [0, 0], sizes = [2, 32], strides = [1, 1]} : vector<2x96xf32> to vector<2x32xf32>
    %318 = arith.mulf %317, %314 : vector<2x32xf32>
    %319 = arith.addf %316, %318 : vector<2x32xf32>
    %320 = vector.extract_strided_slice %312 {offsets = [0, 64], sizes = [2, 32], strides = [1, 1]} : vector<2x96xf32> to vector<2x32xf32>
    %321 = math.tanh %319 : vector<2x32xf32>
    %322 = arith.mulf %320, %321 : vector<2x32xf32>
    %323 = vector.extract_strided_slice %322 {offsets = [0, 0], sizes = [2, 16], strides = [1, 1]} : vector<2x32xf32> to vector<2x16xf32>
    %324 = vector.extract_strided_slice %322 {offsets = [0, 16], sizes = [2, 16], strides = [1, 1]} : vector<2x32xf32> to vector<2x16xf32>
    %325 = vector.extract_strided_slice %159 {offsets = [14, 0], sizes = [2, 128], strides = [1, 1]} : vector<16x128xf32> to vector<2x128xf32>
    %326 = vector.extract_strided_slice %160 {offsets = [0, 0], sizes = [2, 128], strides = [1, 1]} : vector<16x128xf32> to vector<2x128xf32>
    %327 = arith.addf %325, %326 : vector<2x128xf32>
    %cst_54 = arith.constant dense<0.000000e+00> : vector<2x128xf32>
    %328 = tpu.matmul %322, %161, %cst_54 {dimension_numbers = #tpu.dot_dimension_numbers<[1], [0], [0], [1], [0, 0, 1, 1], [], []>} : vector<2x32xf32>, vector<32x128xf32>, vector<2x128xf32> -> vector<2x128xf32>
    %329 = arith.addf %327, %328 : vector<2x128xf32>
    %330 = vector.extract_strided_slice %329 {offsets = [0, 0], sizes = [2, 96], strides = [1, 1]} : vector<2x128xf32> to vector<2x96xf32>
    %331 = arith.negf %330 : vector<2x96xf32>
    %332 = math.exp %331 : vector<2x96xf32>
    %cst_55 = arith.constant 1.000000e+00 : f32
    %333 = vector.broadcast %cst_55 : f32 to vector<2x96xf32>
    %334 = arith.addf %333, %332 : vector<2x96xf32>
    %335 = arith.divf %333, %334 : vector<2x96xf32>
    %336 = vector.extract_strided_slice %329 {offsets = [0, 96], sizes = [2, 32], strides = [1, 1]} : vector<2x128xf32> to vector<2x32xf32>
    %337 = math.tanh %336 : vector<2x32xf32>
    %338 = vector.extract_strided_slice %335 {offsets = [0, 32], sizes = [2, 32], strides = [1, 1]} : vector<2x96xf32> to vector<2x32xf32>
    %339 = arith.mulf %338, %319 : vector<2x32xf32>
    %340 = vector.extract_strided_slice %335 {offsets = [0, 0], sizes = [2, 32], strides = [1, 1]} : vector<2x96xf32> to vector<2x32xf32>
    %341 = arith.mulf %340, %337 : vector<2x32xf32>
    %342 = arith.addf %339, %341 : vector<2x32xf32>
    %343 = vector.extract_strided_slice %335 {offsets = [0, 64], sizes = [2, 32], strides = [1, 1]} : vector<2x96xf32> to vector<2x32xf32>
    %344 = math.tanh %342 : vector<2x32xf32>
    %345 = arith.mulf %343, %344 : vector<2x32xf32>
    %346 = vector.extract_strided_slice %345 {offsets = [0, 0], sizes = [2, 16], strides = [1, 1]} : vector<2x32xf32> to vector<2x16xf32>
    %347 = vector.extract_strided_slice %345 {offsets = [0, 16], sizes = [2, 16], strides = [1, 1]} : vector<2x32xf32> to vector<2x16xf32>
    %348 = tpu.concatenate %185, %208, %231, %254, %277, %300, %323, %346 in 0 : vector<2x16xf32>, vector<2x16xf32>, vector<2x16xf32>, vector<2x16xf32>, vector<2x16xf32>, vector<2x16xf32>, vector<2x16xf32>, vector<2x16xf32> -> vector<16x16xf32>
    %349 = tpu.concatenate %347, %324, %301, %278, %255, %232, %209, %186 in 0 : vector<2x16xf32>, vector<2x16xf32>, vector<2x16xf32>, vector<2x16xf32>, vector<2x16xf32>, vector<2x16xf32>, vector<2x16xf32>, vector<2x16xf32> -> vector<16x16xf32>
    %c0_56 = arith.constant 0 : index
    %c0_57 = arith.constant 0 : index
    %350 = vector.load %arg9[%c0_56, %c0_57] : memref<32x256xf32, #tpu.memory_space<vmem>>, vector<32x256xf32>
    %351 = vector.extract_strided_slice %350 {offsets = [0, 0], sizes = [16, 256], strides = [1, 1]} : vector<32x256xf32> to vector<16x256xf32>
    %cst_58 = arith.constant dense<0.000000e+00> : vector<16x256xf32>
    %352 = tpu.matmul %348, %351, %cst_58 {dimension_numbers = #tpu.dot_dimension_numbers<[1], [0], [0], [1], [0, 0, 1, 1], [], []>} : vector<16x16xf32>, vector<16x256xf32>, vector<16x256xf32> -> vector<16x256xf32>
    %353 = vector.extract_strided_slice %350 {offsets = [16, 0], sizes = [16, 256], strides = [1, 1]} : vector<32x256xf32> to vector<16x256xf32>
    %cst_59 = arith.constant dense<0.000000e+00> : vector<16x256xf32>
    %354 = tpu.matmul %349, %353, %cst_59 {dimension_numbers = #tpu.dot_dimension_numbers<[1], [0], [0], [1], [0, 0, 1, 1], [], []>} : vector<16x16xf32>, vector<16x256xf32>, vector<16x256xf32> -> vector<16x256xf32>
    %355 = arith.addf %352, %354 : vector<16x256xf32>
    %c0_60 = arith.constant 0 : index
    %c0_61 = arith.constant 0 : index
    %356 = vector.load %arg10[%c0_60, %c0_61] : memref<1x256xf32, #tpu.memory_space<vmem>>, vector<1x256xf32>
    %357 = vector.broadcast %356 : vector<1x256xf32> to vector<16x256xf32>
    %358 = arith.addf %355, %357 : vector<16x256xf32>
    %359 = vector.extract_strided_slice %358 {offsets = [0, 0], sizes = [16, 128], strides = [1, 1]} : vector<16x256xf32> to vector<16x128xf32>
    %360 = vector.extract_strided_slice %358 {offsets = [0, 128], sizes = [16, 128], strides = [1, 1]} : vector<16x256xf32> to vector<16x128xf32>
    %c0_62 = arith.constant 0 : index
    %c0_63 = arith.constant 0 : index
    %361 = vector.load %arg11[%c0_62, %c0_63] : memref<32x128xf32, #tpu.memory_space<vmem>>, vector<32x128xf32>
    %cst_64 = arith.constant 0.000000e+00 : f32
    %362 = vector.broadcast %cst_64 : f32 to vector<2x32xf32>
    %cst_65 = arith.constant 0.000000e+00 : f32
    %363 = vector.broadcast %cst_65 : f32 to vector<2x32xf32>
    %364 = vector.extract_strided_slice %359 {offsets = [0, 0], sizes = [2, 128], strides = [1, 1]} : vector<16x128xf32> to vector<2x128xf32>
    %365 = vector.extract_strided_slice %360 {offsets = [14, 0], sizes = [2, 128], strides = [1, 1]} : vector<16x128xf32> to vector<2x128xf32>
    %366 = arith.addf %364, %365 : vector<2x128xf32>
    %cst_66 = arith.constant dense<0.000000e+00> : vector<2x128xf32>
    %367 = tpu.matmul %362, %361, %cst_66 {dimension_numbers = #tpu.dot_dimension_numbers<[1], [0], [0], [1], [0, 0, 1, 1], [], []>} : vector<2x32xf32>, vector<32x128xf32>, vector<2x128xf32> -> vector<2x128xf32>
    %368 = arith.addf %366, %367 : vector<2x128xf32>
    %369 = vector.extract_strided_slice %368 {offsets = [0, 0], sizes = [2, 96], strides = [1, 1]} : vector<2x128xf32> to vector<2x96xf32>
    %370 = arith.negf %369 : vector<2x96xf32>
    %371 = math.exp %370 : vector<2x96xf32>
    %cst_67 = arith.constant 1.000000e+00 : f32
    %372 = vector.broadcast %cst_67 : f32 to vector<2x96xf32>
    %373 = arith.addf %372, %371 : vector<2x96xf32>
    %374 = arith.divf %372, %373 : vector<2x96xf32>
    %375 = vector.extract_strided_slice %368 {offsets = [0, 96], sizes = [2, 32], strides = [1, 1]} : vector<2x128xf32> to vector<2x32xf32>
    %376 = math.tanh %375 : vector<2x32xf32>
    %377 = vector.extract_strided_slice %374 {offsets = [0, 32], sizes = [2, 32], strides = [1, 1]} : vector<2x96xf32> to vector<2x32xf32>
    %378 = arith.mulf %377, %363 : vector<2x32xf32>
    %379 = vector.extract_strided_slice %374 {offsets = [0, 0], sizes = [2, 32], strides = [1, 1]} : vector<2x96xf32> to vector<2x32xf32>
    %380 = arith.mulf %379, %376 : vector<2x32xf32>
    %381 = arith.addf %378, %380 : vector<2x32xf32>
    %382 = vector.extract_strided_slice %374 {offsets = [0, 64], sizes = [2, 32], strides = [1, 1]} : vector<2x96xf32> to vector<2x32xf32>
    %383 = math.tanh %381 : vector<2x32xf32>
    %384 = arith.mulf %382, %383 : vector<2x32xf32>
    %385 = vector.extract_strided_slice %384 {offsets = [0, 0], sizes = [2, 16], strides = [1, 1]} : vector<2x32xf32> to vector<2x16xf32>
    %386 = vector.extract_strided_slice %384 {offsets = [0, 16], sizes = [2, 16], strides = [1, 1]} : vector<2x32xf32> to vector<2x16xf32>
    %387 = vector.extract_strided_slice %359 {offsets = [2, 0], sizes = [2, 128], strides = [1, 1]} : vector<16x128xf32> to vector<2x128xf32>
    %388 = vector.extract_strided_slice %360 {offsets = [12, 0], sizes = [2, 128], strides = [1, 1]} : vector<16x128xf32> to vector<2x128xf32>
    %389 = arith.addf %387, %388 : vector<2x128xf32>
    %cst_68 = arith.constant dense<0.000000e+00> : vector<2x128xf32>
    %390 = tpu.matmul %384, %361, %cst_68 {dimension_numbers = #tpu.dot_dimension_numbers<[1], [0], [0], [1], [0, 0, 1, 1], [], []>} : vector<2x32xf32>, vector<32x128xf32>, vector<2x128xf32> -> vector<2x128xf32>
    %391 = arith.addf %389, %390 : vector<2x128xf32>
    %392 = vector.extract_strided_slice %391 {offsets = [0, 0], sizes = [2, 96], strides = [1, 1]} : vector<2x128xf32> to vector<2x96xf32>
    %393 = arith.negf %392 : vector<2x96xf32>
    %394 = math.exp %393 : vector<2x96xf32>
    %cst_69 = arith.constant 1.000000e+00 : f32
    %395 = vector.broadcast %cst_69 : f32 to vector<2x96xf32>
    %396 = arith.addf %395, %394 : vector<2x96xf32>
    %397 = arith.divf %395, %396 : vector<2x96xf32>
    %398 = vector.extract_strided_slice %391 {offsets = [0, 96], sizes = [2, 32], strides = [1, 1]} : vector<2x128xf32> to vector<2x32xf32>
    %399 = math.tanh %398 : vector<2x32xf32>
    %400 = vector.extract_strided_slice %397 {offsets = [0, 32], sizes = [2, 32], strides = [1, 1]} : vector<2x96xf32> to vector<2x32xf32>
    %401 = arith.mulf %400, %381 : vector<2x32xf32>
    %402 = vector.extract_strided_slice %397 {offsets = [0, 0], sizes = [2, 32], strides = [1, 1]} : vector<2x96xf32> to vector<2x32xf32>
    %403 = arith.mulf %402, %399 : vector<2x32xf32>
    %404 = arith.addf %401, %403 : vector<2x32xf32>
    %405 = vector.extract_strided_slice %397 {offsets = [0, 64], sizes = [2, 32], strides = [1, 1]} : vector<2x96xf32> to vector<2x32xf32>
    %406 = math.tanh %404 : vector<2x32xf32>
    %407 = arith.mulf %405, %406 : vector<2x32xf32>
    %408 = vector.extract_strided_slice %407 {offsets = [0, 0], sizes = [2, 16], strides = [1, 1]} : vector<2x32xf32> to vector<2x16xf32>
    %409 = vector.extract_strided_slice %407 {offsets = [0, 16], sizes = [2, 16], strides = [1, 1]} : vector<2x32xf32> to vector<2x16xf32>
    %410 = vector.extract_strided_slice %359 {offsets = [4, 0], sizes = [2, 128], strides = [1, 1]} : vector<16x128xf32> to vector<2x128xf32>
    %411 = vector.extract_strided_slice %360 {offsets = [10, 0], sizes = [2, 128], strides = [1, 1]} : vector<16x128xf32> to vector<2x128xf32>
    %412 = arith.addf %410, %411 : vector<2x128xf32>
    %cst_70 = arith.constant dense<0.000000e+00> : vector<2x128xf32>
    %413 = tpu.matmul %407, %361, %cst_70 {dimension_numbers = #tpu.dot_dimension_numbers<[1], [0], [0], [1], [0, 0, 1, 1], [], []>} : vector<2x32xf32>, vector<32x128xf32>, vector<2x128xf32> -> vector<2x128xf32>
    %414 = arith.addf %412, %413 : vector<2x128xf32>
    %415 = vector.extract_strided_slice %414 {offsets = [0, 0], sizes = [2, 96], strides = [1, 1]} : vector<2x128xf32> to vector<2x96xf32>
    %416 = arith.negf %415 : vector<2x96xf32>
    %417 = math.exp %416 : vector<2x96xf32>
    %cst_71 = arith.constant 1.000000e+00 : f32
    %418 = vector.broadcast %cst_71 : f32 to vector<2x96xf32>
    %419 = arith.addf %418, %417 : vector<2x96xf32>
    %420 = arith.divf %418, %419 : vector<2x96xf32>
    %421 = vector.extract_strided_slice %414 {offsets = [0, 96], sizes = [2, 32], strides = [1, 1]} : vector<2x128xf32> to vector<2x32xf32>
    %422 = math.tanh %421 : vector<2x32xf32>
    %423 = vector.extract_strided_slice %420 {offsets = [0, 32], sizes = [2, 32], strides = [1, 1]} : vector<2x96xf32> to vector<2x32xf32>
    %424 = arith.mulf %423, %404 : vector<2x32xf32>
    %425 = vector.extract_strided_slice %420 {offsets = [0, 0], sizes = [2, 32], strides = [1, 1]} : vector<2x96xf32> to vector<2x32xf32>
    %426 = arith.mulf %425, %422 : vector<2x32xf32>
    %427 = arith.addf %424, %426 : vector<2x32xf32>
    %428 = vector.extract_strided_slice %420 {offsets = [0, 64], sizes = [2, 32], strides = [1, 1]} : vector<2x96xf32> to vector<2x32xf32>
    %429 = math.tanh %427 : vector<2x32xf32>
    %430 = arith.mulf %428, %429 : vector<2x32xf32>
    %431 = vector.extract_strided_slice %430 {offsets = [0, 0], sizes = [2, 16], strides = [1, 1]} : vector<2x32xf32> to vector<2x16xf32>
    %432 = vector.extract_strided_slice %430 {offsets = [0, 16], sizes = [2, 16], strides = [1, 1]} : vector<2x32xf32> to vector<2x16xf32>
    %433 = vector.extract_strided_slice %359 {offsets = [6, 0], sizes = [2, 128], strides = [1, 1]} : vector<16x128xf32> to vector<2x128xf32>
    %434 = vector.extract_strided_slice %360 {offsets = [8, 0], sizes = [2, 128], strides = [1, 1]} : vector<16x128xf32> to vector<2x128xf32>
    %435 = arith.addf %433, %434 : vector<2x128xf32>
    %cst_72 = arith.constant dense<0.000000e+00> : vector<2x128xf32>
    %436 = tpu.matmul %430, %361, %cst_72 {dimension_numbers = #tpu.dot_dimension_numbers<[1], [0], [0], [1], [0, 0, 1, 1], [], []>} : vector<2x32xf32>, vector<32x128xf32>, vector<2x128xf32> -> vector<2x128xf32>
    %437 = arith.addf %435, %436 : vector<2x128xf32>
    %438 = vector.extract_strided_slice %437 {offsets = [0, 0], sizes = [2, 96], strides = [1, 1]} : vector<2x128xf32> to vector<2x96xf32>
    %439 = arith.negf %438 : vector<2x96xf32>
    %440 = math.exp %439 : vector<2x96xf32>
    %cst_73 = arith.constant 1.000000e+00 : f32
    %441 = vector.broadcast %cst_73 : f32 to vector<2x96xf32>
    %442 = arith.addf %441, %440 : vector<2x96xf32>
    %443 = arith.divf %441, %442 : vector<2x96xf32>
    %444 = vector.extract_strided_slice %437 {offsets = [0, 96], sizes = [2, 32], strides = [1, 1]} : vector<2x128xf32> to vector<2x32xf32>
    %445 = math.tanh %444 : vector<2x32xf32>
    %446 = vector.extract_strided_slice %443 {offsets = [0, 32], sizes = [2, 32], strides = [1, 1]} : vector<2x96xf32> to vector<2x32xf32>
    %447 = arith.mulf %446, %427 : vector<2x32xf32>
    %448 = vector.extract_strided_slice %443 {offsets = [0, 0], sizes = [2, 32], strides = [1, 1]} : vector<2x96xf32> to vector<2x32xf32>
    %449 = arith.mulf %448, %445 : vector<2x32xf32>
    %450 = arith.addf %447, %449 : vector<2x32xf32>
    %451 = vector.extract_strided_slice %443 {offsets = [0, 64], sizes = [2, 32], strides = [1, 1]} : vector<2x96xf32> to vector<2x32xf32>
    %452 = math.tanh %450 : vector<2x32xf32>
    %453 = arith.mulf %451, %452 : vector<2x32xf32>
    %454 = vector.extract_strided_slice %453 {offsets = [0, 0], sizes = [2, 16], strides = [1, 1]} : vector<2x32xf32> to vector<2x16xf32>
    %455 = vector.extract_strided_slice %453 {offsets = [0, 16], sizes = [2, 16], strides = [1, 1]} : vector<2x32xf32> to vector<2x16xf32>
    %456 = vector.extract_strided_slice %359 {offsets = [8, 0], sizes = [2, 128], strides = [1, 1]} : vector<16x128xf32> to vector<2x128xf32>
    %457 = vector.extract_strided_slice %360 {offsets = [6, 0], sizes = [2, 128], strides = [1, 1]} : vector<16x128xf32> to vector<2x128xf32>
    %458 = arith.addf %456, %457 : vector<2x128xf32>
    %cst_74 = arith.constant dense<0.000000e+00> : vector<2x128xf32>
    %459 = tpu.matmul %453, %361, %cst_74 {dimension_numbers = #tpu.dot_dimension_numbers<[1], [0], [0], [1], [0, 0, 1, 1], [], []>} : vector<2x32xf32>, vector<32x128xf32>, vector<2x128xf32> -> vector<2x128xf32>
    %460 = arith.addf %458, %459 : vector<2x128xf32>
    %461 = vector.extract_strided_slice %460 {offsets = [0, 0], sizes = [2, 96], strides = [1, 1]} : vector<2x128xf32> to vector<2x96xf32>
    %462 = arith.negf %461 : vector<2x96xf32>
    %463 = math.exp %462 : vector<2x96xf32>
    %cst_75 = arith.constant 1.000000e+00 : f32
    %464 = vector.broadcast %cst_75 : f32 to vector<2x96xf32>
    %465 = arith.addf %464, %463 : vector<2x96xf32>
    %466 = arith.divf %464, %465 : vector<2x96xf32>
    %467 = vector.extract_strided_slice %460 {offsets = [0, 96], sizes = [2, 32], strides = [1, 1]} : vector<2x128xf32> to vector<2x32xf32>
    %468 = math.tanh %467 : vector<2x32xf32>
    %469 = vector.extract_strided_slice %466 {offsets = [0, 32], sizes = [2, 32], strides = [1, 1]} : vector<2x96xf32> to vector<2x32xf32>
    %470 = arith.mulf %469, %450 : vector<2x32xf32>
    %471 = vector.extract_strided_slice %466 {offsets = [0, 0], sizes = [2, 32], strides = [1, 1]} : vector<2x96xf32> to vector<2x32xf32>
    %472 = arith.mulf %471, %468 : vector<2x32xf32>
    %473 = arith.addf %470, %472 : vector<2x32xf32>
    %474 = vector.extract_strided_slice %466 {offsets = [0, 64], sizes = [2, 32], strides = [1, 1]} : vector<2x96xf32> to vector<2x32xf32>
    %475 = math.tanh %473 : vector<2x32xf32>
    %476 = arith.mulf %474, %475 : vector<2x32xf32>
    %477 = vector.extract_strided_slice %476 {offsets = [0, 0], sizes = [2, 16], strides = [1, 1]} : vector<2x32xf32> to vector<2x16xf32>
    %478 = vector.extract_strided_slice %476 {offsets = [0, 16], sizes = [2, 16], strides = [1, 1]} : vector<2x32xf32> to vector<2x16xf32>
    %479 = vector.extract_strided_slice %359 {offsets = [10, 0], sizes = [2, 128], strides = [1, 1]} : vector<16x128xf32> to vector<2x128xf32>
    %480 = vector.extract_strided_slice %360 {offsets = [4, 0], sizes = [2, 128], strides = [1, 1]} : vector<16x128xf32> to vector<2x128xf32>
    %481 = arith.addf %479, %480 : vector<2x128xf32>
    %cst_76 = arith.constant dense<0.000000e+00> : vector<2x128xf32>
    %482 = tpu.matmul %476, %361, %cst_76 {dimension_numbers = #tpu.dot_dimension_numbers<[1], [0], [0], [1], [0, 0, 1, 1], [], []>} : vector<2x32xf32>, vector<32x128xf32>, vector<2x128xf32> -> vector<2x128xf32>
    %483 = arith.addf %481, %482 : vector<2x128xf32>
    %484 = vector.extract_strided_slice %483 {offsets = [0, 0], sizes = [2, 96], strides = [1, 1]} : vector<2x128xf32> to vector<2x96xf32>
    %485 = arith.negf %484 : vector<2x96xf32>
    %486 = math.exp %485 : vector<2x96xf32>
    %cst_77 = arith.constant 1.000000e+00 : f32
    %487 = vector.broadcast %cst_77 : f32 to vector<2x96xf32>
    %488 = arith.addf %487, %486 : vector<2x96xf32>
    %489 = arith.divf %487, %488 : vector<2x96xf32>
    %490 = vector.extract_strided_slice %483 {offsets = [0, 96], sizes = [2, 32], strides = [1, 1]} : vector<2x128xf32> to vector<2x32xf32>
    %491 = math.tanh %490 : vector<2x32xf32>
    %492 = vector.extract_strided_slice %489 {offsets = [0, 32], sizes = [2, 32], strides = [1, 1]} : vector<2x96xf32> to vector<2x32xf32>
    %493 = arith.mulf %492, %473 : vector<2x32xf32>
    %494 = vector.extract_strided_slice %489 {offsets = [0, 0], sizes = [2, 32], strides = [1, 1]} : vector<2x96xf32> to vector<2x32xf32>
    %495 = arith.mulf %494, %491 : vector<2x32xf32>
    %496 = arith.addf %493, %495 : vector<2x32xf32>
    %497 = vector.extract_strided_slice %489 {offsets = [0, 64], sizes = [2, 32], strides = [1, 1]} : vector<2x96xf32> to vector<2x32xf32>
    %498 = math.tanh %496 : vector<2x32xf32>
    %499 = arith.mulf %497, %498 : vector<2x32xf32>
    %500 = vector.extract_strided_slice %499 {offsets = [0, 0], sizes = [2, 16], strides = [1, 1]} : vector<2x32xf32> to vector<2x16xf32>
    %501 = vector.extract_strided_slice %499 {offsets = [0, 16], sizes = [2, 16], strides = [1, 1]} : vector<2x32xf32> to vector<2x16xf32>
    %502 = vector.extract_strided_slice %359 {offsets = [12, 0], sizes = [2, 128], strides = [1, 1]} : vector<16x128xf32> to vector<2x128xf32>
    %503 = vector.extract_strided_slice %360 {offsets = [2, 0], sizes = [2, 128], strides = [1, 1]} : vector<16x128xf32> to vector<2x128xf32>
    %504 = arith.addf %502, %503 : vector<2x128xf32>
    %cst_78 = arith.constant dense<0.000000e+00> : vector<2x128xf32>
    %505 = tpu.matmul %499, %361, %cst_78 {dimension_numbers = #tpu.dot_dimension_numbers<[1], [0], [0], [1], [0, 0, 1, 1], [], []>} : vector<2x32xf32>, vector<32x128xf32>, vector<2x128xf32> -> vector<2x128xf32>
    %506 = arith.addf %504, %505 : vector<2x128xf32>
    %507 = vector.extract_strided_slice %506 {offsets = [0, 0], sizes = [2, 96], strides = [1, 1]} : vector<2x128xf32> to vector<2x96xf32>
    %508 = arith.negf %507 : vector<2x96xf32>
    %509 = math.exp %508 : vector<2x96xf32>
    %cst_79 = arith.constant 1.000000e+00 : f32
    %510 = vector.broadcast %cst_79 : f32 to vector<2x96xf32>
    %511 = arith.addf %510, %509 : vector<2x96xf32>
    %512 = arith.divf %510, %511 : vector<2x96xf32>
    %513 = vector.extract_strided_slice %506 {offsets = [0, 96], sizes = [2, 32], strides = [1, 1]} : vector<2x128xf32> to vector<2x32xf32>
    %514 = math.tanh %513 : vector<2x32xf32>
    %515 = vector.extract_strided_slice %512 {offsets = [0, 32], sizes = [2, 32], strides = [1, 1]} : vector<2x96xf32> to vector<2x32xf32>
    %516 = arith.mulf %515, %496 : vector<2x32xf32>
    %517 = vector.extract_strided_slice %512 {offsets = [0, 0], sizes = [2, 32], strides = [1, 1]} : vector<2x96xf32> to vector<2x32xf32>
    %518 = arith.mulf %517, %514 : vector<2x32xf32>
    %519 = arith.addf %516, %518 : vector<2x32xf32>
    %520 = vector.extract_strided_slice %512 {offsets = [0, 64], sizes = [2, 32], strides = [1, 1]} : vector<2x96xf32> to vector<2x32xf32>
    %521 = math.tanh %519 : vector<2x32xf32>
    %522 = arith.mulf %520, %521 : vector<2x32xf32>
    %523 = vector.extract_strided_slice %522 {offsets = [0, 0], sizes = [2, 16], strides = [1, 1]} : vector<2x32xf32> to vector<2x16xf32>
    %524 = vector.extract_strided_slice %522 {offsets = [0, 16], sizes = [2, 16], strides = [1, 1]} : vector<2x32xf32> to vector<2x16xf32>
    %525 = vector.extract_strided_slice %359 {offsets = [14, 0], sizes = [2, 128], strides = [1, 1]} : vector<16x128xf32> to vector<2x128xf32>
    %526 = vector.extract_strided_slice %360 {offsets = [0, 0], sizes = [2, 128], strides = [1, 1]} : vector<16x128xf32> to vector<2x128xf32>
    %527 = arith.addf %525, %526 : vector<2x128xf32>
    %cst_80 = arith.constant dense<0.000000e+00> : vector<2x128xf32>
    %528 = tpu.matmul %522, %361, %cst_80 {dimension_numbers = #tpu.dot_dimension_numbers<[1], [0], [0], [1], [0, 0, 1, 1], [], []>} : vector<2x32xf32>, vector<32x128xf32>, vector<2x128xf32> -> vector<2x128xf32>
    %529 = arith.addf %527, %528 : vector<2x128xf32>
    %530 = vector.extract_strided_slice %529 {offsets = [0, 0], sizes = [2, 96], strides = [1, 1]} : vector<2x128xf32> to vector<2x96xf32>
    %531 = arith.negf %530 : vector<2x96xf32>
    %532 = math.exp %531 : vector<2x96xf32>
    %cst_81 = arith.constant 1.000000e+00 : f32
    %533 = vector.broadcast %cst_81 : f32 to vector<2x96xf32>
    %534 = arith.addf %533, %532 : vector<2x96xf32>
    %535 = arith.divf %533, %534 : vector<2x96xf32>
    %536 = vector.extract_strided_slice %529 {offsets = [0, 96], sizes = [2, 32], strides = [1, 1]} : vector<2x128xf32> to vector<2x32xf32>
    %537 = math.tanh %536 : vector<2x32xf32>
    %538 = vector.extract_strided_slice %535 {offsets = [0, 32], sizes = [2, 32], strides = [1, 1]} : vector<2x96xf32> to vector<2x32xf32>
    %539 = arith.mulf %538, %519 : vector<2x32xf32>
    %540 = vector.extract_strided_slice %535 {offsets = [0, 0], sizes = [2, 32], strides = [1, 1]} : vector<2x96xf32> to vector<2x32xf32>
    %541 = arith.mulf %540, %537 : vector<2x32xf32>
    %542 = arith.addf %539, %541 : vector<2x32xf32>
    %543 = vector.extract_strided_slice %535 {offsets = [0, 64], sizes = [2, 32], strides = [1, 1]} : vector<2x96xf32> to vector<2x32xf32>
    %544 = math.tanh %542 : vector<2x32xf32>
    %545 = arith.mulf %543, %544 : vector<2x32xf32>
    %546 = vector.extract_strided_slice %545 {offsets = [0, 0], sizes = [2, 16], strides = [1, 1]} : vector<2x32xf32> to vector<2x16xf32>
    %547 = vector.extract_strided_slice %545 {offsets = [0, 16], sizes = [2, 16], strides = [1, 1]} : vector<2x32xf32> to vector<2x16xf32>
    %548 = tpu.concatenate %385, %408, %431, %454, %477, %500, %523, %546 in 0 : vector<2x16xf32>, vector<2x16xf32>, vector<2x16xf32>, vector<2x16xf32>, vector<2x16xf32>, vector<2x16xf32>, vector<2x16xf32>, vector<2x16xf32> -> vector<16x16xf32>
    %549 = tpu.concatenate %547, %524, %501, %478, %455, %432, %409, %386 in 0 : vector<2x16xf32>, vector<2x16xf32>, vector<2x16xf32>, vector<2x16xf32>, vector<2x16xf32>, vector<2x16xf32>, vector<2x16xf32>, vector<2x16xf32> -> vector<16x16xf32>
    %c0_82 = arith.constant 0 : index
    %c0_83 = arith.constant 0 : index
    %550 = vector.load %arg12[%c0_82, %c0_83] : memref<32x40xf32, #tpu.memory_space<vmem>>, vector<32x40xf32>
    %551 = vector.extract_strided_slice %550 {offsets = [0, 0], sizes = [16, 40], strides = [1, 1]} : vector<32x40xf32> to vector<16x40xf32>
    %cst_84 = arith.constant dense<0.000000e+00> : vector<16x40xf32>
    %552 = tpu.matmul %548, %551, %cst_84 {dimension_numbers = #tpu.dot_dimension_numbers<[1], [0], [0], [1], [0, 0, 1, 1], [], []>} : vector<16x16xf32>, vector<16x40xf32>, vector<16x40xf32> -> vector<16x40xf32>
    %553 = vector.extract_strided_slice %550 {offsets = [16, 0], sizes = [16, 40], strides = [1, 1]} : vector<32x40xf32> to vector<16x40xf32>
    %cst_85 = arith.constant dense<0.000000e+00> : vector<16x40xf32>
    %554 = tpu.matmul %549, %553, %cst_85 {dimension_numbers = #tpu.dot_dimension_numbers<[1], [0], [0], [1], [0, 0, 1, 1], [], []>} : vector<16x16xf32>, vector<16x40xf32>, vector<16x40xf32> -> vector<16x40xf32>
    %555 = arith.addf %552, %554 : vector<16x40xf32>
    %c0_86 = arith.constant 0 : index
    %c0_87 = arith.constant 0 : index
    %556 = vector.load %arg13[%c0_86, %c0_87] : memref<1x40xf32, #tpu.memory_space<vmem>>, vector<1x40xf32>
    %557 = vector.broadcast %556 : vector<1x40xf32> to vector<16x40xf32>
    %558 = arith.addf %555, %557 : vector<16x40xf32>
    %559 = vector.extract_strided_slice %558 {offsets = [0, 0], sizes = [16, 32], strides = [1, 1]} : vector<16x40xf32> to vector<16x32xf32>
    %560 = vector.extract_strided_slice %558 {offsets = [0, 32], sizes = [16, 8], strides = [1, 1]} : vector<16x40xf32> to vector<16x8xf32>
    %c0_88 = arith.constant 0 : index
    %c0_89 = arith.constant 0 : index
    %561 = vector.load %arg14[%c0_88, %c0_89] : memref<1x32xf32, #tpu.memory_space<vmem>>, vector<1x32xf32>
    %c0_90 = arith.constant 0 : index
    %c0_91 = arith.constant 0 : index
    %562 = vector.load %arg15[%c0_90, %c0_91] : memref<1x32xf32, #tpu.memory_space<vmem>>, vector<1x32xf32>
    %cst_92 = arith.constant dense<0.000000e+00> : vector<16xf32>
    %563 = vector.multi_reduction <add>, %559, %cst_92 [1] : vector<16x32xf32> to vector<16xf32>
    %564 = vector.shape_cast %563 : vector<16xf32> to vector<16x1xf32>
    %cst_93 = arith.constant 3.200000e+01 : f32
    %565 = vector.broadcast %cst_93 : f32 to vector<16x1xf32>
    %566 = arith.divf %564, %565 : vector<16x1xf32>
    %567 = vector.broadcast %566 : vector<16x1xf32> to vector<16x32xf32>
    %568 = arith.subf %559, %567 : vector<16x32xf32>
    %569 = arith.mulf %568, %568 : vector<16x32xf32>
    %cst_94 = arith.constant dense<0.000000e+00> : vector<16xf32>
    %570 = vector.multi_reduction <add>, %569, %cst_94 [1] : vector<16x32xf32> to vector<16xf32>
    %571 = vector.shape_cast %570 : vector<16xf32> to vector<16x1xf32>
    %cst_95 = arith.constant 3.200000e+01 : f32
    %572 = vector.broadcast %cst_95 : f32 to vector<16x1xf32>
    %573 = arith.divf %571, %572 : vector<16x1xf32>
    %574 = vector.broadcast %566 : vector<16x1xf32> to vector<16x32xf32>
    %575 = arith.subf %559, %574 : vector<16x32xf32>
    %cst_96 = arith.constant 9.99999974E-6 : f32
    %576 = vector.broadcast %cst_96 : f32 to vector<16x1xf32>
    %577 = arith.addf %573, %576 : vector<16x1xf32>
    %578 = math.rsqrt %577 : vector<16x1xf32>
    %579 = vector.broadcast %578 : vector<16x1xf32> to vector<16x32xf32>
    %580 = arith.mulf %575, %579 : vector<16x32xf32>
    %581 = vector.broadcast %561 : vector<1x32xf32> to vector<16x32xf32>
    %582 = arith.mulf %580, %581 : vector<16x32xf32>
    %583 = vector.broadcast %562 : vector<1x32xf32> to vector<16x32xf32>
    %584 = arith.addf %582, %583 : vector<16x32xf32>
    %c0_97 = arith.constant 0 : index
    %c0_98 = arith.constant 0 : index
    %585 = vector.load %arg16[%c0_97, %c0_98] : memref<1x8xf32, #tpu.memory_space<vmem>>, vector<1x8xf32>
    %c0_99 = arith.constant 0 : index
    %c0_100 = arith.constant 0 : index
    %586 = vector.load %arg17[%c0_99, %c0_100] : memref<1x8xf32, #tpu.memory_space<vmem>>, vector<1x8xf32>
    %cst_101 = arith.constant dense<0.000000e+00> : vector<16xf32>
    %587 = vector.multi_reduction <add>, %560, %cst_101 [1] : vector<16x8xf32> to vector<16xf32>
    %588 = vector.shape_cast %587 : vector<16xf32> to vector<16x1xf32>
    %cst_102 = arith.constant 8.000000e+00 : f32
    %589 = vector.broadcast %cst_102 : f32 to vector<16x1xf32>
    %590 = arith.divf %588, %589 : vector<16x1xf32>
    %591 = vector.broadcast %590 : vector<16x1xf32> to vector<16x8xf32>
    %592 = arith.subf %560, %591 : vector<16x8xf32>
    %593 = arith.mulf %592, %592 : vector<16x8xf32>
    %cst_103 = arith.constant dense<0.000000e+00> : vector<16xf32>
    %594 = vector.multi_reduction <add>, %593, %cst_103 [1] : vector<16x8xf32> to vector<16xf32>
    %595 = vector.shape_cast %594 : vector<16xf32> to vector<16x1xf32>
    %cst_104 = arith.constant 8.000000e+00 : f32
    %596 = vector.broadcast %cst_104 : f32 to vector<16x1xf32>
    %597 = arith.divf %595, %596 : vector<16x1xf32>
    %598 = vector.broadcast %590 : vector<16x1xf32> to vector<16x8xf32>
    %599 = arith.subf %560, %598 : vector<16x8xf32>
    %cst_105 = arith.constant 9.99999974E-6 : f32
    %600 = vector.broadcast %cst_105 : f32 to vector<16x1xf32>
    %601 = arith.addf %597, %600 : vector<16x1xf32>
    %602 = math.rsqrt %601 : vector<16x1xf32>
    %603 = vector.broadcast %602 : vector<16x1xf32> to vector<16x8xf32>
    %604 = arith.mulf %599, %603 : vector<16x8xf32>
    %605 = vector.broadcast %585 : vector<1x8xf32> to vector<16x8xf32>
    %606 = arith.mulf %604, %605 : vector<16x8xf32>
    %607 = vector.broadcast %586 : vector<1x8xf32> to vector<16x8xf32>
    %608 = arith.addf %606, %607 : vector<16x8xf32>
    %cst_106 = arith.constant dense<0xFF800000> : vector<16xf32>
    %609 = vector.multi_reduction <maximumf>, %608, %cst_106 [1] : vector<16x8xf32> to vector<16xf32>
    %610 = vector.shape_cast %609 : vector<16xf32> to vector<16x1xf32>
    %611 = vector.broadcast %610 : vector<16x1xf32> to vector<16x8xf32>
    %612 = arith.subf %608, %611 : vector<16x8xf32>
    %613 = math.exp %612 : vector<16x8xf32>
    %cst_107 = arith.constant dense<0.000000e+00> : vector<16xf32>
    %614 = vector.multi_reduction <add>, %613, %cst_107 [1] : vector<16x8xf32> to vector<16xf32>
    %615 = vector.shape_cast %614 : vector<16xf32> to vector<16x1xf32>
    %616 = vector.broadcast %615 : vector<16x1xf32> to vector<16x8xf32>
    %617 = arith.divf %613, %616 : vector<16x8xf32>
    %cst_108 = arith.constant dense<0xFF800000> : vector<16xf32>
    %618 = vector.multi_reduction <maximumf>, %617, %cst_108 [1] : vector<16x8xf32> to vector<16xf32>
    %619 = vector.shape_cast %618 : vector<16xf32> to vector<16x1xf32>
    %620 = vector.broadcast %619 : vector<16x1xf32> to vector<16x8xf32>
    %621 = arith.cmpf oeq, %617, %620 : vector<16x8xf32>
    %cst_109 = arith.constant 0.000000e+00 : f32
    %622 = vector.broadcast %cst_109 : f32 to vector<16x8xf32>
    %623 = arith.select %621, %617, %622 : vector<16x8xi1>, vector<16x8xf32>
    %624 = tpu.concatenate %153, %584, %623 in 1 : vector<16x32xf32>, vector<16x32xf32>, vector<16x8xf32> -> vector<16x72xf32>
    %c0_110 = arith.constant 0 : index
    %c0_111 = arith.constant 0 : index
    %625 = vector.load %arg18[%c0_110, %c0_111] : memref<16x72xf32, #tpu.memory_space<vmem>>, vector<16x72xf32>
    tpu.vector_store %arg18[%c0_110, %c0_111], %624 {strides = array<i32>} : memref<16x72xf32, #tpu.memory_space<vmem>>, vector<16x72xf32>,
    return
  }
}

</mosaic_0001>

<llo_original>
// kernel: do_forward.1
$region0: #{do_forward.1}
  #allocation0 [shape = 'u32[]', space=smem, size = 0x4, offset = 0x4, fixed_abs, tag = 'smem constant byte address 0x4 - core index']
  #allocation1 [shape = 'u32[144,128]{1,0:T(1,128)}', space=vmem, size = 0x12000, scoped, tag = 'internal scratch']
  %s0 = inlined_call_operand.vmem [shape: s32[16,1], index: 0, kind: input, shape index: {}]
  %s1 = inlined_call_operand.vmem [shape: s32[96,1], index: 1, kind: input, shape index: {}]
  %s2 = inlined_call_operand.vmem [shape: f32[50,16], index: 2, kind: input, shape index: {}]
  %s3 = inlined_call_operand.vmem [shape: f32[48,64], index: 3, kind: input, shape index: {}]
  %s4 = inlined_call_operand.vmem [shape: f32[1,64], index: 4, kind: input, shape index: {}]
  %s5 = inlined_call_operand.vmem [shape: f32[8,32], index: 5, kind: input, shape index: {}]
  %s6 = inlined_call_operand.vmem [shape: f32[32,256], index: 6, kind: input, shape index: {}]
  %s7 = inlined_call_operand.vmem [shape: f32[1,256], index: 7, kind: input, shape index: {}]
  %s8 = inlined_call_operand.vmem [shape: f32[32,128], index: 8, kind: input, shape index: {}]
  %s9 = inlined_call_operand.vmem [shape: f32[32,256], index: 9, kind: input, shape index: {}]
  %s10 = inlined_call_operand.vmem [shape: f32[1,256], index: 10, kind: input, shape index: {}]
  %s11 = inlined_call_operand.vmem [shape: f32[32,128], index: 11, kind: input, shape index: {}]
  %s12 = inlined_call_operand.vmem [shape: f32[32,40], index: 12, kind: input, shape index: {}]
  %s13 = inlined_call_operand.vmem [shape: f32[1,40], index: 13, kind: input, shape index: {}]
  %s14 = inlined_call_operand.vmem [shape: f32[1,32], index: 14, kind: input, shape index: {}]
  %s15 = inlined_call_operand.vmem [shape: f32[1,32], index: 15, kind: input, shape index: {}]
  %s16 = inlined_call_operand.vmem [shape: f32[1,8], index: 16, kind: input, shape index: {}]
  %s17 = inlined_call_operand.vmem [shape: f32[1,8], index: 17, kind: input, shape index: {}]
  %s18 = inlined_call_operand.vmem [shape: f32[16,72], index: 18, kind: output, shape index: {}]
  %s19 = sld [smem:[#allocation0]]
  $region82: #{do_forward.1} parent=0
    _
  %s21 = ssub.s32 1, %s19
  %s22 = scalar_select 0, %s21, %s19
  // Predicated region
  $region2: #{do_forward.1} parent=0 // pred_check
    _
  $region3: #{do_forward.1} parent=0 // pred_check_branch
    %24 = sbr.rel (0) target = $region5
  $region4: #{do_forward.1} parent=0 // pred_region
    _
  $region5: #{do_forward.1} parent=0 // pred_fallthru
    _
  // Predicated region
  $region6: #{do_forward.1} parent=0 // pred_check
    _
  $region7: #{do_forward.1} parent=0 // pred_check_branch
    %26 = sbr.rel (0) target = $region9
  $region8: #{do_forward.1} parent=0 // pred_region
    _
  $region9: #{do_forward.1} parent=0 // pred_fallthru
    _
  // Predicated region
  $region10: #{do_forward.1} parent=0 // pred_check
    _
  $region11: #{do_forward.1} parent=0 // pred_check_branch
    %28 = sbr.rel (0) target = $region13
  $region12: #{do_forward.1} parent=0 // pred_region
    _
  $region13: #{do_forward.1} parent=0 // pred_fallthru
    _
  // Predicated region
  $region14: #{do_forward.1} parent=0 // pred_check
    _
  $region15: #{do_forward.1} parent=0 // pred_check_branch
    %30 = sbr.rel (0) target = $region17
  $region16: #{do_forward.1} parent=0 // pred_region
    _
  $region17: #{do_forward.1} parent=0 // pred_fallthru
    _
  // Predicated region
  $region18: #{do_forward.1} parent=0 // pred_check
    _
  $region19: #{do_forward.1} parent=0 // pred_check_branch
    %32 = sbr.rel (0) target = $region21
  $region20: #{do_forward.1} parent=0 // pred_region
    _
  $region21: #{do_forward.1} parent=0 // pred_fallthru
    _
  // Predicated region
  $region22: #{do_forward.1} parent=0 // pred_check
    _
  $region23: #{do_forward.1} parent=0 // pred_check_branch
    %34 = sbr.rel (0) target = $region25
  $region24: #{do_forward.1} parent=0 // pred_region
    _
  $region25: #{do_forward.1} parent=0 // pred_fallthru
    _
  // Predicated region
  $region26: #{do_forward.1} parent=0 // pred_check
    _
  $region27: #{do_forward.1} parent=0 // pred_check_branch
    %36 = sbr.rel (0) target = $region29
  $region28: #{do_forward.1} parent=0 // pred_region
    _
  $region29: #{do_forward.1} parent=0 // pred_fallthru
    _
  // Predicated region
  $region30: #{do_forward.1} parent=0 // pred_check
    _
  $region31: #{do_forward.1} parent=0 // pred_check_branch
    %38 = sbr.rel (0) target = $region33
  $region32: #{do_forward.1} parent=0 // pred_region
    _
  $region33: #{do_forward.1} parent=0 // pred_fallthru
    _
  // Predicated region
  $region34: #{do_forward.1} parent=0 // pred_check
    _
  $region35: #{do_forward.1} parent=0 // pred_check_branch
    %40 = sbr.rel (0) target = $region37
  $region36: #{do_forward.1} parent=0 // pred_region
    _
  $region37: #{do_forward.1} parent=0 // pred_fallthru
    _
  // Predicated region
  $region38: #{do_forward.1} parent=0 // pred_check
    _
  $region39: #{do_forward.1} parent=0 // pred_check_branch
    %42 = sbr.rel (0) target = $region41
  $region40: #{do_forward.1} parent=0 // pred_region
    _
  $region41: #{do_forward.1} parent=0 // pred_fallthru
    _
  // Predicated region
  $region42: #{do_forward.1} parent=0 // pred_check
    _
  $region43: #{do_forward.1} parent=0 // pred_check_branch
    %44 = sbr.rel (0) target = $region45
  $region44: #{do_forward.1} parent=0 // pred_region
    _
  $region45: #{do_forward.1} parent=0 // pred_fallthru
    _
  // Predicated region
  $region46: #{do_forward.1} parent=0 // pred_check
    _
  $region47: #{do_forward.1} parent=0 // pred_check_branch
    %46 = sbr.rel (0) target = $region49
  $region48: #{do_forward.1} parent=0 // pred_region
    _
  $region49: #{do_forward.1} parent=0 // pred_fallthru
    _
  // Predicated region
  $region50: #{do_forward.1} parent=0 // pred_check
    _
  $region51: #{do_forward.1} parent=0 // pred_check_branch
    %48 = sbr.rel (0) target = $region53
  $region52: #{do_forward.1} parent=0 // pred_region
    _
  $region53: #{do_forward.1} parent=0 // pred_fallthru
    _
  // Predicated region
  $region54: #{do_forward.1} parent=0 // pred_check
    _
  $region55: #{do_forward.1} parent=0 // pred_check_branch
    %50 = sbr.rel (0) target = $region57
  $region56: #{do_forward.1} parent=0 // pred_region
    _
  $region57: #{do_forward.1} parent=0 // pred_fallthru
    _
  // Predicated region
  $region58: #{do_forward.1} parent=0 // pred_check
    _
  $region59: #{do_forward.1} parent=0 // pred_check_branch
    %52 = sbr.rel (0) target = $region61
  $region60: #{do_forward.1} parent=0 // pred_region
    _
  $region61: #{do_forward.1} parent=0 // pred_fallthru
    _
  // Predicated region
  $region62: #{do_forward.1} parent=0 // pred_check
    _
  $region63: #{do_forward.1} parent=0 // pred_check_branch
    %54 = sbr.rel (0) target = $region65
  $region64: #{do_forward.1} parent=0 // pred_region
    _
  $region65: #{do_forward.1} parent=0 // pred_fallthru
    _
  // Predicated region
  $region66: #{do_forward.1} parent=0 // pred_check
    _
  $region67: #{do_forward.1} parent=0 // pred_check_branch
    %56 = sbr.rel (0) target = $region69
  $region68: #{do_forward.1} parent=0 // pred_region
    _
  $region69: #{do_forward.1} parent=0 // pred_fallthru
    _
  // Predicated region
  $region70: #{do_forward.1} parent=0 // pred_check
    _
  $region71: #{do_forward.1} parent=0 // pred_check_branch
    %58 = sbr.rel (0) target = $region73
  $region72: #{do_forward.1} parent=0 // pred_region
    _
  $region73: #{do_forward.1} parent=0 // pred_fallthru
    _
  %v59 = vld [vmem:[%s0] sm:$0xff]
  %v60 = vld [vmem:[%s0 + $0x8] sm:$0xff]
  %v61 = vlaneseq
  %v62 = vand.u32 %v61, 127
  %63 = vset.pattern.permute.xlu0 0
  %64 = vperm.xlu0 %63, %v59
  %v65 = vpop.permute.xlu0 %64
  %66 = vset.pattern.permute.xlu0 0
  %67 = vperm.xlu0 %66, %v60
  %v68 = vpop.permute.xlu0 %67
  %vm69 = vcmp.eq.s32.totalorder %v65, %v62
  %vm70 = vcmp.eq.s32.totalorder %v68, %v62
  %v71 = vsel %vm69, 1.0, 0.0
  %v72 = vsel %vm70, 1.0, 0.0
  %v73 = vld [vmem:[%s2] sm:$0xff]
  %v74 = vld [vmem:[%s2 + $0x8] sm:$0xff]
  %v75 = vld [vmem:[%s2 + $0x10] sm:$0xff]
  %v76 = vld [vmem:[%s2 + $0x18] sm:$0xff]
  %v77 = vld [vmem:[%s2 + $0x20] sm:$0xff]
  %v78 = vld [vmem:[%s2 + $0x28] sm:$0xff]
  %v79 = vld [vmem:[%s2 + $0x30] sm:$0x3]
  %vm80 = vcmask 408576
  %v82 = vsel %vm80, %v71, 0
  %v85 = vsel %vm80, %v72, 0
  %vm87 = vcmask 1041408
  %v89 = vsel %vm87, %v79, 0
  %91 = vmatprep.subr.mxu0 0.0
  %92 = vmatpush1.msra.mxu0 %v73
  %93 = vmatprep.subr.mxu0 0.0
  %94 = vmatpush1.msra.mxu0 %v74
  %95 = vmatprep.subr.mxu0 0.0
  %96 = vmatpush1.msra.mxu0 %v75
  %97 = vmatprep.subr.mxu0 0.0
  %98 = vmatpush1.msra.mxu0 %v76
  %99 = vmatprep.subr.mxu0 0.0
  %100 = vmatpush1.msra.mxu0 %v77
  %101 = vmatprep.subr.mxu0 0.0
  %102 = vmatpush1.msra.mxu0 %v78
  %103 = vmatprep.subr.mxu0 0.0
  %104 = vmatpush1.msra.mxu0 %v89
  %105 = vmatprep.subr.mxu0 0.0
  %106 = vmatpush1.msra.mxu0 0.0
  %107 = vmatprep.subr.mxu0 0.0
  %108 = vmatpush1.msra.mxu0 0.0
  %109 = vmatprep.subr.mxu0 0.0
  %110 = vmatpush1.msra.mxu0 0.0
  %111 = vmatprep.subr.mxu0 0.0
  %112 = vmatpush1.msra.mxu0 0.0
  %113 = vmatprep.subr.mxu0 0.0
  %114 = vmatpush1.msra.mxu0 0.0
  %115 = vmatprep.subr.mxu0 0.0
  %116 = vmatpush1.msra.mxu0 0.0
  %117 = vmatprep.subr.mxu0 0.0
  %118 = vmatpush1.msra.mxu0 0.0
  %119 = vmatprep.subr.mxu0 0.0
  %120 = vmatpush1.msra.mxu0 0.0
  %121 = vmatprep.subr.mxu0 0.0
  %122 = vmatpush1.msra.mxu0 0.0
  %123 = vmatprep.subr.mxu0 0.0
  %124 = vmatpush1.msra.mxu0 0.0
  %125 = vmatprep.subr.mxu0 0.0
  %126 = vmatpush1.msra.mxu0 0.0
  %127 = vmatprep.subr.mxu0 0.0
  %128 = vmatpush1.msra.mxu0 0.0
  %129 = vmatprep.subr.mxu0 0.0
  %130 = vmatpush1.msra.mxu0 0.0
  %131 = vmatprep.subr.mxu0 0.0
  %132 = vmatpush1.msra.mxu0 0.0
  %133 = vmatprep.subr.mxu0 0.0
  %134 = vmatpush1.msra.mxu0 0.0
  %135 = vmatprep.subr.mxu0 0.0
  %136 = vmatpush1.msra.mxu0 0.0
  %137 = vmatprep.subr.mxu0 0.0
  %138 = vmatpush1.msra.mxu0 0.0
  %139 = vmatprep.subr.mxu0 0.0
  %140 = vmatpush1.msra.mxu0 0.0
  %141 = vmatprep.subr.mxu0 0.0
  %142 = vmatpush1.msra.mxu0 0.0
  %143 = vmatprep.subr.mxu0 0.0
  %144 = vmatpush1.msra.mxu0 0.0
  %145 = vmatprep.subr.mxu0 0.0
  %146 = vmatpush1.msra.mxu0 0.0
  %147 = vmatprep.subr.mxu0 0.0
  %148 = vmatpush1.msra.mxu0 0.0
  %149 = vmatprep.subr.mxu0 0.0
  %150 = vmatpush1.msra.mxu0 0.0
  %151 = vmatprep.subr.mxu0 0.0
  %152 = vmatpush1.msra.mxu0 0.0
  %153 = vmatprep.subr.mxu0 0.0
  %154 = vmatpush1.msra.mxu0 0.0
  %155 = vmatprep.mubr.f32.mxu0 0.0
  %156 = vmatmul.mubr.f32.gmra.mrb[0].mxu0 %v82
  %v157 = vpop.f32.mrb[0].mxu0
  %v158 = vadd.f32 0.0, %v157
  %v159 = vpop.f32.mrb[0].mxu0
  %160 = vmatprep.mubr.f32.mxu0 0.0
  %161 = vmatmul.mubr.f32.gmra.mrb[0].mxu0 %v85
  %v162 = vpop.f32.mrb[0].mxu0
  %v163 = vadd.f32 0.0, %v162
  %v164 = vpop.f32.mrb[0].mxu0
  %165 = vdwg.mxu0
  %v166 = vld [vmem:[%s1] sm:$0xff]
  %v167 = vld [vmem:[%s1 + $0x8] sm:$0xff]
  %v168 = vld [vmem:[%s1 + $0x10] sm:$0xff]
  %v169 = vld [vmem:[%s1 + $0x18] sm:$0xff]
  %v170 = vld [vmem:[%s1 + $0x20] sm:$0xff]
  %v171 = vld [vmem:[%s1 + $0x28] sm:$0xff]
  %v172 = vld [vmem:[%s1 + $0x30] sm:$0xff]
  %v173 = vld [vmem:[%s1 + $0x38] sm:$0xff]
  %v174 = vld [vmem:[%s1 + $0x40] sm:$0xff]
  %v175 = vld [vmem:[%s1 + $0x48] sm:$0xff]
  %v176 = vld [vmem:[%s1 + $0x50] sm:$0xff]
  %v177 = vld [vmem:[%s1 + $0x58] sm:$0xff]
  %178 = vset.pattern.permute.xlu0 0
  %179 = vperm.xlu0 %178, %v166
  %v180 = vpop.permute.xlu0 %179
  %181 = vset.pattern.permute.xlu0 0
  %182 = vperm.xlu0 %181, %v167
  %v183 = vpop.permute.xlu0 %182
  %184 = vset.pattern.permute.xlu0 0
  %185 = vperm.xlu0 %184, %v168
  %v186 = vpop.permute.xlu0 %185
  %187 = vset.pattern.permute.xlu0 0
  %188 = vperm.xlu0 %187, %v169
  %v189 = vpop.permute.xlu0 %188
  %190 = vset.pattern.permute.xlu0 0
  %191 = vperm.xlu0 %190, %v170
  %v192 = vpop.permute.xlu0 %191
  %193 = vset.pattern.permute.xlu0 0
  %194 = vperm.xlu0 %193, %v171
  %v195 = vpop.permute.xlu0 %194
  %196 = vset.pattern.permute.xlu0 0
  %197 = vperm.xlu0 %196, %v172
  %v198 = vpop.permute.xlu0 %197
  %199 = vset.pattern.permute.xlu0 0
  %200 = vperm.xlu0 %199, %v173
  %v201 = vpop.permute.xlu0 %200
  %202 = vset.pattern.permute.xlu0 0
  %203 = vperm.xlu0 %202, %v174
  %v204 = vpop.permute.xlu0 %203
  %205 = vset.pattern.permute.xlu0 0
  %206 = vperm.xlu0 %205, %v175
  %v207 = vpop.permute.xlu0 %206
  %208 = vset.pattern.permute.xlu0 0
  %209 = vperm.xlu0 %208, %v176
  %v210 = vpop.permute.xlu0 %209
  %211 = vset.pattern.permute.xlu0 0
  %212 = vperm.xlu0 %211, %v177
  %v213 = vpop.permute.xlu0 %212
  %vm214 = vcmp.eq.s32.totalorder %v180, %v62
  %vm215 = vcmp.eq.s32.totalorder %v183, %v62
  %vm216 = vcmp.eq.s32.totalorder %v186, %v62
  %vm217 = vcmp.eq.s32.totalorder %v189, %v62
  %vm218 = vcmp.eq.s32.totalorder %v192, %v62
  %vm219 = vcmp.eq.s32.totalorder %v195, %v62
  %vm220 = vcmp.eq.s32.totalorder %v198, %v62
  %vm221 = vcmp.eq.s32.totalorder %v201, %v62
  %vm222 = vcmp.eq.s32.totalorder %v204, %v62
  %vm223 = vcmp.eq.s32.totalorder %v207, %v62
  %vm224 = vcmp.eq.s32.totalorder %v210, %v62
  %vm225 = vcmp.eq.s32.totalorder %v213, %v62
  %v226 = vsel %vm214, 1.0, 0.0
  %v227 = vsel %vm215, 1.0, 0.0
  %v228 = vsel %vm216, 1.0, 0.0
  %v229 = vsel %vm217, 1.0, 0.0
  %v230 = vsel %vm218, 1.0, 0.0
  %v231 = vsel %vm219, 1.0, 0.0
  %v232 = vsel %vm220, 1.0, 0.0
  %v233 = vsel %vm221, 1.0, 0.0
  %v234 = vsel %vm222, 1.0, 0.0
  %v235 = vsel %vm223, 1.0, 0.0
  %v236 = vsel %vm224, 1.0, 0.0
  %v237 = vsel %vm225, 1.0, 0.0
  %v238 = vld [vmem:[%s3] sm:$0xff]
  %v239 = vld [vmem:[%s3 + $0x8] sm:$0xff]
  %v240 = vld [vmem:[%s3 + $0x10] sm:$0xff]
  %v241 = vld [vmem:[%s3 + $0x18] sm:$0xff]
  %v242 = vld [vmem:[%s3 + $0x20] sm:$0xff]
  %v243 = vld [vmem:[%s3 + $0x28] sm:$0xff]
  %v244 = vld [vmem:[%s4] sm:$0x1]
  %v246 = vlaneseq
  %v247 = vshrl.u32 %v246, 7
  %v248 = vsub.s32 0, %v247
  %v249 = vrot.slane %v244, %v248
  %vm251 = vcmask 392192
  %v253 = vsel %vm251, %v226, 0
  %v256 = vsel %vm251, %v227, 0
  %v259 = vsel %vm251, %v228, 0
  %v262 = vsel %vm251, %v229, 0
  %v265 = vsel %vm251, %v230, 0
  %v268 = vsel %vm251, %v231, 0
  %v271 = vsel %vm251, %v232, 0
  %v274 = vsel %vm251, %v233, 0
  %v277 = vsel %vm251, %v234, 0
  %v280 = vsel %vm251, %v235, 0
  %v283 = vsel %vm251, %v236, 0
  %v286 = vsel %vm251, %v237, 0
  %288 = vmatprep.subr.mxu0 0.0
  %289 = vmatpush1.msra.mxu0 %v238
  %290 = vmatprep.subr.mxu0 0.0
  %291 = vmatpush1.msra.mxu0 %v239
  %292 = vmatprep.subr.mxu0 0.0
  %293 = vmatpush1.msra.mxu0 %v240
  %294 = vmatprep.subr.mxu0 0.0
  %295 = vmatpush1.msra.mxu0 %v241
  %296 = vmatprep.subr.mxu0 0.0
  %297 = vmatpush1.msra.mxu0 %v242
  %298 = vmatprep.subr.mxu0 0.0
  %299 = vmatpush1.msra.mxu0 %v243
  %300 = vmatprep.subr.mxu0 0.0
  %301 = vmatpush1.msra.mxu0 0.0
  %302 = vmatprep.subr.mxu0 0.0
  %303 = vmatpush1.msra.mxu0 0.0
  %304 = vmatprep.subr.mxu0 0.0
  %305 = vmatpush1.msra.mxu0 0.0
  %306 = vmatprep.subr.mxu0 0.0
  %307 = vmatpush1.msra.mxu0 0.0
  %308 = vmatprep.subr.mxu0 0.0
  %309 = vmatpush1.msra.mxu0 0.0
  %310 = vmatprep.subr.mxu0 0.0
  %311 = vmatpush1.msra.mxu0 0.0
  %312 = vmatprep.subr.mxu0 0.0
  %313 = vmatpush1.msra.mxu0 0.0
  %314 = vmatprep.subr.mxu0 0.0
  %315 = vmatpush1.msra.mxu0 0.0
  %316 = vmatprep.subr.mxu0 0.0
  %317 = vmatpush1.msra.mxu0 0.0
  %318 = vmatprep.subr.mxu0 0.0
  %319 = vmatpush1.msra.mxu0 0.0
  %320 = vmatprep.subr.mxu0 0.0
  %321 = vmatpush1.msra.mxu0 0.0
  %322 = vmatprep.subr.mxu0 0.0
  %323 = vmatpush1.msra.mxu0 0.0
  %324 = vmatprep.subr.mxu0 0.0
  %325 = vmatpush1.msra.mxu0 0.0
  %326 = vmatprep.subr.mxu0 0.0
  %327 = vmatpush1.msra.mxu0 0.0
  %328 = vmatprep.subr.mxu0 0.0
  %329 = vmatpush1.msra.mxu0 0.0
  %330 = vmatprep.subr.mxu0 0.0
  %331 = vmatpush1.msra.mxu0 0.0
  %332 = vmatprep.subr.mxu0 0.0
  %333 = vmatpush1.msra.mxu0 0.0
  %334 = vmatprep.subr.mxu0 0.0
  %335 = vmatpush1.msra.mxu0 0.0
  %336 = vmatprep.subr.mxu0 0.0
  %337 = vmatpush1.msra.mxu0 0.0
  %338 = vmatprep.subr.mxu0 0.0
  %339 = vmatpush1.msra.mxu0 0.0
  %340 = vmatprep.subr.mxu0 0.0
  %341 = vmatpush1.msra.mxu0 0.0
  %342 = vmatprep.subr.mxu0 0.0
  %343 = vmatpush1.msra.mxu0 0.0
  %344 = vmatprep.subr.mxu0 0.0
  %345 = vmatpush1.msra.mxu0 0.0
  %346 = vmatprep.subr.mxu0 0.0
  %347 = vmatpush1.msra.mxu0 0.0
  %348 = vmatprep.subr.mxu0 0.0
  %349 = vmatpush1.msra.mxu0 0.0
  %350 = vmatprep.subr.mxu0 0.0
  %351 = vmatpush1.msra.mxu0 0.0
  %352 = vmatprep.mubr.f32.mxu0 0.0
  %353 = vmatmul.mubr.f32.gmra.mrb[0].mxu0 %v253
  %v354 = vpop.f32.mrb[0].mxu0
  %v355 = vadd.f32 %v249, %v354
  %v356 = vpop.f32.mrb[0].mxu0
  %357 = vmatprep.mubr.f32.mxu0 0.0
  %358 = vmatmul.mubr.f32.gmra.mrb[0].mxu0 %v256
  %v359 = vpop.f32.mrb[0].mxu0
  %v360 = vadd.f32 %v249, %v359
  %v361 = vpop.f32.mrb[0].mxu0
  %362 = vmatprep.mubr.f32.mxu0 0.0
  %363 = vmatmul.mubr.f32.gmra.mrb[0].mxu0 %v259
  %v364 = vpop.f32.mrb[0].mxu0
  %v365 = vadd.f32 %v249, %v364
  %v366 = vpop.f32.mrb[0].mxu0
  %367 = vmatprep.mubr.f32.mxu0 0.0
  %368 = vmatmul.mubr.f32.gmra.mrb[0].mxu0 %v262
  %v369 = vpop.f32.mrb[0].mxu0
  %v370 = vadd.f32 %v249, %v369
  %v371 = vpop.f32.mrb[0].mxu0
  %372 = vmatprep.mubr.f32.mxu0 0.0
  %373 = vmatmul.mubr.f32.gmra.mrb[0].mxu0 %v265
  %v374 = vpop.f32.mrb[0].mxu0
  %v375 = vadd.f32 %v249, %v374
  %v376 = vpop.f32.mrb[0].mxu0
  %377 = vmatprep.mubr.f32.mxu0 0.0
  %378 = vmatmul.mubr.f32.gmra.mrb[0].mxu0 %v268
  %v379 = vpop.f32.mrb[0].mxu0
  %v380 = vadd.f32 %v249, %v379
  %v381 = vpop.f32.mrb[0].mxu0
  %382 = vmatprep.mubr.f32.mxu0 0.0
  %383 = vmatmul.mubr.f32.gmra.mrb[0].mxu0 %v271
  %v384 = vpop.f32.mrb[0].mxu0
  %v385 = vadd.f32 %v249, %v384
  %v386 = vpop.f32.mrb[0].mxu0
  %387 = vmatprep.mubr.f32.mxu0 0.0
  %388 = vmatmul.mubr.f32.gmra.mrb[0].mxu0 %v274
  %v389 = vpop.f32.mrb[0].mxu0
  %v390 = vadd.f32 %v249, %v389
  %v391 = vpop.f32.mrb[0].mxu0
  %392 = vmatprep.mubr.f32.mxu0 0.0
  %393 = vmatmul.mubr.f32.gmra.mrb[0].mxu0 %v277
  %v394 = vpop.f32.mrb[0].mxu0
  %v395 = vadd.f32 %v249, %v394
  %v396 = vpop.f32.mrb[0].mxu0
  %397 = vmatprep.mubr.f32.mxu0 0.0
  %398 = vmatmul.mubr.f32.gmra.mrb[0].mxu0 %v280
  %v399 = vpop.f32.mrb[0].mxu0
  %v400 = vadd.f32 %v249, %v399
  %v401 = vpop.f32.mrb[0].mxu0
  %402 = vmatprep.mubr.f32.mxu0 0.0
  %403 = vmatmul.mubr.f32.gmra.mrb[0].mxu0 %v283
  %v404 = vpop.f32.mrb[0].mxu0
  %v405 = vadd.f32 %v249, %v404
  %v406 = vpop.f32.mrb[0].mxu0
  %407 = vmatprep.mubr.f32.mxu0 0.0
  %408 = vmatmul.mubr.f32.gmra.mrb[0].mxu0 %v286
  %v409 = vpop.f32.mrb[0].mxu0
  %v410 = vadd.f32 %v249, %v409
  %v411 = vpop.f32.mrb[0].mxu0
  %412 = vdwg.mxu0
  %v413 = vld [vmem:[%s5] sm:$0xff]
  %vm414 = vcmask 64512
  %v416 = vsel %vm414, 0.0, 0
  %418 = vmatprep.subr.mxu0 0.0
  %419 = vmatpush1.msra.mxu0 %v413
  %420 = vmatprep.subr.mxu0 0.0
  %421 = vmatpush1.msra.mxu0 0.0
  %422 = vmatprep.subr.mxu0 0.0
  %423 = vmatpush1.msra.mxu0 0.0
  %424 = vmatprep.subr.mxu0 0.0
  %425 = vmatpush1.msra.mxu0 0.0
  %426 = vmatprep.subr.mxu0 0.0
  %427 = vmatpush1.msra.mxu0 0.0
  %428 = vmatprep.subr.mxu0 0.0
  %429 = vmatpush1.msra.mxu0 0.0
  %430 = vmatprep.subr.mxu0 0.0
  %431 = vmatpush1.msra.mxu0 0.0
  %432 = vmatprep.subr.mxu0 0.0
  %433 = vmatpush1.msra.mxu0 0.0
  %434 = vmatprep.subr.mxu0 0.0
  %435 = vmatpush1.msra.mxu0 0.0
  %436 = vmatprep.subr.mxu0 0.0
  %437 = vmatpush1.msra.mxu0 0.0
  %438 = vmatprep.subr.mxu0 0.0
  %439 = vmatpush1.msra.mxu0 0.0
  %440 = vmatprep.subr.mxu0 0.0
  %441 = vmatpush1.msra.mxu0 0.0
  %442 = vmatprep.subr.mxu0 0.0
  %443 = vmatpush1.msra.mxu0 0.0
  %444 = vmatprep.subr.mxu0 0.0
  %445 = vmatpush1.msra.mxu0 0.0
  %446 = vmatprep.subr.mxu0 0.0
  %447 = vmatpush1.msra.mxu0 0.0
  %448 = vmatprep.subr.mxu0 0.0
  %449 = vmatpush1.msra.mxu0 0.0
  %450 = vmatprep.subr.mxu0 0.0
  %451 = vmatpush1.msra.mxu0 0.0
  %452 = vmatprep.subr.mxu0 0.0
  %453 = vmatpush1.msra.mxu0 0.0
  %454 = vmatprep.subr.mxu0 0.0
  %455 = vmatpush1.msra.mxu0 0.0
  %456 = vmatprep.subr.mxu0 0.0
  %457 = vmatpush1.msra.mxu0 0.0
  %458 = vmatprep.subr.mxu0 0.0
  %459 = vmatpush1.msra.mxu0 0.0
  %460 = vmatprep.subr.mxu0 0.0
  %461 = vmatpush1.msra.mxu0 0.0
  %462 = vmatprep.subr.mxu0 0.0
  %463 = vmatpush1.msra.mxu0 0.0
  %464 = vmatprep.subr.mxu0 0.0
  %465 = vmatpush1.msra.mxu0 0.0
  %466 = vmatprep.subr.mxu0 0.0
  %467 = vmatpush1.msra.mxu0 0.0
  %468 = vmatprep.subr.mxu0 0.0
  %469 = vmatpush1.msra.mxu0 0.0
  %470 = vmatprep.subr.mxu0 0.0
  %471 = vmatpush1.msra.mxu0 0.0
  %472 = vmatprep.subr.mxu0 0.0
  %473 = vmatpush1.msra.mxu0 0.0
  %474 = vmatprep.subr.mxu0 0.0
  %475 = vmatpush1.msra.mxu0 0.0
  %476 = vmatprep.subr.mxu0 0.0
  %477 = vmatpush1.msra.mxu0 0.0
  %478 = vmatprep.subr.mxu0 0.0
  %479 = vmatpush1.msra.mxu0 0.0
  %480 = vmatprep.subr.mxu0 0.0
  %481 = vmatpush1.msra.mxu0 0.0
  %482 = vmatprep.mubr.f32.mxu0 0.0
  %483 = vmatmul.mubr.f32.gmra.mrb[0].mxu0 %v416
  %v484 = vpop.f32.mrb[0].mxu0
  %v485 = vadd.f32 0.0, %v484
  %v486 = vpop.f32.mrb[0].mxu0
  %487 = vmatprep.mubr.f32.mxu0 0.0
  %488 = vmatmul.mubr.f32.gmra.mrb[0].mxu0 %v416
  %v489 = vpop.f32.mrb[0].mxu0
  %v490 = vadd.f32 0.0, %v489
  %v491 = vpop.f32.mrb[0].mxu0
  %492 = vdwg.mxu0
  %v493 = vadd.f32 %v355, %v485
  %v494 = vadd.f32 %v360, %v490
  %v495 = vxor.u32 %v493, 2147483648
  %v496 = vxor.u32 %v494, 2147483648
  %v497 = vmul.f32 %v495, 1.442695
  %v498 = vpow.pop %v497
  %v499 = vmul.f32 %v496, 1.442695
  %v500 = vpow.pop %v499
  %v501 = vadd.f32 %v498, 1.0
  %v502 = vadd.f32 %v500, 1.0
  %v503 = vrcp.pop %v501
  %v504 = vmul.f32 1.0, %v503
  %v505 = vrcp.pop %v502
  %v506 = vmul.f32 1.0, %v505
  %v507 = vtanh.pop %v493
  %v508 = vtanh.pop %v494
  %v509 = vmul.f32 %v504, 0.0
  %v510 = vmul.f32 %v506, 0.0
  %513 = vrot.lane.b32.xlu0 %v507, 104
  %v514 = vpop.permute.xlu0 %513
  %515 = vrot.lane.b32.xlu0 %v508, 104
  %v516 = vpop.permute.xlu0 %515
  %v519 = vmul.f32 %v504, %v514
  %v520 = vmul.f32 %v506, %v516
  %523 = vrot.lane.b32.xlu0 %v519, 8
  %v524 = vpop.permute.xlu0 %523
  %525 = vrot.lane.b32.xlu0 %v520, 8
  %v526 = vpop.permute.xlu0 %525
  %v529 = vadd.f32 %v509, %v524
  %v530 = vadd.f32 %v510, %v526
  %v531 = vtanh.pop %v529
  %v532 = vtanh.pop %v530
  %535 = vrot.lane.b32.xlu0 %v531, 8
  %v536 = vpop.permute.xlu0 %535
  %537 = vrot.lane.b32.xlu0 %v532, 8
  %v538 = vpop.permute.xlu0 %537
  %v541 = vmul.f32 %v504, %v536
  %v542 = vmul.f32 %v506, %v538
  %545 = vrot.lane.b32.xlu0 %v541, 112
  %v546 = vpop.permute.xlu0 %545
  %547 = vrot.lane.b32.xlu0 %v542, 112
  %v548 = vpop.permute.xlu0 %547
  %v549 = vsel %vm414, %v546, 0
  %v551 = vsel %vm414, %v548, 0
  %553 = vmatprep.subr.mxu0 0.0
  %554 = vmatpush1.msra.mxu0 %v413
  %555 = vmatprep.subr.mxu0 0.0
  %556 = vmatpush1.msra.mxu0 0.0
  %557 = vmatprep.subr.mxu0 0.0
  %558 = vmatpush1.msra.mxu0 0.0
  %559 = vmatprep.subr.mxu0 0.0
  %560 = vmatpush1.msra.mxu0 0.0
  %561 = vmatprep.subr.mxu0 0.0
  %562 = vmatpush1.msra.mxu0 0.0
  %563 = vmatprep.subr.mxu0 0.0
  %564 = vmatpush1.msra.mxu0 0.0
  %565 = vmatprep.subr.mxu0 0.0
  %566 = vmatpush1.msra.mxu0 0.0
  %567 = vmatprep.subr.mxu0 0.0
  %568 = vmatpush1.msra.mxu0 0.0
  %569 = vmatprep.subr.mxu0 0.0
  %570 = vmatpush1.msra.mxu0 0.0
  %571 = vmatprep.subr.mxu0 0.0
  %572 = vmatpush1.msra.mxu0 0.0
  %573 = vmatprep.subr.mxu0 0.0
  %574 = vmatpush1.msra.mxu0 0.0
  %575 = vmatprep.subr.mxu0 0.0
  %576 = vmatpush1.msra.mxu0 0.0
  %577 = vmatprep.subr.mxu0 0.0
  %578 = vmatpush1.msra.mxu0 0.0
  %579 = vmatprep.subr.mxu0 0.0
  %580 = vmatpush1.msra.mxu0 0.0
  %581 = vmatprep.subr.mxu0 0.0
  %582 = vmatpush1.msra.mxu0 0.0
  %583 = vmatprep.subr.mxu0 0.0
  %584 = vmatpush1.msra.mxu0 0.0
  %585 = vmatprep.subr.mxu0 0.0
  %586 = vmatpush1.msra.mxu0 0.0
  %587 = vmatprep.subr.mxu0 0.0
  %588 = vmatpush1.msra.mxu0 0.0
  %589 = vmatprep.subr.mxu0 0.0
  %590 = vmatpush1.msra.mxu0 0.0
  %591 = vmatprep.subr.mxu0 0.0
  %592 = vmatpush1.msra.mxu0 0.0
  %593 = vmatprep.subr.mxu0 0.0
  %594 = vmatpush1.msra.mxu0 0.0
  %595 = vmatprep.subr.mxu0 0.0
  %596 = vmatpush1.msra.mxu0 0.0
  %597 = vmatprep.subr.mxu0 0.0
  %598 = vmatpush1.msra.mxu0 0.0
  %599 = vmatprep.subr.mxu0 0.0
  %600 = vmatpush1.msra.mxu0 0.0
  %601 = vmatprep.subr.mxu0 0.0
  %602 = vmatpush1.msra.mxu0 0.0
  %603 = vmatprep.subr.mxu0 0.0
  %604 = vmatpush1.msra.mxu0 0.0
  %605 = vmatprep.subr.mxu0 0.0
  %606 = vmatpush1.msra.mxu0 0.0
  %607 = vmatprep.subr.mxu0 0.0
  %608 = vmatpush1.msra.mxu0 0.0
  %609 = vmatprep.subr.mxu0 0.0
  %610 = vmatpush1.msra.mxu0 0.0
  %611 = vmatprep.subr.mxu0 0.0
  %612 = vmatpush1.msra.mxu0 0.0
  %613 = vmatprep.subr.mxu0 0.0
  %614 = vmatpush1.msra.mxu0 0.0
  %615 = vmatprep.subr.mxu0 0.0
  %616 = vmatpush1.msra.mxu0 0.0
  %617 = vmatprep.mubr.f32.mxu0 0.0
  %618 = vmatmul.mubr.f32.gmra.mrb[0].mxu0 %v549
  %v619 = vpop.f32.mrb[0].mxu0
  %v620 = vadd.f32 0.0, %v619
  %v621 = vpop.f32.mrb[0].mxu0
  %622 = vmatprep.mubr.f32.mxu0 0.0
  %623 = vmatmul.mubr.f32.gmra.mrb[0].mxu0 %v551
  %v624 = vpop.f32.mrb[0].mxu0
  %v625 = vadd.f32 0.0, %v624
  %v626 = vpop.f32.mrb[0].mxu0
  %627 = vdwg.mxu0
  %v628 = vadd.f32 %v365, %v620
  %v629 = vadd.f32 %v370, %v625
  %v630 = vxor.u32 %v628, 2147483648
  %v631 = vxor.u32 %v629, 2147483648
  %v632 = vmul.f32 %v630, 1.442695
  %v633 = vpow.pop %v632
  %v634 = vmul.f32 %v631, 1.442695
  %v635 = vpow.pop %v634
  %v636 = vadd.f32 %v633, 1.0
  %v637 = vadd.f32 %v635, 1.0
  %v638 = vrcp.pop %v636
  %v639 = vmul.f32 1.0, %v638
  %v640 = vrcp.pop %v637
  %v641 = vmul.f32 1.0, %v640
  %v642 = vtanh.pop %v628
  %v643 = vtanh.pop %v629
  %v644 = vmul.f32 %v639, %v529
  %v645 = vmul.f32 %v641, %v530
  %648 = vrot.lane.b32.xlu0 %v642, 104
  %v649 = vpop.permute.xlu0 %648
  %650 = vrot.lane.b32.xlu0 %v643, 104
  %v651 = vpop.permute.xlu0 %650
  %v654 = vmul.f32 %v639, %v649
  %v655 = vmul.f32 %v641, %v651
  %658 = vrot.lane.b32.xlu0 %v654, 8
  %v659 = vpop.permute.xlu0 %658
  %660 = vrot.lane.b32.xlu0 %v655, 8
  %v661 = vpop.permute.xlu0 %660
  %v664 = vadd.f32 %v644, %v659
  %v665 = vadd.f32 %v645, %v661
  %v666 = vtanh.pop %v664
  %v667 = vtanh.pop %v665
  %670 = vrot.lane.b32.xlu0 %v666, 8
  %v671 = vpop.permute.xlu0 %670
  %672 = vrot.lane.b32.xlu0 %v667, 8
  %v673 = vpop.permute.xlu0 %672
  %v676 = vmul.f32 %v639, %v671
  %v677 = vmul.f32 %v641, %v673
  %680 = vrot.lane.b32.xlu0 %v676, 112
  %v681 = vpop.permute.xlu0 %680
  %682 = vrot.lane.b32.xlu0 %v677, 112
  %v683 = vpop.permute.xlu0 %682
  %v684 = vsel %vm414, %v681, 0
  %v686 = vsel %vm414, %v683, 0
  %688 = vmatprep.subr.mxu0 0.0
  %689 = vmatpush1.msra.mxu0 %v413
  %690 = vmatprep.subr.mxu0 0.0
  %691 = vmatpush1.msra.mxu0 0.0
  %692 = vmatprep.subr.mxu0 0.0
  %693 = vmatpush1.msra.mxu0 0.0
  %694 = vmatprep.subr.mxu0 0.0
  %695 = vmatpush1.msra.mxu0 0.0
  %696 = vmatprep.subr.mxu0 0.0
  %697 = vmatpush1.msra.mxu0 0.0
  %698 = vmatprep.subr.mxu0 0.0
  %699 = vmatpush1.msra.mxu0 0.0
  %700 = vmatprep.subr.mxu0 0.0
  %701 = vmatpush1.msra.mxu0 0.0
  %702 = vmatprep.subr.mxu0 0.0
  %703 = vmatpush1.msra.mxu0 0.0
  %704 = vmatprep.subr.mxu0 0.0
  %705 = vmatpush1.msra.mxu0 0.0
  %706 = vmatprep.subr.mxu0 0.0
  %707 = vmatpush1.msra.mxu0 0.0
  %708 = vmatprep.subr.mxu0 0.0
  %709 = vmatpush1.msra.mxu0 0.0
  %710 = vmatprep.subr.mxu0 0.0
  %711 = vmatpush1.msra.mxu0 0.0
  %712 = vmatprep.subr.mxu0 0.0
  %713 = vmatpush1.msra.mxu0 0.0
  %714 = vmatprep.subr.mxu0 0.0
  %715 = vmatpush1.msra.mxu0 0.0
  %716 = vmatprep.subr.mxu0 0.0
  %717 = vmatpush1.msra.mxu0 0.0
  %718 = vmatprep.subr.mxu0 0.0
  %719 = vmatpush1.msra.mxu0 0.0
  %720 = vmatprep.subr.mxu0 0.0
  %721 = vmatpush1.msra.mxu0 0.0
  %722 = vmatprep.subr.mxu0 0.0
  %723 = vmatpush1.msra.mxu0 0.0
  %724 = vmatprep.subr.mxu0 0.0
  %725 = vmatpush1.msra.mxu0 0.0
  %726 = vmatprep.subr.mxu0 0.0
  %727 = vmatpush1.msra.mxu0 0.0
  %728 = vmatprep.subr.mxu0 0.0
  %729 = vmatpush1.msra.mxu0 0.0
  %730 = vmatprep.subr.mxu0 0.0
  %731 = vmatpush1.msra.mxu0 0.0
  %732 = vmatprep.subr.mxu0 0.0
  %733 = vmatpush1.msra.mxu0 0.0
  %734 = vmatprep.subr.mxu0 0.0
  %735 = vmatpush1.msra.mxu0 0.0
  %736 = vmatprep.subr.mxu0 0.0
  %737 = vmatpush1.msra.mxu0 0.0
  %738 = vmatprep.subr.mxu0 0.0
  %739 = vmatpush1.msra.mxu0 0.0
  %740 = vmatprep.subr.mxu0 0.0
  %741 = vmatpush1.msra.mxu0 0.0
  %742 = vmatprep.subr.mxu0 0.0
  %743 = vmatpush1.msra.mxu0 0.0
  %744 = vmatprep.subr.mxu0 0.0
  %745 = vmatpush1.msra.mxu0 0.0
  %746 = vmatprep.subr.mxu0 0.0
  %747 = vmatpush1.msra.mxu0 0.0
  %748 = vmatprep.subr.mxu0 0.0
  %749 = vmatpush1.msra.mxu0 0.0
  %750 = vmatprep.subr.mxu0 0.0
  %751 = vmatpush1.msra.mxu0 0.0
  %752 = vmatprep.mubr.f32.mxu0 0.0
  %753 = vmatmul.mubr.f32.gmra.mrb[0].mxu0 %v684
  %v754 = vpop.f32.mrb[0].mxu0
  %v755 = vadd.f32 0.0, %v754
  %v756 = vpop.f32.mrb[0].mxu0
  %757 = vmatprep.mubr.f32.mxu0 0.0
  %758 = vmatmul.mubr.f32.gmra.mrb[0].mxu0 %v686
  %v759 = vpop.f32.mrb[0].mxu0
  %v760 = vadd.f32 0.0, %v759
  %v761 = vpop.f32.mrb[0].mxu0
  %762 = vdwg.mxu0
  %v763 = vadd.f32 %v375, %v755
  %v764 = vadd.f32 %v380, %v760
  %v765 = vxor.u32 %v763, 2147483648
  %v766 = vxor.u32 %v764, 2147483648
  %v767 = vmul.f32 %v765, 1.442695
  %v768 = vpow.pop %v767
  %v769 = vmul.f32 %v766, 1.442695
  %v770 = vpow.pop %v769
  %v771 = vadd.f32 %v768, 1.0
  %v772 = vadd.f32 %v770, 1.0
  %v773 = vrcp.pop %v771
  %v774 = vmul.f32 1.0, %v773
  %v775 = vrcp.pop %v772
  %v776 = vmul.f32 1.0, %v775
  %v777 = vtanh.pop %v763
  %v778 = vtanh.pop %v764
  %v779 = vmul.f32 %v774, %v664
  %v780 = vmul.f32 %v776, %v665
  %783 = vrot.lane.b32.xlu0 %v777, 104
  %v784 = vpop.permute.xlu0 %783
  %785 = vrot.lane.b32.xlu0 %v778, 104
  %v786 = vpop.permute.xlu0 %785
  %v789 = vmul.f32 %v774, %v784
  %v790 = vmul.f32 %v776, %v786
  %793 = vrot.lane.b32.xlu0 %v789, 8
  %v794 = vpop.permute.xlu0 %793
  %795 = vrot.lane.b32.xlu0 %v790, 8
  %v796 = vpop.permute.xlu0 %795
  %v799 = vadd.f32 %v779, %v794
  %v800 = vadd.f32 %v780, %v796
  %v801 = vtanh.pop %v799
  %v802 = vtanh.pop %v800
  %805 = vrot.lane.b32.xlu0 %v801, 8
  %v806 = vpop.permute.xlu0 %805
  %807 = vrot.lane.b32.xlu0 %v802, 8
  %v808 = vpop.permute.xlu0 %807
  %v811 = vmul.f32 %v774, %v806
  %v812 = vmul.f32 %v776, %v808
  %815 = vrot.lane.b32.xlu0 %v811, 112
  %v816 = vpop.permute.xlu0 %815
  %817 = vrot.lane.b32.xlu0 %v812, 112
  %v818 = vpop.permute.xlu0 %817
  %v819 = vsel %vm414, %v816, 0
  %v821 = vsel %vm414, %v818, 0
  %823 = vmatprep.subr.mxu0 0.0
  %824 = vmatpush1.msra.mxu0 %v413
  %825 = vmatprep.subr.mxu0 0.0
  %826 = vmatpush1.msra.mxu0 0.0
  %827 = vmatprep.subr.mxu0 0.0
  %828 = vmatpush1.msra.mxu0 0.0
  %829 = vmatprep.subr.mxu0 0.0
  %830 = vmatpush1.msra.mxu0 0.0
  %831 = vmatprep.subr.mxu0 0.0
  %832 = vmatpush1.msra.mxu0 0.0
  %833 = vmatprep.subr.mxu0 0.0
  %834 = vmatpush1.msra.mxu0 0.0
  %835 = vmatprep.subr.mxu0 0.0
  %836 = vmatpush1.msra.mxu0 0.0
  %837 = vmatprep.subr.mxu0 0.0
  %838 = vmatpush1.msra.mxu0 0.0
  %839 = vmatprep.subr.mxu0 0.0
  %840 = vmatpush1.msra.mxu0 0.0
  %841 = vmatprep.subr.mxu0 0.0
  %842 = vmatpush1.msra.mxu0 0.0
  %843 = vmatprep.subr.mxu0 0.0
  %844 = vmatpush1.msra.mxu0 0.0
  %845 = vmatprep.subr.mxu0 0.0
  %846 = vmatpush1.msra.mxu0 0.0
  %847 = vmatprep.subr.mxu0 0.0
  %848 = vmatpush1.msra.mxu0 0.0
  %849 = vmatprep.subr.mxu0 0.0
  %850 = vmatpush1.msra.mxu0 0.0
  %851 = vmatprep.subr.mxu0 0.0
  %852 = vmatpush1.msra.mxu0 0.0
  %853 = vmatprep.subr.mxu0 0.0
  %854 = vmatpush1.msra.mxu0 0.0
  %855 = vmatprep.subr.mxu0 0.0
  %856 = vmatpush1.msra.mxu0 0.0
  %857 = vmatprep.subr.mxu0 0.0
  %858 = vmatpush1.msra.mxu0 0.0
  %859 = vmatprep.subr.mxu0 0.0
  %860 = vmatpush1.msra.mxu0 0.0
  %861 = vmatprep.subr.mxu0 0.0
  %862 = vmatpush1.msra.mxu0 0.0
  %863 = vmatprep.subr.mxu0 0.0
  %864 = vmatpush1.msra.mxu0 0.0
  %865 = vmatprep.subr.mxu0 0.0
  %866 = vmatpush1.msra.mxu0 0.0
  %867 = vmatprep.subr.mxu0 0.0
  %868 = vmatpush1.msra.mxu0 0.0
  %869 = vmatprep.subr.mxu0 0.0
  %870 = vmatpush1.msra.mxu0 0.0
  %871 = vmatprep.subr.mxu0 0.0
  %872 = vmatpush1.msra.mxu0 0.0
  %873 = vmatprep.subr.mxu0 0.0
  %874 = vmatpush1.msra.mxu0 0.0
  %875 = vmatprep.subr.mxu0 0.0
  %876 = vmatpush1.msra.mxu0 0.0
  %877 = vmatprep.subr.mxu0 0.0
  %878 = vmatpush1.msra.mxu0 0.0
  %879 = vmatprep.subr.mxu0 0.0
  %880 = vmatpush1.msra.mxu0 0.0
  %881 = vmatprep.subr.mxu0 0.0
  %882 = vmatpush1.msra.mxu0 0.0
  %883 = vmatprep.subr.mxu0 0.0
  %884 = vmatpush1.msra.mxu0 0.0
  %885 = vmatprep.subr.mxu0 0.0
  %886 = vmatpush1.msra.mxu0 0.0
  %887 = vmatprep.mubr.f32.mxu0 0.0
  %888 = vmatmul.mubr.f32.gmra.mrb[0].mxu0 %v819
  %v889 = vpop.f32.mrb[0].mxu0
  %v890 = vadd.f32 0.0, %v889
  %v891 = vpop.f32.mrb[0].mxu0
  %892 = vmatprep.mubr.f32.mxu0 0.0
  %893 = vmatmul.mubr.f32.gmra.mrb[0].mxu0 %v821
  %v894 = vpop.f32.mrb[0].mxu0
  %v895 = vadd.f32 0.0, %v894
  %v896 = vpop.f32.mrb[0].mxu0
  %897 = vdwg.mxu0
  %v898 = vadd.f32 %v385, %v890
  %v899 = vadd.f32 %v390, %v895
  %v900 = vxor.u32 %v898, 2147483648
  %v901 = vxor.u32 %v899, 2147483648
  %v902 = vmul.f32 %v900, 1.442695
  %v903 = vpow.pop %v902
  %v904 = vmul.f32 %v901, 1.442695
  %v905 = vpow.pop %v904
  %v906 = vadd.f32 %v903, 1.0
  %v907 = vadd.f32 %v905, 1.0
  %v908 = vrcp.pop %v906
  %v909 = vmul.f32 1.0, %v908
  %v910 = vrcp.pop %v907
  %v911 = vmul.f32 1.0, %v910
  %v912 = vtanh.pop %v898
  %v913 = vtanh.pop %v899
  %v914 = vmul.f32 %v909, %v799
  %v915 = vmul.f32 %v911, %v800
  %918 = vrot.lane.b32.xlu0 %v912, 104
  %v919 = vpop.permute.xlu0 %918
  %920 = vrot.lane.b32.xlu0 %v913, 104
  %v921 = vpop.permute.xlu0 %920
  %v924 = vmul.f32 %v909, %v919
  %v925 = vmul.f32 %v911, %v921
  %928 = vrot.lane.b32.xlu0 %v924, 8
  %v929 = vpop.permute.xlu0 %928
  %930 = vrot.lane.b32.xlu0 %v925, 8
  %v931 = vpop.permute.xlu0 %930
  %v934 = vadd.f32 %v914, %v929
  %v935 = vadd.f32 %v915, %v931
  %v936 = vtanh.pop %v934
  %v937 = vtanh.pop %v935
  %940 = vrot.lane.b32.xlu0 %v936, 8
  %v941 = vpop.permute.xlu0 %940
  %942 = vrot.lane.b32.xlu0 %v937, 8
  %v943 = vpop.permute.xlu0 %942
  %v946 = vmul.f32 %v909, %v941
  %v947 = vmul.f32 %v911, %v943
  %950 = vrot.lane.b32.xlu0 %v946, 112
  %v951 = vpop.permute.xlu0 %950
  %952 = vrot.lane.b32.xlu0 %v947, 112
  %v953 = vpop.permute.xlu0 %952
  %v954 = vsel %vm414, %v951, 0
  %v956 = vsel %vm414, %v953, 0
  %958 = vmatprep.subr.mxu0 0.0
  %959 = vmatpush1.msra.mxu0 %v413
  %960 = vmatprep.subr.mxu0 0.0
  %961 = vmatpush1.msra.mxu0 0.0
  %962 = vmatprep.subr.mxu0 0.0
  %963 = vmatpush1.msra.mxu0 0.0
  %964 = vmatprep.subr.mxu0 0.0
  %965 = vmatpush1.msra.mxu0 0.0
  %966 = vmatprep.subr.mxu0 0.0
  %967 = vmatpush1.msra.mxu0 0.0
  %968 = vmatprep.subr.mxu0 0.0
  %969 = vmatpush1.msra.mxu0 0.0
  %970 = vmatprep.subr.mxu0 0.0
  %971 = vmatpush1.msra.mxu0 0.0
  %972 = vmatprep.subr.mxu0 0.0
  %973 = vmatpush1.msra.mxu0 0.0
  %974 = vmatprep.subr.mxu0 0.0
  %975 = vmatpush1.msra.mxu0 0.0
  %976 = vmatprep.subr.mxu0 0.0
  %977 = vmatpush1.msra.mxu0 0.0
  %978 = vmatprep.subr.mxu0 0.0
  %979 = vmatpush1.msra.mxu0 0.0
  %980 = vmatprep.subr.mxu0 0.0
  %981 = vmatpush1.msra.mxu0 0.0
  %982 = vmatprep.subr.mxu0 0.0
  %983 = vmatpush1.msra.mxu0 0.0
  %984 = vmatprep.subr.mxu0 0.0
  %985 = vmatpush1.msra.mxu0 0.0
  %986 = vmatprep.subr.mxu0 0.0
  %987 = vmatpush1.msra.mxu0 0.0
  %988 = vmatprep.subr.mxu0 0.0
  %989 = vmatpush1.msra.mxu0 0.0
  %990 = vmatprep.subr.mxu0 0.0
  %991 = vmatpush1.msra.mxu0 0.0
  %992 = vmatprep.subr.mxu0 0.0
  %993 = vmatpush1.msra.mxu0 0.0
  %994 = vmatprep.subr.mxu0 0.0
  %995 = vmatpush1.msra.mxu0 0.0
  %996 = vmatprep.subr.mxu0 0.0
  %997 = vmatpush1.msra.mxu0 0.0
  %998 = vmatprep.subr.mxu0 0.0
  %999 = vmatpush1.msra.mxu0 0.0
  %1000 = vmatprep.subr.mxu0 0.0
  %1001 = vmatpush1.msra.mxu0 0.0
  %1002 = vmatprep.subr.mxu0 0.0
  %1003 = vmatpush1.msra.mxu0 0.0
  %1004 = vmatprep.subr.mxu0 0.0
  %1005 = vmatpush1.msra.mxu0 0.0
  %1006 = vmatprep.subr.mxu0 0.0
  %1007 = vmatpush1.msra.mxu0 0.0
  %1008 = vmatprep.subr.mxu0 0.0
  %1009 = vmatpush1.msra.mxu0 0.0
  %1010 = vmatprep.subr.mxu0 0.0
  %1011 = vmatpush1.msra.mxu0 0.0
  %1012 = vmatprep.subr.mxu0 0.0
  %1013 = vmatpush1.msra.mxu0 0.0
  %1014 = vmatprep.subr.mxu0 0.0
  %1015 = vmatpush1.msra.mxu0 0.0
  %1016 = vmatprep.subr.mxu0 0.0
  %1017 = vmatpush1.msra.mxu0 0.0
  %1018 = vmatprep.subr.mxu0 0.0
  %1019 = vmatpush1.msra.mxu0 0.0
  %1020 = vmatprep.subr.mxu0 0.0
  %1021 = vmatpush1.msra.mxu0 0.0
  %1022 = vmatprep.mubr.f32.mxu0 0.0
  %1023 = vmatmul.mubr.f32.gmra.mrb[0].mxu0 %v954
  %v1024 = vpop.f32.mrb[0].mxu0
  %v1025 = vadd.f32 0.0, %v1024
  %v1026 = vpop.f32.mrb[0].mxu0
  %1027 = vmatprep.mubr.f32.mxu0 0.0
  %1028 = vmatmul.mubr.f32.gmra.mrb[0].mxu0 %v956
  %v1029 = vpop.f32.mrb[0].mxu0
  %v1030 = vadd.f32 0.0, %v1029
  %v1031 = vpop.f32.mrb[0].mxu0
  %1032 = vdwg.mxu0
  %v1033 = vadd.f32 %v395, %v1025
  %v1034 = vadd.f32 %v400, %v1030
  %v1035 = vxor.u32 %v1033, 2147483648
  %v1036 = vxor.u32 %v1034, 2147483648
  %v1037 = vmul.f32 %v1035, 1.442695
  %v1038 = vpow.pop %v1037
  %v1039 = vmul.f32 %v1036, 1.442695
  %v1040 = vpow.pop %v1039
  %v1041 = vadd.f32 %v1038, 1.0
  %v1042 = vadd.f32 %v1040, 1.0
  %v1043 = vrcp.pop %v1041
  %v1044 = vmul.f32 1.0, %v1043
  %v1045 = vrcp.pop %v1042
  %v1046 = vmul.f32 1.0, %v1045
  %v1047 = vtanh.pop %v1033
  %v1048 = vtanh.pop %v1034
  %v1049 = vmul.f32 %v1044, %v934
  %v1050 = vmul.f32 %v1046, %v935
  %1053 = vrot.lane.b32.xlu0 %v1047, 104
  %v1054 = vpop.permute.xlu0 %1053
  %1055 = vrot.lane.b32.xlu0 %v1048, 104
  %v1056 = vpop.permute.xlu0 %1055
  %v1059 = vmul.f32 %v1044, %v1054
  %v1060 = vmul.f32 %v1046, %v1056
  %1063 = vrot.lane.b32.xlu0 %v1059, 8
  %v1064 = vpop.permute.xlu0 %1063
  %1065 = vrot.lane.b32.xlu0 %v1060, 8
  %v1066 = vpop.permute.xlu0 %1065
  %v1069 = vadd.f32 %v1049, %v1064
  %v1070 = vadd.f32 %v1050, %v1066
  %v1071 = vtanh.pop %v1069
  %v1072 = vtanh.pop %v1070
  %1075 = vrot.lane.b32.xlu0 %v1071, 8
  %v1076 = vpop.permute.xlu0 %1075
  %1077 = vrot.lane.b32.xlu0 %v1072, 8
  %v1078 = vpop.permute.xlu0 %1077
  %v1081 = vmul.f32 %v1044, %v1076
  %v1082 = vmul.f32 %v1046, %v1078
  %1085 = vrot.lane.b32.xlu0 %v1081, 112
  %v1086 = vpop.permute.xlu0 %1085
  %1087 = vrot.lane.b32.xlu0 %v1082, 112
  %v1088 = vpop.permute.xlu0 %1087
  %v1089 = vsel %vm414, %v1086, 0
  %v1091 = vsel %vm414, %v1088, 0
  %1093 = vmatprep.subr.mxu0 0.0
  %1094 = vmatpush1.msra.mxu0 %v413
  %1095 = vmatprep.subr.mxu0 0.0
  %1096 = vmatpush1.msra.mxu0 0.0
  %1097 = vmatprep.subr.mxu0 0.0
  %1098 = vmatpush1.msra.mxu0 0.0
  %1099 = vmatprep.subr.mxu0 0.0
  %1100 = vmatpush1.msra.mxu0 0.0
  %1101 = vmatprep.subr.mxu0 0.0
  %1102 = vmatpush1.msra.mxu0 0.0
  %1103 = vmatprep.subr.mxu0 0.0
  %1104 = vmatpush1.msra.mxu0 0.0
  %1105 = vmatprep.subr.mxu0 0.0
  %1106 = vmatpush1.msra.mxu0 0.0
  %1107 = vmatprep.subr.mxu0 0.0
  %1108 = vmatpush1.msra.mxu0 0.0
  %1109 = vmatprep.subr.mxu0 0.0
  %1110 = vmatpush1.msra.mxu0 0.0
  %1111 = vmatprep.subr.mxu0 0.0
  %1112 = vmatpush1.msra.mxu0 0.0
  %1113 = vmatprep.subr.mxu0 0.0
  %1114 = vmatpush1.msra.mxu0 0.0
  %1115 = vmatprep.subr.mxu0 0.0
  %1116 = vmatpush1.msra.mxu0 0.0
  %1117 = vmatprep.subr.mxu0 0.0
  %1118 = vmatpush1.msra.mxu0 0.0
  %1119 = vmatprep.subr.mxu0 0.0
  %1120 = vmatpush1.msra.mxu0 0.0
  %1121 = vmatprep.subr.mxu0 0.0
  %1122 = vmatpush1.msra.mxu0 0.0
  %1123 = vmatprep.subr.mxu0 0.0
  %1124 = vmatpush1.msra.mxu0 0.0
  %1125 = vmatprep.subr.mxu0 0.0
  %1126 = vmatpush1.msra.mxu0 0.0
  %1127 = vmatprep.subr.mxu0 0.0
  %1128 = vmatpush1.msra.mxu0 0.0
  %1129 = vmatprep.subr.mxu0 0.0
  %1130 = vmatpush1.msra.mxu0 0.0
  %1131 = vmatprep.subr.mxu0 0.0
  %1132 = vmatpush1.msra.mxu0 0.0
  %1133 = vmatprep.subr.mxu0 0.0
  %1134 = vmatpush1.msra.mxu0 0.0
  %1135 = vmatprep.subr.mxu0 0.0
  %1136 = vmatpush1.msra.mxu0 0.0
  %1137 = vmatprep.subr.mxu0 0.0
  %1138 = vmatpush1.msra.mxu0 0.0
  %1139 = vmatprep.subr.mxu0 0.0
  %1140 = vmatpush1.msra.mxu0 0.0
  %1141 = vmatprep.subr.mxu0 0.0
  %1142 = vmatpush1.msra.mxu0 0.0
  %1143 = vmatprep.subr.mxu0 0.0
  %1144 = vmatpush1.msra.mxu0 0.0
  %1145 = vmatprep.subr.mxu0 0.0
  %1146 = vmatpush1.msra.mxu0 0.0
  %1147 = vmatprep.subr.mxu0 0.0
  %1148 = vmatpush1.msra.mxu0 0.0
  %1149 = vmatprep.subr.mxu0 0.0
  %1150 = vmatpush1.msra.mxu0 0.0
  %1151 = vmatprep.subr.mxu0 0.0
  %1152 = vmatpush1.msra.mxu0 0.0
  %1153 = vmatprep.subr.mxu0 0.0
  %1154 = vmatpush1.msra.mxu0 0.0
  %1155 = vmatprep.subr.mxu0 0.0
  %1156 = vmatpush1.msra.mxu0 0.0
  %1157 = vmatprep.mubr.f32.mxu0 0.0
  %1158 = vmatmul.mubr.f32.gmra.mrb[0].mxu0 %v1089
  %v1159 = vpop.f32.mrb[0].mxu0
  %v1160 = vadd.f32 0.0, %v1159
  %v1161 = vpop.f32.mrb[0].mxu0
  %1162 = vmatprep.mubr.f32.mxu0 0.0
  %1163 = vmatmul.mubr.f32.gmra.mrb[0].mxu0 %v1091
  %v1164 = vpop.f32.mrb[0].mxu0
  %v1165 = vadd.f32 0.0, %v1164
  %v1166 = vpop.f32.mrb[0].mxu0
  %1167 = vdwg.mxu0
  %v1168 = vadd.f32 %v405, %v1160
  %v1169 = vadd.f32 %v410, %v1165
  %v1170 = vxor.u32 %v1168, 2147483648
  %v1171 = vxor.u32 %v1169, 2147483648
  %v1172 = vmul.f32 %v1170, 1.442695
  %v1173 = vpow.pop %v1172
  %v1174 = vmul.f32 %v1171, 1.442695
  %v1175 = vpow.pop %v1174
  %v1176 = vadd.f32 %v1173, 1.0
  %v1177 = vadd.f32 %v1175, 1.0
  %v1178 = vrcp.pop %v1176
  %v1179 = vmul.f32 1.0, %v1178
  %v1180 = vrcp.pop %v1177
  %v1181 = vmul.f32 1.0, %v1180
  %v1182 = vtanh.pop %v1168
  %v1183 = vtanh.pop %v1169
  %v1184 = vmul.f32 %v1179, %v1069
  %v1185 = vmul.f32 %v1181, %v1070
  %1188 = vrot.lane.b32.xlu0 %v1182, 104
  %v1189 = vpop.permute.xlu0 %1188
  %1190 = vrot.lane.b32.xlu0 %v1183, 104
  %v1191 = vpop.permute.xlu0 %1190
  %v1194 = vmul.f32 %v1179, %v1189
  %v1195 = vmul.f32 %v1181, %v1191
  %1198 = vrot.lane.b32.xlu0 %v1194, 8
  %v1199 = vpop.permute.xlu0 %1198
  %1200 = vrot.lane.b32.xlu0 %v1195, 8
  %v1201 = vpop.permute.xlu0 %1200
  %v1204 = vadd.f32 %v1184, %v1199
  %v1205 = vadd.f32 %v1185, %v1201
  %v1206 = vtanh.pop %v1204
  %v1207 = vtanh.pop %v1205
  %1210 = vrot.lane.b32.xlu0 %v1206, 8
  %v1211 = vpop.permute.xlu0 %1210
  %1212 = vrot.lane.b32.xlu0 %v1207, 8
  %v1213 = vpop.permute.xlu0 %1212
  %v1216 = vmul.f32 %v1179, %v1211
  %v1217 = vmul.f32 %v1181, %v1213
  %v1218 = vxor.u32 %v405, 2147483648
  %v1219 = vxor.u32 %v410, 2147483648
  %v1220 = vmul.f32 %v1218, 1.442695
  %v1221 = vpow.pop %v1220
  %v1222 = vmul.f32 %v1219, 1.442695
  %v1223 = vpow.pop %v1222
  %v1224 = vadd.f32 %v1221, 1.0
  %v1225 = vadd.f32 %v1223, 1.0
  %v1226 = vrcp.pop %v1224
  %v1227 = vmul.f32 1.0, %v1226
  %v1228 = vrcp.pop %v1225
  %v1229 = vmul.f32 1.0, %v1228
  %v1230 = vtanh.pop %v405
  %v1231 = vtanh.pop %v410
  %1234 = vrot.lane.b32.xlu0 %v1230, 104
  %v1235 = vpop.permute.xlu0 %1234
  %1236 = vrot.lane.b32.xlu0 %v1231, 104
  %v1237 = vpop.permute.xlu0 %1236
  %v1240 = vmul.f32 %v1227, %v1235
  %v1241 = vmul.f32 %v1229, %v1237
  %v1242 = vtanh.pop %v1240
  %v1243 = vtanh.pop %v1241
  %1246 = vrot.lane.b32.xlu0 %v1242, 16
  %v1247 = vpop.permute.xlu0 %1246
  %1248 = vrot.lane.b32.xlu0 %v1243, 16
  %v1249 = vpop.permute.xlu0 %1248
  %v1252 = vmul.f32 %v1227, %v1247
  %v1253 = vmul.f32 %v1229, %v1249
  %1256 = vrot.lane.b32.xlu0 %v1252, 104
  %v1257 = vpop.permute.xlu0 %1256
  %1258 = vrot.lane.b32.xlu0 %v1253, 104
  %v1259 = vpop.permute.xlu0 %1258
  %vm1262 = vcmask 130048
  %v1263 = vsel %vm1262, %v158, %v1216
  %v1264 = vsel %vm1262, %v163, %v1217
  %vm1265 = vcmask 195584
  %v1266 = vsel %vm1265, %v1263, %v1257
  %v1267 = vsel %vm1265, %v1264, %v1259
  %v1268 = vld [vmem:[%s6] sm:$0xff]
  %v1269 = vld [vmem:[%s6 + $0x8] sm:$0xff]
  %v1270 = vld [vmem:[%s6 + $0x10] sm:$0xff]
  %v1271 = vld [vmem:[%s6 + $0x18] sm:$0xff]
  %v1272 = vld [vmem:[%s6 + $0x20] sm:$0xff]
  %v1273 = vld [vmem:[%s6 + $0x28] sm:$0xff]
  %v1274 = vld [vmem:[%s6 + $0x30] sm:$0xff]
  %v1275 = vld [vmem:[%s6 + $0x38] sm:$0xff]
  %v1276 = vld [vmem:[%s7] sm:$0x3]
  %v1278 = vlaneseq
  %v1279 = vshrl.u32 %v1278, 7
  %v1280 = vsub.s32 0, %v1279
  %v1281 = vrot.slane %v1276, %v1280
  %v1282 = vlaneseq
  %v1283 = vshrl.u32 %v1282, 7
  %v1284 = vsub.s32 1, %v1283
  %v1285 = vrot.slane %v1276, %v1284
  %vm1288 = vcmask 261120
  %v1290 = vsel %vm1288, %v1266, 0
  %v1293 = vsel %vm1288, %v1267, 0
  %1295 = vmatprep.subr.mxu0 %v1269
  %1296 = vmatpush1.msra.mxu0 %v1268
  %1297 = vmatprep.subr.mxu0 %v1271
  %1298 = vmatpush1.msra.mxu0 %v1270
  %1299 = vmatprep.subr.mxu0 %v1273
  %1300 = vmatpush1.msra.mxu0 %v1272
  %1301 = vmatprep.subr.mxu0 %v1275
  %1302 = vmatpush1.msra.mxu0 %v1274
  %1303 = vmatprep.subr.mxu0 0.0
  %1304 = vmatpush1.msra.mxu0 0.0
  %1305 = vmatprep.subr.mxu0 0.0
  %1306 = vmatpush1.msra.mxu0 0.0
  %1307 = vmatprep.subr.mxu0 0.0
  %1308 = vmatpush1.msra.mxu0 0.0
  %1309 = vmatprep.subr.mxu0 0.0
  %1310 = vmatpush1.msra.mxu0 0.0
  %1311 = vmatprep.subr.mxu0 0.0
  %1312 = vmatpush1.msra.mxu0 0.0
  %1313 = vmatprep.subr.mxu0 0.0
  %1314 = vmatpush1.msra.mxu0 0.0
  %1315 = vmatprep.subr.mxu0 0.0
  %1316 = vmatpush1.msra.mxu0 0.0
  %1317 = vmatprep.subr.mxu0 0.0
  %1318 = vmatpush1.msra.mxu0 0.0
  %1319 = vmatprep.subr.mxu0 0.0
  %1320 = vmatpush1.msra.mxu0 0.0
  %1321 = vmatprep.subr.mxu0 0.0
  %1322 = vmatpush1.msra.mxu0 0.0
  %1323 = vmatprep.subr.mxu0 0.0
  %1324 = vmatpush1.msra.mxu0 0.0
  %1325 = vmatprep.subr.mxu0 0.0
  %1326 = vmatpush1.msra.mxu0 0.0
  %1327 = vmatprep.subr.mxu0 0.0
  %1328 = vmatpush1.msra.mxu0 0.0
  %1329 = vmatprep.subr.mxu0 0.0
  %1330 = vmatpush1.msra.mxu0 0.0
  %1331 = vmatprep.subr.mxu0 0.0
  %1332 = vmatpush1.msra.mxu0 0.0
  %1333 = vmatprep.subr.mxu0 0.0
  %1334 = vmatpush1.msra.mxu0 0.0
  %1335 = vmatprep.subr.mxu0 0.0
  %1336 = vmatpush1.msra.mxu0 0.0
  %1337 = vmatprep.subr.mxu0 0.0
  %1338 = vmatpush1.msra.mxu0 0.0
  %1339 = vmatprep.subr.mxu0 0.0
  %1340 = vmatpush1.msra.mxu0 0.0
  %1341 = vmatprep.subr.mxu0 0.0
  %1342 = vmatpush1.msra.mxu0 0.0
  %1343 = vmatprep.subr.mxu0 0.0
  %1344 = vmatpush1.msra.mxu0 0.0
  %1345 = vmatprep.subr.mxu0 0.0
  %1346 = vmatpush1.msra.mxu0 0.0
  %1347 = vmatprep.subr.mxu0 0.0
  %1348 = vmatpush1.msra.mxu0 0.0
  %1349 = vmatprep.subr.mxu0 0.0
  %1350 = vmatpush1.msra.mxu0 0.0
  %1351 = vmatprep.subr.mxu0 0.0
  %1352 = vmatpush1.msra.mxu0 0.0
  %1353 = vmatprep.subr.mxu0 0.0
  %1354 = vmatpush1.msra.mxu0 0.0
  %1355 = vmatprep.subr.mxu0 0.0
  %1356 = vmatpush1.msra.mxu0 0.0
  %1357 = vmatprep.subr.mxu0 0.0
  %1358 = vmatpush1.msra.mxu0 0.0
  %1359 = vmatprep.mubr.f32.mxu0 0.0
  %1360 = vmatmul.mubr.f32.gmra.mrb[0].mxu0 %v1290
  %v1361 = vpop.f32.mrb[0].mxu0
  %v1362 = vadd.f32 %v1281, %v1361
  %v1363 = vpop.f32.mrb[0].mxu0
  %v1364 = vadd.f32 %v1285, %v1363
  %1365 = vmatprep.mubr.f32.mxu0 0.0
  %1366 = vmatmul.mubr.f32.gmra.mrb[0].mxu0 %v1293
  %v1367 = vpop.f32.mrb[0].mxu0
  %v1368 = vadd.f32 %v1281, %v1367
  %v1369 = vpop.f32.mrb[0].mxu0
  %v1370 = vadd.f32 %v1285, %v1369
  %1371 = vdwg.mxu0
  %v1372 = vld [vmem:[%s8] sm:$0xff]
  %v1373 = vld [vmem:[%s8 + $0x8] sm:$0xff]
  %v1374 = vld [vmem:[%s8 + $0x10] sm:$0xff]
  %v1375 = vld [vmem:[%s8 + $0x18] sm:$0xff]
  %v1377 = vrot.slane %v1370, 6
  %v1379 = vadd.f32 %v1362, %v1377
  %v1380 = vsel %vm1288, 0.0, 0
  %1382 = vmatprep.subr.mxu0 0.0
  %1383 = vmatpush1.msra.mxu0 %v1372
  %1384 = vmatprep.subr.mxu0 0.0
  %1385 = vmatpush1.msra.mxu0 %v1373
  %1386 = vmatprep.subr.mxu0 0.0
  %1387 = vmatpush1.msra.mxu0 %v1374
  %1388 = vmatprep.subr.mxu0 0.0
  %1389 = vmatpush1.msra.mxu0 %v1375
  %1390 = vmatprep.subr.mxu0 0.0
  %1391 = vmatpush1.msra.mxu0 0.0
  %1392 = vmatprep.subr.mxu0 0.0
  %1393 = vmatpush1.msra.mxu0 0.0
  %1394 = vmatprep.subr.mxu0 0.0
  %1395 = vmatpush1.msra.mxu0 0.0
  %1396 = vmatprep.subr.mxu0 0.0
  %1397 = vmatpush1.msra.mxu0 0.0
  %1398 = vmatprep.subr.mxu0 0.0
  %1399 = vmatpush1.msra.mxu0 0.0
  %1400 = vmatprep.subr.mxu0 0.0
  %1401 = vmatpush1.msra.mxu0 0.0
  %1402 = vmatprep.subr.mxu0 0.0
  %1403 = vmatpush1.msra.mxu0 0.0
  %1404 = vmatprep.subr.mxu0 0.0
  %1405 = vmatpush1.msra.mxu0 0.0
  %1406 = vmatprep.subr.mxu0 0.0
  %1407 = vmatpush1.msra.mxu0 0.0
  %1408 = vmatprep.subr.mxu0 0.0
  %1409 = vmatpush1.msra.mxu0 0.0
  %1410 = vmatprep.subr.mxu0 0.0
  %1411 = vmatpush1.msra.mxu0 0.0
  %1412 = vmatprep.subr.mxu0 0.0
  %1413 = vmatpush1.msra.mxu0 0.0
  %1414 = vmatprep.subr.mxu0 0.0
  %1415 = vmatpush1.msra.mxu0 0.0
  %1416 = vmatprep.subr.mxu0 0.0
  %1417 = vmatpush1.msra.mxu0 0.0
  %1418 = vmatprep.subr.mxu0 0.0
  %1419 = vmatpush1.msra.mxu0 0.0
  %1420 = vmatprep.subr.mxu0 0.0
  %1421 = vmatpush1.msra.mxu0 0.0
  %1422 = vmatprep.subr.mxu0 0.0
  %1423 = vmatpush1.msra.mxu0 0.0
  %1424 = vmatprep.subr.mxu0 0.0
  %1425 = vmatpush1.msra.mxu0 0.0
  %1426 = vmatprep.subr.mxu0 0.0
  %1427 = vmatpush1.msra.mxu0 0.0
  %1428 = vmatprep.subr.mxu0 0.0
  %1429 = vmatpush1.msra.mxu0 0.0
  %1430 = vmatprep.subr.mxu0 0.0
  %1431 = vmatpush1.msra.mxu0 0.0
  %1432 = vmatprep.subr.mxu0 0.0
  %1433 = vmatpush1.msra.mxu0 0.0
  %1434 = vmatprep.subr.mxu0 0.0
  %1435 = vmatpush1.msra.mxu0 0.0
  %1436 = vmatprep.subr.mxu0 0.0
  %1437 = vmatpush1.msra.mxu0 0.0
  %1438 = vmatprep.subr.mxu0 0.0
  %1439 = vmatpush1.msra.mxu0 0.0
  %1440 = vmatprep.subr.mxu0 0.0
  %1441 = vmatpush1.msra.mxu0 0.0
  %1442 = vmatprep.subr.mxu0 0.0
  %1443 = vmatpush1.msra.mxu0 0.0
  %1444 = vmatprep.subr.mxu0 0.0
  %1445 = vmatpush1.msra.mxu0 0.0
  %1446 = vmatprep.mubr.f32.mxu0 0.0
  %1447 = vmatmul.mubr.f32.gmra.mrb[0].mxu0 %v1380
  %v1448 = vpop.f32.mrb[0].mxu0
  %v1449 = vadd.f32 0.0, %v1448
  %v1450 = vpop.f32.mrb[0].mxu0
  %1451 = vdwg.mxu0
  %v1452 = vadd.f32 %v1379, %v1449
  %v1453 = vxor.u32 %v1452, 2147483648
  %v1454 = vmul.f32 %v1453, 1.442695
  %v1455 = vpow.pop %v1454
  %v1456 = vadd.f32 %v1455, 1.0
  %v1457 = vrcp.pop %v1456
  %v1458 = vmul.f32 1.0, %v1457
  %v1459 = vtanh.pop %v1452
  %v1460 = vmul.f32 %v1458, 0.0
  %1462 = vrot.lane.b32.xlu0 %v1459, 32
  %v1463 = vpop.permute.xlu0 %1462
  %v1465 = vmul.f32 %v1458, %v1463
  %1467 = vrot.lane.b32.xlu0 %v1465, 32
  %v1468 = vpop.permute.xlu0 %1467
  %v1470 = vadd.f32 %v1460, %v1468
  %v1471 = vtanh.pop %v1470
  %1473 = vrot.lane.b32.xlu0 %v1471, 32
  %v1474 = vpop.permute.xlu0 %1473
  %v1476 = vmul.f32 %v1458, %v1474
  %v1477 = vrot.slane %v1370, 2
  %v1479 = vadd.f32 %v1362, %v1477
  %1481 = vrot.lane.b32.xlu0 %v1476, 64
  %v1482 = vpop.permute.xlu0 %1481
  %v1483 = vsel %vm1288, %v1482, 0
  %1485 = vmatprep.subr.mxu0 0.0
  %1486 = vmatpush1.msra.mxu0 %v1372
  %1487 = vmatprep.subr.mxu0 0.0
  %1488 = vmatpush1.msra.mxu0 %v1373
  %1489 = vmatprep.subr.mxu0 0.0
  %1490 = vmatpush1.msra.mxu0 %v1374
  %1491 = vmatprep.subr.mxu0 0.0
  %1492 = vmatpush1.msra.mxu0 %v1375
  %1493 = vmatprep.subr.mxu0 0.0
  %1494 = vmatpush1.msra.mxu0 0.0
  %1495 = vmatprep.subr.mxu0 0.0
  %1496 = vmatpush1.msra.mxu0 0.0
  %1497 = vmatprep.subr.mxu0 0.0
  %1498 = vmatpush1.msra.mxu0 0.0
  %1499 = vmatprep.subr.mxu0 0.0
  %1500 = vmatpush1.msra.mxu0 0.0
  %1501 = vmatprep.subr.mxu0 0.0
  %1502 = vmatpush1.msra.mxu0 0.0
  %1503 = vmatprep.subr.mxu0 0.0
  %1504 = vmatpush1.msra.mxu0 0.0
  %1505 = vmatprep.subr.mxu0 0.0
  %1506 = vmatpush1.msra.mxu0 0.0
  %1507 = vmatprep.subr.mxu0 0.0
  %1508 = vmatpush1.msra.mxu0 0.0
  %1509 = vmatprep.subr.mxu0 0.0
  %1510 = vmatpush1.msra.mxu0 0.0
  %1511 = vmatprep.subr.mxu0 0.0
  %1512 = vmatpush1.msra.mxu0 0.0
  %1513 = vmatprep.subr.mxu0 0.0
  %1514 = vmatpush1.msra.mxu0 0.0
  %1515 = vmatprep.subr.mxu0 0.0
  %1516 = vmatpush1.msra.mxu0 0.0
  %1517 = vmatprep.subr.mxu0 0.0
  %1518 = vmatpush1.msra.mxu0 0.0
  %1519 = vmatprep.subr.mxu0 0.0
  %1520 = vmatpush1.msra.mxu0 0.0
  %1521 = vmatprep.subr.mxu0 0.0
  %1522 = vmatpush1.msra.mxu0 0.0
  %1523 = vmatprep.subr.mxu0 0.0
  %1524 = vmatpush1.msra.mxu0 0.0
  %1525 = vmatprep.subr.mxu0 0.0
  %1526 = vmatpush1.msra.mxu0 0.0
  %1527 = vmatprep.subr.mxu0 0.0
  %1528 = vmatpush1.msra.mxu0 0.0
  %1529 = vmatprep.subr.mxu0 0.0
  %1530 = vmatpush1.msra.mxu0 0.0
  %1531 = vmatprep.subr.mxu0 0.0
  %1532 = vmatpush1.msra.mxu0 0.0
  %1533 = vmatprep.subr.mxu0 0.0
  %1534 = vmatpush1.msra.mxu0 0.0
  %1535 = vmatprep.subr.mxu0 0.0
  %1536 = vmatpush1.msra.mxu0 0.0
  %1537 = vmatprep.subr.mxu0 0.0
  %1538 = vmatpush1.msra.mxu0 0.0
  %1539 = vmatprep.subr.mxu0 0.0
  %1540 = vmatpush1.msra.mxu0 0.0
  %1541 = vmatprep.subr.mxu0 0.0
  %1542 = vmatpush1.msra.mxu0 0.0
  %1543 = vmatprep.subr.mxu0 0.0
  %1544 = vmatpush1.msra.mxu0 0.0
  %1545 = vmatprep.subr.mxu0 0.0
  %1546 = vmatpush1.msra.mxu0 0.0
  %1547 = vmatprep.subr.mxu0 0.0
  %1548 = vmatpush1.msra.mxu0 0.0
  %1549 = vmatprep.mubr.f32.mxu0 0.0
  %1550 = vmatmul.mubr.f32.gmra.mrb[0].mxu0 %v1483
  %v1551 = vpop.f32.mrb[0].mxu0
  %v1552 = vadd.f32 0.0, %v1551
  %v1553 = vpop.f32.mrb[0].mxu0
  %1554 = vdwg.mxu0
  %v1556 = vrot.slane %v1552, 6
  %v1558 = vadd.f32 %v1479, %v1556
  %v1559 = vxor.u32 %v1558, 2147483648
  %v1560 = vmul.f32 %v1559, 1.442695
  %v1561 = vpow.pop %v1560
  %v1562 = vadd.f32 %v1561, 1.0
  %v1563 = vrcp.pop %v1562
  %v1564 = vmul.f32 1.0, %v1563
  %v1565 = vtanh.pop %v1558
  %v1567 = vrot.slane %v1470, 6
  %v1569 = vmul.f32 %v1564, %v1567
  %1571 = vrot.lane.b32.xlu0 %v1565, 32
  %v1572 = vpop.permute.xlu0 %1571
  %v1574 = vmul.f32 %v1564, %v1572
  %1576 = vrot.lane.b32.xlu0 %v1574, 32
  %v1577 = vpop.permute.xlu0 %1576
  %v1579 = vadd.f32 %v1569, %v1577
  %v1580 = vtanh.pop %v1579
  %1582 = vrot.lane.b32.xlu0 %v1580, 32
  %v1583 = vpop.permute.xlu0 %1582
  %v1585 = vmul.f32 %v1564, %v1583
  %v1587 = vrot.slane %v1585, 2
  %1588 = vrot.lane.b32.xlu0 %v1587, 64
  %v1589 = vpop.permute.xlu0 %1588
  %v1590 = vsel %vm1288, %v1589, 0
  %1592 = vmatprep.subr.mxu0 0.0
  %1593 = vmatpush1.msra.mxu0 %v1372
  %1594 = vmatprep.subr.mxu0 0.0
  %1595 = vmatpush1.msra.mxu0 %v1373
  %1596 = vmatprep.subr.mxu0 0.0
  %1597 = vmatpush1.msra.mxu0 %v1374
  %1598 = vmatprep.subr.mxu0 0.0
  %1599 = vmatpush1.msra.mxu0 %v1375
  %1600 = vmatprep.subr.mxu0 0.0
  %1601 = vmatpush1.msra.mxu0 0.0
  %1602 = vmatprep.subr.mxu0 0.0
  %1603 = vmatpush1.msra.mxu0 0.0
  %1604 = vmatprep.subr.mxu0 0.0
  %1605 = vmatpush1.msra.mxu0 0.0
  %1606 = vmatprep.subr.mxu0 0.0
  %1607 = vmatpush1.msra.mxu0 0.0
  %1608 = vmatprep.subr.mxu0 0.0
  %1609 = vmatpush1.msra.mxu0 0.0
  %1610 = vmatprep.subr.mxu0 0.0
  %1611 = vmatpush1.msra.mxu0 0.0
  %1612 = vmatprep.subr.mxu0 0.0
  %1613 = vmatpush1.msra.mxu0 0.0
  %1614 = vmatprep.subr.mxu0 0.0
  %1615 = vmatpush1.msra.mxu0 0.0
  %1616 = vmatprep.subr.mxu0 0.0
  %1617 = vmatpush1.msra.mxu0 0.0
  %1618 = vmatprep.subr.mxu0 0.0
  %1619 = vmatpush1.msra.mxu0 0.0
  %1620 = vmatprep.subr.mxu0 0.0
  %1621 = vmatpush1.msra.mxu0 0.0
  %1622 = vmatprep.subr.mxu0 0.0
  %1623 = vmatpush1.msra.mxu0 0.0
  %1624 = vmatprep.subr.mxu0 0.0
  %1625 = vmatpush1.msra.mxu0 0.0
  %1626 = vmatprep.subr.mxu0 0.0
  %1627 = vmatpush1.msra.mxu0 0.0
  %1628 = vmatprep.subr.mxu0 0.0
  %1629 = vmatpush1.msra.mxu0 0.0
  %1630 = vmatprep.subr.mxu0 0.0
  %1631 = vmatpush1.msra.mxu0 0.0
  %1632 = vmatprep.subr.mxu0 0.0
  %1633 = vmatpush1.msra.mxu0 0.0
  %1634 = vmatprep.subr.mxu0 0.0
  %1635 = vmatpush1.msra.mxu0 0.0
  %1636 = vmatprep.subr.mxu0 0.0
  %1637 = vmatpush1.msra.mxu0 0.0
  %1638 = vmatprep.subr.mxu0 0.0
  %1639 = vmatpush1.msra.mxu0 0.0
  %1640 = vmatprep.subr.mxu0 0.0
  %1641 = vmatpush1.msra.mxu0 0.0
  %1642 = vmatprep.subr.mxu0 0.0
  %1643 = vmatpush1.msra.mxu0 0.0
  %1644 = vmatprep.subr.mxu0 0.0
  %1645 = vmatpush1.msra.mxu0 0.0
  %1646 = vmatprep.subr.mxu0 0.0
  %1647 = vmatpush1.msra.mxu0 0.0
  %1648 = vmatprep.subr.mxu0 0.0
  %1649 = vmatpush1.msra.mxu0 0.0
  %1650 = vmatprep.subr.mxu0 0.0
  %1651 = vmatpush1.msra.mxu0 0.0
  %1652 = vmatprep.subr.mxu0 0.0
  %1653 = vmatpush1.msra.mxu0 0.0
  %1654 = vmatprep.subr.mxu0 0.0
  %1655 = vmatpush1.msra.mxu0 0.0
  %1656 = vmatprep.mubr.f32.mxu0 0.0
  %1657 = vmatmul.mubr.f32.gmra.mrb[0].mxu0 %v1590
  %v1658 = vpop.f32.mrb[0].mxu0
  %v1659 = vadd.f32 0.0, %v1658
  %v1660 = vpop.f32.mrb[0].mxu0
  %1661 = vdwg.mxu0
  %v1663 = vrot.slane %v1659, 4
  %v1665 = vadd.f32 %v1379, %v1663
  %v1666 = vxor.u32 %v1665, 2147483648
  %v1667 = vmul.f32 %v1666, 1.442695
  %v1668 = vpow.pop %v1667
  %v1669 = vadd.f32 %v1668, 1.0
  %v1670 = vrcp.pop %v1669
  %v1671 = vmul.f32 1.0, %v1670
  %v1672 = vtanh.pop %v1665
  %v1674 = vrot.slane %v1579, 6
  %v1676 = vmul.f32 %v1671, %v1674
  %1678 = vrot.lane.b32.xlu0 %v1672, 32
  %v1679 = vpop.permute.xlu0 %1678
  %v1681 = vmul.f32 %v1671, %v1679
  %1683 = vrot.lane.b32.xlu0 %v1681, 32
  %v1684 = vpop.permute.xlu0 %1683
  %v1686 = vadd.f32 %v1676, %v1684
  %v1687 = vtanh.pop %v1686
  %1689 = vrot.lane.b32.xlu0 %v1687, 32
  %v1690 = vpop.permute.xlu0 %1689
  %v1692 = vmul.f32 %v1671, %v1690
  %v1694 = vrot.slane %v1692, 4
  %1695 = vrot.lane.b32.xlu0 %v1694, 64
  %v1696 = vpop.permute.xlu0 %1695
  %v1697 = vsel %vm1288, %v1696, 0
  %1699 = vmatprep.subr.mxu0 0.0
  %1700 = vmatpush1.msra.mxu0 %v1372
  %1701 = vmatprep.subr.mxu0 0.0
  %1702 = vmatpush1.msra.mxu0 %v1373
  %1703 = vmatprep.subr.mxu0 0.0
  %1704 = vmatpush1.msra.mxu0 %v1374
  %1705 = vmatprep.subr.mxu0 0.0
  %1706 = vmatpush1.msra.mxu0 %v1375
  %1707 = vmatprep.subr.mxu0 0.0
  %1708 = vmatpush1.msra.mxu0 0.0
  %1709 = vmatprep.subr.mxu0 0.0
  %1710 = vmatpush1.msra.mxu0 0.0
  %1711 = vmatprep.subr.mxu0 0.0
  %1712 = vmatpush1.msra.mxu0 0.0
  %1713 = vmatprep.subr.mxu0 0.0
  %1714 = vmatpush1.msra.mxu0 0.0
  %1715 = vmatprep.subr.mxu0 0.0
  %1716 = vmatpush1.msra.mxu0 0.0
  %1717 = vmatprep.subr.mxu0 0.0
  %1718 = vmatpush1.msra.mxu0 0.0
  %1719 = vmatprep.subr.mxu0 0.0
  %1720 = vmatpush1.msra.mxu0 0.0
  %1721 = vmatprep.subr.mxu0 0.0
  %1722 = vmatpush1.msra.mxu0 0.0
  %1723 = vmatprep.subr.mxu0 0.0
  %1724 = vmatpush1.msra.mxu0 0.0
  %1725 = vmatprep.subr.mxu0 0.0
  %1726 = vmatpush1.msra.mxu0 0.0
  %1727 = vmatprep.subr.mxu0 0.0
  %1728 = vmatpush1.msra.mxu0 0.0
  %1729 = vmatprep.subr.mxu0 0.0
  %1730 = vmatpush1.msra.mxu0 0.0
  %1731 = vmatprep.subr.mxu0 0.0
  %1732 = vmatpush1.msra.mxu0 0.0
  %1733 = vmatprep.subr.mxu0 0.0
  %1734 = vmatpush1.msra.mxu0 0.0
  %1735 = vmatprep.subr.mxu0 0.0
  %1736 = vmatpush1.msra.mxu0 0.0
  %1737 = vmatprep.subr.mxu0 0.0
  %1738 = vmatpush1.msra.mxu0 0.0
  %1739 = vmatprep.subr.mxu0 0.0
  %1740 = vmatpush1.msra.mxu0 0.0
  %1741 = vmatprep.subr.mxu0 0.0
  %1742 = vmatpush1.msra.mxu0 0.0
  %1743 = vmatprep.subr.mxu0 0.0
  %1744 = vmatpush1.msra.mxu0 0.0
  %1745 = vmatprep.subr.mxu0 0.0
  %1746 = vmatpush1.msra.mxu0 0.0
  %1747 = vmatprep.subr.mxu0 0.0
  %1748 = vmatpush1.msra.mxu0 0.0
  %1749 = vmatprep.subr.mxu0 0.0
  %1750 = vmatpush1.msra.mxu0 0.0
  %1751 = vmatprep.subr.mxu0 0.0
  %1752 = vmatpush1.msra.mxu0 0.0
  %1753 = vmatprep.subr.mxu0 0.0
  %1754 = vmatpush1.msra.mxu0 0.0
  %1755 = vmatprep.subr.mxu0 0.0
  %1756 = vmatpush1.msra.mxu0 0.0
  %1757 = vmatprep.subr.mxu0 0.0
  %1758 = vmatpush1.msra.mxu0 0.0
  %1759 = vmatprep.subr.mxu0 0.0
  %1760 = vmatpush1.msra.mxu0 0.0
  %1761 = vmatprep.subr.mxu0 0.0
  %1762 = vmatpush1.msra.mxu0 0.0
  %1763 = vmatprep.mubr.f32.mxu0 0.0
  %1764 = vmatmul.mubr.f32.gmra.mrb[0].mxu0 %v1697
  %v1765 = vpop.f32.mrb[0].mxu0
  %v1766 = vadd.f32 0.0, %v1765
  %v1767 = vpop.f32.mrb[0].mxu0
  %1768 = vdwg.mxu0
  %v1770 = vrot.slane %v1766, 2
  %v1772 = vadd.f32 %v1479, %v1770
  %v1773 = vxor.u32 %v1772, 2147483648
  %v1774 = vmul.f32 %v1773, 1.442695
  %v1775 = vpow.pop %v1774
  %v1776 = vadd.f32 %v1775, 1.0
  %v1777 = vrcp.pop %v1776
  %v1778 = vmul.f32 1.0, %v1777
  %v1779 = vtanh.pop %v1772
  %v1781 = vrot.slane %v1686, 6
  %v1783 = vmul.f32 %v1778, %v1781
  %1785 = vrot.lane.b32.xlu0 %v1779, 32
  %v1786 = vpop.permute.xlu0 %1785
  %v1788 = vmul.f32 %v1778, %v1786
  %1790 = vrot.lane.b32.xlu0 %v1788, 32
  %v1791 = vpop.permute.xlu0 %1790
  %v1793 = vadd.f32 %v1783, %v1791
  %v1794 = vtanh.pop %v1793
  %1796 = vrot.lane.b32.xlu0 %v1794, 32
  %v1797 = vpop.permute.xlu0 %1796
  %v1799 = vmul.f32 %v1778, %v1797
  %v1801 = vrot.slane %v1364, 6
  %v1803 = vadd.f32 %v1368, %v1801
  %v1805 = vrot.slane %v1799, 6
  %1806 = vrot.lane.b32.xlu0 %v1805, 64
  %v1807 = vpop.permute.xlu0 %1806
  %v1808 = vsel %vm1288, %v1807, 0
  %1810 = vmatprep.subr.mxu0 0.0
  %1811 = vmatpush1.msra.mxu0 %v1372
  %1812 = vmatprep.subr.mxu0 0.0
  %1813 = vmatpush1.msra.mxu0 %v1373
  %1814 = vmatprep.subr.mxu0 0.0
  %1815 = vmatpush1.msra.mxu0 %v1374
  %1816 = vmatprep.subr.mxu0 0.0
  %1817 = vmatpush1.msra.mxu0 %v1375
  %1818 = vmatprep.subr.mxu0 0.0
  %1819 = vmatpush1.msra.mxu0 0.0
  %1820 = vmatprep.subr.mxu0 0.0
  %1821 = vmatpush1.msra.mxu0 0.0
  %1822 = vmatprep.subr.mxu0 0.0
  %1823 = vmatpush1.msra.mxu0 0.0
  %1824 = vmatprep.subr.mxu0 0.0
  %1825 = vmatpush1.msra.mxu0 0.0
  %1826 = vmatprep.subr.mxu0 0.0
  %1827 = vmatpush1.msra.mxu0 0.0
  %1828 = vmatprep.subr.mxu0 0.0
  %1829 = vmatpush1.msra.mxu0 0.0
  %1830 = vmatprep.subr.mxu0 0.0
  %1831 = vmatpush1.msra.mxu0 0.0
  %1832 = vmatprep.subr.mxu0 0.0
  %1833 = vmatpush1.msra.mxu0 0.0
  %1834 = vmatprep.subr.mxu0 0.0
  %1835 = vmatpush1.msra.mxu0 0.0
  %1836 = vmatprep.subr.mxu0 0.0
  %1837 = vmatpush1.msra.mxu0 0.0
  %1838 = vmatprep.subr.mxu0 0.0
  %1839 = vmatpush1.msra.mxu0 0.0
  %1840 = vmatprep.subr.mxu0 0.0
  %1841 = vmatpush1.msra.mxu0 0.0
  %1842 = vmatprep.subr.mxu0 0.0
  %1843 = vmatpush1.msra.mxu0 0.0
  %1844 = vmatprep.subr.mxu0 0.0
  %1845 = vmatpush1.msra.mxu0 0.0
  %1846 = vmatprep.subr.mxu0 0.0
  %1847 = vmatpush1.msra.mxu0 0.0
  %1848 = vmatprep.subr.mxu0 0.0
  %1849 = vmatpush1.msra.mxu0 0.0
  %1850 = vmatprep.subr.mxu0 0.0
  %1851 = vmatpush1.msra.mxu0 0.0
  %1852 = vmatprep.subr.mxu0 0.0
  %1853 = vmatpush1.msra.mxu0 0.0
  %1854 = vmatprep.subr.mxu0 0.0
  %1855 = vmatpush1.msra.mxu0 0.0
  %1856 = vmatprep.subr.mxu0 0.0
  %1857 = vmatpush1.msra.mxu0 0.0
  %1858 = vmatprep.subr.mxu0 0.0
  %1859 = vmatpush1.msra.mxu0 0.0
  %1860 = vmatprep.subr.mxu0 0.0
  %1861 = vmatpush1.msra.mxu0 0.0
  %1862 = vmatprep.subr.mxu0 0.0
  %1863 = vmatpush1.msra.mxu0 0.0
  %1864 = vmatprep.subr.mxu0 0.0
  %1865 = vmatpush1.msra.mxu0 0.0
  %1866 = vmatprep.subr.mxu0 0.0
  %1867 = vmatpush1.msra.mxu0 0.0
  %1868 = vmatprep.subr.mxu0 0.0
  %1869 = vmatpush1.msra.mxu0 0.0
  %1870 = vmatprep.subr.mxu0 0.0
  %1871 = vmatpush1.msra.mxu0 0.0
  %1872 = vmatprep.subr.mxu0 0.0
  %1873 = vmatpush1.msra.mxu0 0.0
  %1874 = vmatprep.mubr.f32.mxu0 0.0
  %1875 = vmatmul.mubr.f32.gmra.mrb[0].mxu0 %v1808
  %v1876 = vpop.f32.mrb[0].mxu0
  %v1877 = vadd.f32 0.0, %v1876
  %v1878 = vpop.f32.mrb[0].mxu0
  %1879 = vdwg.mxu0
  %v1880 = vadd.f32 %v1803, %v1877
  %v1881 = vxor.u32 %v1880, 2147483648
  %v1882 = vmul.f32 %v1881, 1.442695
  %v1883 = vpow.pop %v1882
  %v1884 = vadd.f32 %v1883, 1.0
  %v1885 = vrcp.pop %v1884
  %v1886 = vmul.f32 1.0, %v1885
  %v1887 = vtanh.pop %v1880
  %v1889 = vrot.slane %v1793, 6
  %v1891 = vmul.f32 %v1886, %v1889
  %1893 = vrot.lane.b32.xlu0 %v1887, 32
  %v1894 = vpop.permute.xlu0 %1893
  %v1896 = vmul.f32 %v1886, %v1894
  %1898 = vrot.lane.b32.xlu0 %v1896, 32
  %v1899 = vpop.permute.xlu0 %1898
  %v1901 = vadd.f32 %v1891, %v1899
  %v1902 = vtanh.pop %v1901
  %1904 = vrot.lane.b32.xlu0 %v1902, 32
  %v1905 = vpop.permute.xlu0 %1904
  %v1907 = vmul.f32 %v1886, %v1905
  %v1908 = vrot.slane %v1364, 2
  %v1910 = vadd.f32 %v1368, %v1908
  %1912 = vrot.lane.b32.xlu0 %v1907, 64
  %v1913 = vpop.permute.xlu0 %1912
  %v1914 = vsel %vm1288, %v1913, 0
  %1916 = vmatprep.subr.mxu0 0.0
  %1917 = vmatpush1.msra.mxu0 %v1372
  %1918 = vmatprep.subr.mxu0 0.0
  %1919 = vmatpush1.msra.mxu0 %v1373
  %1920 = vmatprep.subr.mxu0 0.0
  %1921 = vmatpush1.msra.mxu0 %v1374
  %1922 = vmatprep.subr.mxu0 0.0
  %1923 = vmatpush1.msra.mxu0 %v1375
  %1924 = vmatprep.subr.mxu0 0.0
  %1925 = vmatpush1.msra.mxu0 0.0
  %1926 = vmatprep.subr.mxu0 0.0
  %1927 = vmatpush1.msra.mxu0 0.0
  %1928 = vmatprep.subr.mxu0 0.0
  %1929 = vmatpush1.msra.mxu0 0.0
  %1930 = vmatprep.subr.mxu0 0.0
  %1931 = vmatpush1.msra.mxu0 0.0
  %1932 = vmatprep.subr.mxu0 0.0
  %1933 = vmatpush1.msra.mxu0 0.0
  %1934 = vmatprep.subr.mxu0 0.0
  %1935 = vmatpush1.msra.mxu0 0.0
  %1936 = vmatprep.subr.mxu0 0.0
  %1937 = vmatpush1.msra.mxu0 0.0
  %1938 = vmatprep.subr.mxu0 0.0
  %1939 = vmatpush1.msra.mxu0 0.0
  %1940 = vmatprep.subr.mxu0 0.0
  %1941 = vmatpush1.msra.mxu0 0.0
  %1942 = vmatprep.subr.mxu0 0.0
  %1943 = vmatpush1.msra.mxu0 0.0
  %1944 = vmatprep.subr.mxu0 0.0
  %1945 = vmatpush1.msra.mxu0 0.0
  %1946 = vmatprep.subr.mxu0 0.0
  %1947 = vmatpush1.msra.mxu0 0.0
  %1948 = vmatprep.subr.mxu0 0.0
  %1949 = vmatpush1.msra.mxu0 0.0
  %1950 = vmatprep.subr.mxu0 0.0
  %1951 = vmatpush1.msra.mxu0 0.0
  %1952 = vmatprep.subr.mxu0 0.0
  %1953 = vmatpush1.msra.mxu0 0.0
  %1954 = vmatprep.subr.mxu0 0.0
  %1955 = vmatpush1.msra.mxu0 0.0
  %1956 = vmatprep.subr.mxu0 0.0
  %1957 = vmatpush1.msra.mxu0 0.0
  %1958 = vmatprep.subr.mxu0 0.0
  %1959 = vmatpush1.msra.mxu0 0.0
  %1960 = vmatprep.subr.mxu0 0.0
  %1961 = vmatpush1.msra.mxu0 0.0
  %1962 = vmatprep.subr.mxu0 0.0
  %1963 = vmatpush1.msra.mxu0 0.0
  %1964 = vmatprep.subr.mxu0 0.0
  %1965 = vmatpush1.msra.mxu0 0.0
  %1966 = vmatprep.subr.mxu0 0.0
  %1967 = vmatpush1.msra.mxu0 0.0
  %1968 = vmatprep.subr.mxu0 0.0
  %1969 = vmatpush1.msra.mxu0 0.0
  %1970 = vmatprep.subr.mxu0 0.0
  %1971 = vmatpush1.msra.mxu0 0.0
  %1972 = vmatprep.subr.mxu0 0.0
  %1973 = vmatpush1.msra.mxu0 0.0
  %1974 = vmatprep.subr.mxu0 0.0
  %1975 = vmatpush1.msra.mxu0 0.0
  %1976 = vmatprep.subr.mxu0 0.0
  %1977 = vmatpush1.msra.mxu0 0.0
  %1978 = vmatprep.subr.mxu0 0.0
  %1979 = vmatpush1.msra.mxu0 0.0
  %1980 = vmatprep.mubr.f32.mxu0 0.0
  %1981 = vmatmul.mubr.f32.gmra.mrb[0].mxu0 %v1914
  %v1982 = vpop.f32.mrb[0].mxu0
  %v1983 = vadd.f32 0.0, %v1982
  %v1984 = vpop.f32.mrb[0].mxu0
  %1985 = vdwg.mxu0
  %v1987 = vrot.slane %v1983, 6
  %v1989 = vadd.f32 %v1910, %v1987
  %v1990 = vxor.u32 %v1989, 2147483648
  %v1991 = vmul.f32 %v1990, 1.442695
  %v1992 = vpow.pop %v1991
  %v1993 = vadd.f32 %v1992, 1.0
  %v1994 = vrcp.pop %v1993
  %v1995 = vmul.f32 1.0, %v1994
  %v1996 = vtanh.pop %v1989
  %v1998 = vrot.slane %v1901, 6
  %v2000 = vmul.f32 %v1995, %v1998
  %2002 = vrot.lane.b32.xlu0 %v1996, 32
  %v2003 = vpop.permute.xlu0 %2002
  %v2005 = vmul.f32 %v1995, %v2003
  %2007 = vrot.lane.b32.xlu0 %v2005, 32
  %v2008 = vpop.permute.xlu0 %2007
  %v2010 = vadd.f32 %v2000, %v2008
  %v2011 = vtanh.pop %v2010
  %2013 = vrot.lane.b32.xlu0 %v2011, 32
  %v2014 = vpop.permute.xlu0 %2013
  %v2016 = vmul.f32 %v1995, %v2014
  %v2018 = vrot.slane %v2016, 2
  %2019 = vrot.lane.b32.xlu0 %v2018, 64
  %v2020 = vpop.permute.xlu0 %2019
  %v2021 = vsel %vm1288, %v2020, 0
  %2023 = vmatprep.subr.mxu0 0.0
  %2024 = vmatpush1.msra.mxu0 %v1372
  %2025 = vmatprep.subr.mxu0 0.0
  %2026 = vmatpush1.msra.mxu0 %v1373
  %2027 = vmatprep.subr.mxu0 0.0
  %2028 = vmatpush1.msra.mxu0 %v1374
  %2029 = vmatprep.subr.mxu0 0.0
  %2030 = vmatpush1.msra.mxu0 %v1375
  %2031 = vmatprep.subr.mxu0 0.0
  %2032 = vmatpush1.msra.mxu0 0.0
  %2033 = vmatprep.subr.mxu0 0.0
  %2034 = vmatpush1.msra.mxu0 0.0
  %2035 = vmatprep.subr.mxu0 0.0
  %2036 = vmatpush1.msra.mxu0 0.0
  %2037 = vmatprep.subr.mxu0 0.0
  %2038 = vmatpush1.msra.mxu0 0.0
  %2039 = vmatprep.subr.mxu0 0.0
  %2040 = vmatpush1.msra.mxu0 0.0
  %2041 = vmatprep.subr.mxu0 0.0
  %2042 = vmatpush1.msra.mxu0 0.0
  %2043 = vmatprep.subr.mxu0 0.0
  %2044 = vmatpush1.msra.mxu0 0.0
  %2045 = vmatprep.subr.mxu0 0.0
  %2046 = vmatpush1.msra.mxu0 0.0
  %2047 = vmatprep.subr.mxu0 0.0
  %2048 = vmatpush1.msra.mxu0 0.0
  %2049 = vmatprep.subr.mxu0 0.0
  %2050 = vmatpush1.msra.mxu0 0.0
  %2051 = vmatprep.subr.mxu0 0.0
  %2052 = vmatpush1.msra.mxu0 0.0
  %2053 = vmatprep.subr.mxu0 0.0
  %2054 = vmatpush1.msra.mxu0 0.0
  %2055 = vmatprep.subr.mxu0 0.0
  %2056 = vmatpush1.msra.mxu0 0.0
  %2057 = vmatprep.subr.mxu0 0.0
  %2058 = vmatpush1.msra.mxu0 0.0
  %2059 = vmatprep.subr.mxu0 0.0
  %2060 = vmatpush1.msra.mxu0 0.0
  %2061 = vmatprep.subr.mxu0 0.0
  %2062 = vmatpush1.msra.mxu0 0.0
  %2063 = vmatprep.subr.mxu0 0.0
  %2064 = vmatpush1.msra.mxu0 0.0
  %2065 = vmatprep.subr.mxu0 0.0
  %2066 = vmatpush1.msra.mxu0 0.0
  %2067 = vmatprep.subr.mxu0 0.0
  %2068 = vmatpush1.msra.mxu0 0.0
  %2069 = vmatprep.subr.mxu0 0.0
  %2070 = vmatpush1.msra.mxu0 0.0
  %2071 = vmatprep.subr.mxu0 0.0
  %2072 = vmatpush1.msra.mxu0 0.0
  %2073 = vmatprep.subr.mxu0 0.0
  %2074 = vmatpush1.msra.mxu0 0.0
  %2075 = vmatprep.subr.mxu0 0.0
  %2076 = vmatpush1.msra.mxu0 0.0
  %2077 = vmatprep.subr.mxu0 0.0
  %2078 = vmatpush1.msra.mxu0 0.0
  %2079 = vmatprep.subr.mxu0 0.0
  %2080 = vmatpush1.msra.mxu0 0.0
  %2081 = vmatprep.subr.mxu0 0.0
  %2082 = vmatpush1.msra.mxu0 0.0
  %2083 = vmatprep.subr.mxu0 0.0
  %2084 = vmatpush1.msra.mxu0 0.0
  %2085 = vmatprep.subr.mxu0 0.0
  %2086 = vmatpush1.msra.mxu0 0.0
  %2087 = vmatprep.mubr.f32.mxu0 0.0
  %2088 = vmatmul.mubr.f32.gmra.mrb[0].mxu0 %v2021
  %v2089 = vpop.f32.mrb[0].mxu0
  %v2090 = vadd.f32 0.0, %v2089
  %v2091 = vpop.f32.mrb[0].mxu0
  %2092 = vdwg.mxu0
  %v2094 = vrot.slane %v2090, 4
  %v2096 = vadd.f32 %v1803, %v2094
  %v2097 = vxor.u32 %v2096, 2147483648
  %v2098 = vmul.f32 %v2097, 1.442695
  %v2099 = vpow.pop %v2098
  %v2100 = vadd.f32 %v2099, 1.0
  %v2101 = vrcp.pop %v2100
  %v2102 = vmul.f32 1.0, %v2101
  %v2103 = vtanh.pop %v2096
  %v2105 = vrot.slane %v2010, 6
  %v2107 = vmul.f32 %v2102, %v2105
  %2109 = vrot.lane.b32.xlu0 %v2103, 32
  %v2110 = vpop.permute.xlu0 %2109
  %v2112 = vmul.f32 %v2102, %v2110
  %2114 = vrot.lane.b32.xlu0 %v2112, 32
  %v2115 = vpop.permute.xlu0 %2114
  %v2117 = vadd.f32 %v2107, %v2115
  %v2118 = vtanh.pop %v2117
  %2120 = vrot.lane.b32.xlu0 %v2118, 32
  %v2121 = vpop.permute.xlu0 %2120
  %v2123 = vmul.f32 %v2102, %v2121
  %v2125 = vrot.slane %v2123, 4
  %2126 = vrot.lane.b32.xlu0 %v2125, 64
  %v2127 = vpop.permute.xlu0 %2126
  %v2128 = vsel %vm1288, %v2127, 0
  %2130 = vmatprep.subr.mxu0 0.0
  %2131 = vmatpush1.msra.mxu0 %v1372
  %2132 = vmatprep.subr.mxu0 0.0
  %2133 = vmatpush1.msra.mxu0 %v1373
  %2134 = vmatprep.subr.mxu0 0.0
  %2135 = vmatpush1.msra.mxu0 %v1374
  %2136 = vmatprep.subr.mxu0 0.0
  %2137 = vmatpush1.msra.mxu0 %v1375
  %2138 = vmatprep.subr.mxu0 0.0
  %2139 = vmatpush1.msra.mxu0 0.0
  %2140 = vmatprep.subr.mxu0 0.0
  %2141 = vmatpush1.msra.mxu0 0.0
  %2142 = vmatprep.subr.mxu0 0.0
  %2143 = vmatpush1.msra.mxu0 0.0
  %2144 = vmatprep.subr.mxu0 0.0
  %2145 = vmatpush1.msra.mxu0 0.0
  %2146 = vmatprep.subr.mxu0 0.0
  %2147 = vmatpush1.msra.mxu0 0.0
  %2148 = vmatprep.subr.mxu0 0.0
  %2149 = vmatpush1.msra.mxu0 0.0
  %2150 = vmatprep.subr.mxu0 0.0
  %2151 = vmatpush1.msra.mxu0 0.0
  %2152 = vmatprep.subr.mxu0 0.0
  %2153 = vmatpush1.msra.mxu0 0.0
  %2154 = vmatprep.subr.mxu0 0.0
  %2155 = vmatpush1.msra.mxu0 0.0
  %2156 = vmatprep.subr.mxu0 0.0
  %2157 = vmatpush1.msra.mxu0 0.0
  %2158 = vmatprep.subr.mxu0 0.0
  %2159 = vmatpush1.msra.mxu0 0.0
  %2160 = vmatprep.subr.mxu0 0.0
  %2161 = vmatpush1.msra.mxu0 0.0
  %2162 = vmatprep.subr.mxu0 0.0
  %2163 = vmatpush1.msra.mxu0 0.0
  %2164 = vmatprep.subr.mxu0 0.0
  %2165 = vmatpush1.msra.mxu0 0.0
  %2166 = vmatprep.subr.mxu0 0.0
  %2167 = vmatpush1.msra.mxu0 0.0
  %2168 = vmatprep.subr.mxu0 0.0
  %2169 = vmatpush1.msra.mxu0 0.0
  %2170 = vmatprep.subr.mxu0 0.0
  %2171 = vmatpush1.msra.mxu0 0.0
  %2172 = vmatprep.subr.mxu0 0.0
  %2173 = vmatpush1.msra.mxu0 0.0
  %2174 = vmatprep.subr.mxu0 0.0
  %2175 = vmatpush1.msra.mxu0 0.0
  %2176 = vmatprep.subr.mxu0 0.0
  %2177 = vmatpush1.msra.mxu0 0.0
  %2178 = vmatprep.subr.mxu0 0.0
  %2179 = vmatpush1.msra.mxu0 0.0
  %2180 = vmatprep.subr.mxu0 0.0
  %2181 = vmatpush1.msra.mxu0 0.0
  %2182 = vmatprep.subr.mxu0 0.0
  %2183 = vmatpush1.msra.mxu0 0.0
  %2184 = vmatprep.subr.mxu0 0.0
  %2185 = vmatpush1.msra.mxu0 0.0
  %2186 = vmatprep.subr.mxu0 0.0
  %2187 = vmatpush1.msra.mxu0 0.0
  %2188 = vmatprep.subr.mxu0 0.0
  %2189 = vmatpush1.msra.mxu0 0.0
  %2190 = vmatprep.subr.mxu0 0.0
  %2191 = vmatpush1.msra.mxu0 0.0
  %2192 = vmatprep.subr.mxu0 0.0
  %2193 = vmatpush1.msra.mxu0 0.0
  %2194 = vmatprep.mubr.f32.mxu0 0.0
  %2195 = vmatmul.mubr.f32.gmra.mrb[0].mxu0 %v2128
  %v2196 = vpop.f32.mrb[0].mxu0
  %v2197 = vadd.f32 0.0, %v2196
  %v2198 = vpop.f32.mrb[0].mxu0
  %2199 = vdwg.mxu0
  %v2201 = vrot.slane %v2197, 2
  %v2203 = vadd.f32 %v1910, %v2201
  %v2204 = vxor.u32 %v2203, 2147483648
  %v2205 = vmul.f32 %v2204, 1.442695
  %v2206 = vpow.pop %v2205
  %v2207 = vadd.f32 %v2206, 1.0
  %v2208 = vrcp.pop %v2207
  %v2209 = vmul.f32 1.0, %v2208
  %v2210 = vtanh.pop %v2203
  %v2212 = vrot.slane %v2117, 6
  %v2214 = vmul.f32 %v2209, %v2212
  %2216 = vrot.lane.b32.xlu0 %v2210, 32
  %v2217 = vpop.permute.xlu0 %2216
  %v2219 = vmul.f32 %v2209, %v2217
  %2221 = vrot.lane.b32.xlu0 %v2219, 32
  %v2222 = vpop.permute.xlu0 %2221
  %v2224 = vadd.f32 %v2214, %v2222
  %v2225 = vtanh.pop %v2224
  %2227 = vrot.lane.b32.xlu0 %v2225, 32
  %v2228 = vpop.permute.xlu0 %2227
  %v2230 = vmul.f32 %v2209, %v2228
  %v2231 = vsel %vm87, %v1476, %v1585
  %vm2232 = vcmask 1043456
  %v2233 = vsel %vm2232, %v2231, %v1692
  %vm2234 = vcmask 1045504
  %v2235 = vsel %vm2234, %v2233, %v1799
  %v2236 = vsel %vm87, %v1907, %v2016
  %v2237 = vsel %vm2232, %v2236, %v2123
  %v2238 = vsel %vm2234, %v2237, %v2230
  %v2240 = vrot.slane %v2230, 6
  %v2242 = vrot.slane %v2123, 2
  %v2244 = vrot.slane %v2016, 6
  %v2246 = vrot.slane %v1907, 2
  %v2249 = vrot.slane %v1692, 2
  %v2251 = vrot.slane %v1585, 6
  %v2253 = vrot.slane %v1476, 2
  %v2255 = vsel %vm87, %v2240, %v2242
  %v2256 = vsel %vm2232, %v2255, %v2244
  %v2257 = vsel %vm2234, %v2256, %v2246
  %v2258 = vsel %vm87, %v1805, %v2249
  %v2259 = vsel %vm2232, %v2258, %v2251
  %v2260 = vsel %vm2234, %v2259, %v2253
  %v2261 = vld [vmem:[%s9] sm:$0xff]
  %v2262 = vld [vmem:[%s9 + $0x8] sm:$0xff]
  %v2263 = vld [vmem:[%s9 + $0x10] sm:$0xff]
  %v2264 = vld [vmem:[%s9 + $0x18] sm:$0xff]
  %v2265 = vld [vmem:[%s9 + $0x20] sm:$0xff]
  %v2266 = vld [vmem:[%s9 + $0x28] sm:$0xff]
  %v2267 = vld [vmem:[%s9 + $0x30] sm:$0xff]
  %v2268 = vld [vmem:[%s9 + $0x38] sm:$0xff]
  %2271 = vrot.lane.b32.xlu0 %v2257, 48
  %v2272 = vpop.permute.xlu0 %2271
  %2273 = vrot.lane.b32.xlu0 %v2260, 48
  %v2274 = vpop.permute.xlu0 %2273
  %v2275 = vsel %vm1262, %v2272, 0
  %v2277 = vsel %vm1262, %v2274, 0
  %2279 = vmatprep.subr.mxu0 %v2266
  %2280 = vmatpush1.msra.mxu0 %v2265
  %2281 = vmatprep.subr.mxu0 %v2268
  %2282 = vmatpush1.msra.mxu0 %v2267
  %2283 = vmatprep.subr.mxu0 0.0
  %2284 = vmatpush1.msra.mxu0 0.0
  %2285 = vmatprep.subr.mxu0 0.0
  %2286 = vmatpush1.msra.mxu0 0.0
  %2287 = vmatprep.subr.mxu0 0.0
  %2288 = vmatpush1.msra.mxu0 0.0
  %2289 = vmatprep.subr.mxu0 0.0
  %2290 = vmatpush1.msra.mxu0 0.0
  %2291 = vmatprep.subr.mxu0 0.0
  %2292 = vmatpush1.msra.mxu0 0.0
  %2293 = vmatprep.subr.mxu0 0.0
  %2294 = vmatpush1.msra.mxu0 0.0
  %2295 = vmatprep.subr.mxu0 0.0
  %2296 = vmatpush1.msra.mxu0 0.0
  %2297 = vmatprep.subr.mxu0 0.0
  %2298 = vmatpush1.msra.mxu0 0.0
  %2299 = vmatprep.subr.mxu0 0.0
  %2300 = vmatpush1.msra.mxu0 0.0
  %2301 = vmatprep.subr.mxu0 0.0
  %2302 = vmatpush1.msra.mxu0 0.0
  %2303 = vmatprep.subr.mxu0 0.0
  %2304 = vmatpush1.msra.mxu0 0.0
  %2305 = vmatprep.subr.mxu0 0.0
  %2306 = vmatpush1.msra.mxu0 0.0
  %2307 = vmatprep.subr.mxu0 0.0
  %2308 = vmatpush1.msra.mxu0 0.0
  %2309 = vmatprep.subr.mxu0 0.0
  %2310 = vmatpush1.msra.mxu0 0.0
  %2311 = vmatprep.subr.mxu0 0.0
  %2312 = vmatpush1.msra.mxu0 0.0
  %2313 = vmatprep.subr.mxu0 0.0
  %2314 = vmatpush1.msra.mxu0 0.0
  %2315 = vmatprep.subr.mxu0 0.0
  %2316 = vmatpush1.msra.mxu0 0.0
  %2317 = vmatprep.subr.mxu0 0.0
  %2318 = vmatpush1.msra.mxu0 0.0
  %2319 = vmatprep.subr.mxu0 0.0
  %2320 = vmatpush1.msra.mxu0 0.0
  %2321 = vmatprep.subr.mxu0 0.0
  %2322 = vmatpush1.msra.mxu0 0.0
  %2323 = vmatprep.subr.mxu0 0.0
  %2324 = vmatpush1.msra.mxu0 0.0
  %2325 = vmatprep.subr.mxu0 0.0
  %2326 = vmatpush1.msra.mxu0 0.0
  %2327 = vmatprep.subr.mxu0 0.0
  %2328 = vmatpush1.msra.mxu0 0.0
  %2329 = vmatprep.subr.mxu0 0.0
  %2330 = vmatpush1.msra.mxu0 0.0
  %2331 = vmatprep.subr.mxu0 0.0
  %2332 = vmatpush1.msra.mxu0 0.0
  %2333 = vmatprep.subr.mxu0 0.0
  %2334 = vmatpush1.msra.mxu0 0.0
  %2335 = vmatprep.subr.mxu0 0.0
  %2336 = vmatpush1.msra.mxu0 0.0
  %2337 = vmatprep.subr.mxu0 0.0
  %2338 = vmatpush1.msra.mxu0 0.0
  %2339 = vmatprep.subr.mxu0 0.0
  %2340 = vmatpush1.msra.mxu0 0.0
  %2341 = vmatprep.subr.mxu0 0.0
  %2342 = vmatpush1.msra.mxu0 0.0
  %2343 = vmatprep.mubr.f32.mxu0 0.0
  %2344 = vmatmul.mubr.f32.gmra.mrb[0].mxu0 %v2275
  %v2345 = vpop.f32.mrb[0].mxu0
  %v2346 = vadd.f32 0.0, %v2345
  %v2347 = vpop.f32.mrb[0].mxu0
  %v2348 = vadd.f32 0.0, %v2347
  %2349 = vmatprep.mubr.f32.mxu0 0.0
  %2350 = vmatmul.mubr.f32.gmra.mrb[0].mxu0 %v2277
  %v2351 = vpop.f32.mrb[0].mxu0
  %v2352 = vadd.f32 0.0, %v2351
  %v2353 = vpop.f32.mrb[0].mxu0
  %v2354 = vadd.f32 0.0, %v2353
  %2355 = vdwg.mxu0
  %2358 = vrot.lane.b32.xlu0 %v2235, 64
  %v2359 = vpop.permute.xlu0 %2358
  %2360 = vrot.lane.b32.xlu0 %v2238, 64
  %v2361 = vpop.permute.xlu0 %2360
  %v2362 = vsel %vm1262, %v2359, 0
  %v2364 = vsel %vm1262, %v2361, 0
  %2366 = vmatprep.subr.mxu0 %v2262
  %2367 = vmatpush1.msra.mxu0 %v2261
  %2368 = vmatprep.subr.mxu0 %v2264
  %2369 = vmatpush1.msra.mxu0 %v2263
  %2370 = vmatprep.subr.mxu0 0.0
  %2371 = vmatpush1.msra.mxu0 0.0
  %2372 = vmatprep.subr.mxu0 0.0
  %2373 = vmatpush1.msra.mxu0 0.0
  %2374 = vmatprep.subr.mxu0 0.0
  %2375 = vmatpush1.msra.mxu0 0.0
  %2376 = vmatprep.subr.mxu0 0.0
  %2377 = vmatpush1.msra.mxu0 0.0
  %2378 = vmatprep.subr.mxu0 0.0
  %2379 = vmatpush1.msra.mxu0 0.0
  %2380 = vmatprep.subr.mxu0 0.0
  %2381 = vmatpush1.msra.mxu0 0.0
  %2382 = vmatprep.subr.mxu0 0.0
  %2383 = vmatpush1.msra.mxu0 0.0
  %2384 = vmatprep.subr.mxu0 0.0
  %2385 = vmatpush1.msra.mxu0 0.0
  %2386 = vmatprep.subr.mxu0 0.0
  %2387 = vmatpush1.msra.mxu0 0.0
  %2388 = vmatprep.subr.mxu0 0.0
  %2389 = vmatpush1.msra.mxu0 0.0
  %2390 = vmatprep.subr.mxu0 0.0
  %2391 = vmatpush1.msra.mxu0 0.0
  %2392 = vmatprep.subr.mxu0 0.0
  %2393 = vmatpush1.msra.mxu0 0.0
  %2394 = vmatprep.subr.mxu0 0.0
  %2395 = vmatpush1.msra.mxu0 0.0
  %2396 = vmatprep.subr.mxu0 0.0
  %2397 = vmatpush1.msra.mxu0 0.0
  %2398 = vmatprep.subr.mxu0 0.0
  %2399 = vmatpush1.msra.mxu0 0.0
  %2400 = vmatprep.subr.mxu0 0.0
  %2401 = vmatpush1.msra.mxu0 0.0
  %2402 = vmatprep.subr.mxu0 0.0
  %2403 = vmatpush1.msra.mxu0 0.0
  %2404 = vmatprep.subr.mxu0 0.0
  %2405 = vmatpush1.msra.mxu0 0.0
  %2406 = vmatprep.subr.mxu0 0.0
  %2407 = vmatpush1.msra.mxu0 0.0
  %2408 = vmatprep.subr.mxu0 0.0
  %2409 = vmatpush1.msra.mxu0 0.0
  %2410 = vmatprep.subr.mxu0 0.0
  %2411 = vmatpush1.msra.mxu0 0.0
  %2412 = vmatprep.subr.mxu0 0.0
  %2413 = vmatpush1.msra.mxu0 0.0
  %2414 = vmatprep.subr.mxu0 0.0
  %2415 = vmatpush1.msra.mxu0 0.0
  %2416 = vmatprep.subr.mxu0 0.0
  %2417 = vmatpush1.msra.mxu0 0.0
  %2418 = vmatprep.subr.mxu0 0.0
  %2419 = vmatpush1.msra.mxu0 0.0
  %2420 = vmatprep.subr.mxu0 0.0
  %2421 = vmatpush1.msra.mxu0 0.0
  %2422 = vmatprep.subr.mxu0 0.0
  %2423 = vmatpush1.msra.mxu0 0.0
  %2424 = vmatprep.subr.mxu0 0.0
  %2425 = vmatpush1.msra.mxu0 0.0
  %2426 = vmatprep.subr.mxu0 0.0
  %2427 = vmatpush1.msra.mxu0 0.0
  %2428 = vmatprep.subr.mxu0 0.0
  %2429 = vmatpush1.msra.mxu0 0.0
  %2430 = vmatprep.mubr.f32.mxu0 0.0
  %2431 = vmatmul.mubr.f32.gmra.mrb[0].mxu0 %v2362
  %v2432 = vpop.f32.mrb[0].mxu0
  %v2433 = vadd.f32 %v2346, %v2432
  %v2434 = vpop.f32.mrb[0].mxu0
  %v2435 = vadd.f32 %v2348, %v2434
  %2436 = vmatprep.mubr.f32.mxu0 0.0
  %2437 = vmatmul.mubr.f32.gmra.mrb[0].mxu0 %v2364
  %v2438 = vpop.f32.mrb[0].mxu0
  %v2439 = vadd.f32 %v2352, %v2438
  %v2440 = vpop.f32.mrb[0].mxu0
  %v2441 = vadd.f32 %v2354, %v2440
  %2442 = vdwg.mxu0
  %v2443 = vld [vmem:[%s10] sm:$0x3]
  %v2445 = vlaneseq
  %v2446 = vshrl.u32 %v2445, 7
  %v2447 = vsub.s32 0, %v2446
  %v2448 = vrot.slane %v2443, %v2447
  %v2449 = vlaneseq
  %v2450 = vshrl.u32 %v2449, 7
  %v2451 = vsub.s32 1, %v2450
  %v2452 = vrot.slane %v2443, %v2451
  %v2455 = vadd.f32 %v2433, %v2448
  %v2456 = vadd.f32 %v2435, %v2452
  %v2457 = vadd.f32 %v2439, %v2448
  %v2458 = vadd.f32 %v2441, %v2452
  %v2459 = vld [vmem:[%s11] sm:$0xff]
  %v2460 = vld [vmem:[%s11 + $0x8] sm:$0xff]
  %v2461 = vld [vmem:[%s11 + $0x10] sm:$0xff]
  %v2462 = vld [vmem:[%s11 + $0x18] sm:$0xff]
  %v2464 = vrot.slane %v2458, 6
  %v2466 = vadd.f32 %v2455, %v2464
  %2467 = vmatprep.subr.mxu0 0.0
  %2468 = vmatpush1.msra.mxu0 %v2459
  %2469 = vmatprep.subr.mxu0 0.0
  %2470 = vmatpush1.msra.mxu0 %v2460
  %2471 = vmatprep.subr.mxu0 0.0
  %2472 = vmatpush1.msra.mxu0 %v2461
  %2473 = vmatprep.subr.mxu0 0.0
  %2474 = vmatpush1.msra.mxu0 %v2462
  %2475 = vmatprep.subr.mxu0 0.0
  %2476 = vmatpush1.msra.mxu0 0.0
  %2477 = vmatprep.subr.mxu0 0.0
  %2478 = vmatpush1.msra.mxu0 0.0
  %2479 = vmatprep.subr.mxu0 0.0
  %2480 = vmatpush1.msra.mxu0 0.0
  %2481 = vmatprep.subr.mxu0 0.0
  %2482 = vmatpush1.msra.mxu0 0.0
  %2483 = vmatprep.subr.mxu0 0.0
  %2484 = vmatpush1.msra.mxu0 0.0
  %2485 = vmatprep.subr.mxu0 0.0
  %2486 = vmatpush1.msra.mxu0 0.0
  %2487 = vmatprep.subr.mxu0 0.0
  %2488 = vmatpush1.msra.mxu0 0.0
  %2489 = vmatprep.subr.mxu0 0.0
  %2490 = vmatpush1.msra.mxu0 0.0
  %2491 = vmatprep.subr.mxu0 0.0
  %2492 = vmatpush1.msra.mxu0 0.0
  %2493 = vmatprep.subr.mxu0 0.0
  %2494 = vmatpush1.msra.mxu0 0.0
  %2495 = vmatprep.subr.mxu0 0.0
  %2496 = vmatpush1.msra.mxu0 0.0
  %2497 = vmatprep.subr.mxu0 0.0
  %2498 = vmatpush1.msra.mxu0 0.0
  %2499 = vmatprep.subr.mxu0 0.0
  %2500 = vmatpush1.msra.mxu0 0.0
  %2501 = vmatprep.subr.mxu0 0.0
  %2502 = vmatpush1.msra.mxu0 0.0
  %2503 = vmatprep.subr.mxu0 0.0
  %2504 = vmatpush1.msra.mxu0 0.0
  %2505 = vmatprep.subr.mxu0 0.0
  %2506 = vmatpush1.msra.mxu0 0.0
  %2507 = vmatprep.subr.mxu0 0.0
  %2508 = vmatpush1.msra.mxu0 0.0
  %2509 = vmatprep.subr.mxu0 0.0
  %2510 = vmatpush1.msra.mxu0 0.0
  %2511 = vmatprep.subr.mxu0 0.0
  %2512 = vmatpush1.msra.mxu0 0.0
  %2513 = vmatprep.subr.mxu0 0.0
  %2514 = vmatpush1.msra.mxu0 0.0
  %2515 = vmatprep.subr.mxu0 0.0
  %2516 = vmatpush1.msra.mxu0 0.0
  %2517 = vmatprep.subr.mxu0 0.0
  %2518 = vmatpush1.msra.mxu0 0.0
  %2519 = vmatprep.subr.mxu0 0.0
  %2520 = vmatpush1.msra.mxu0 0.0
  %2521 = vmatprep.subr.mxu0 0.0
  %2522 = vmatpush1.msra.mxu0 0.0
  %2523 = vmatprep.subr.mxu0 0.0
  %2524 = vmatpush1.msra.mxu0 0.0
  %2525 = vmatprep.subr.mxu0 0.0
  %2526 = vmatpush1.msra.mxu0 0.0
  %2527 = vmatprep.subr.mxu0 0.0
  %2528 = vmatpush1.msra.mxu0 0.0
  %2529 = vmatprep.subr.mxu0 0.0
  %2530 = vmatpush1.msra.mxu0 0.0
  %2531 = vmatprep.mubr.f32.mxu0 0.0
  %2532 = vmatmul.mubr.f32.gmra.mrb[0].mxu0 %v1380
  %v2533 = vpop.f32.mrb[0].mxu0
  %v2534 = vadd.f32 0.0, %v2533
  %v2535 = vpop.f32.mrb[0].mxu0
  %2536 = vdwg.mxu0
  %v2537 = vadd.f32 %v2466, %v2534
  %v2538 = vxor.u32 %v2537, 2147483648
  %v2539 = vmul.f32 %v2538, 1.442695
  %v2540 = vpow.pop %v2539
  %v2541 = vadd.f32 %v2540, 1.0
  %v2542 = vrcp.pop %v2541
  %v2543 = vmul.f32 1.0, %v2542
  %v2544 = vtanh.pop %v2537
  %v2545 = vmul.f32 %v2543, 0.0
  %2547 = vrot.lane.b32.xlu0 %v2544, 32
  %v2548 = vpop.permute.xlu0 %2547
  %v2550 = vmul.f32 %v2543, %v2548
  %2552 = vrot.lane.b32.xlu0 %v2550, 32
  %v2553 = vpop.permute.xlu0 %2552
  %v2555 = vadd.f32 %v2545, %v2553
  %v2556 = vtanh.pop %v2555
  %2558 = vrot.lane.b32.xlu0 %v2556, 32
  %v2559 = vpop.permute.xlu0 %2558
  %v2561 = vmul.f32 %v2543, %v2559
  %v2562 = vrot.slane %v2458, 2
  %v2564 = vadd.f32 %v2455, %v2562
  %2566 = vrot.lane.b32.xlu0 %v2561, 64
  %v2567 = vpop.permute.xlu0 %2566
  %v2568 = vsel %vm1288, %v2567, 0
  %2570 = vmatprep.subr.mxu0 0.0
  %2571 = vmatpush1.msra.mxu0 %v2459
  %2572 = vmatprep.subr.mxu0 0.0
  %2573 = vmatpush1.msra.mxu0 %v2460
  %2574 = vmatprep.subr.mxu0 0.0
  %2575 = vmatpush1.msra.mxu0 %v2461
  %2576 = vmatprep.subr.mxu0 0.0
  %2577 = vmatpush1.msra.mxu0 %v2462
  %2578 = vmatprep.subr.mxu0 0.0
  %2579 = vmatpush1.msra.mxu0 0.0
  %2580 = vmatprep.subr.mxu0 0.0
  %2581 = vmatpush1.msra.mxu0 0.0
  %2582 = vmatprep.subr.mxu0 0.0
  %2583 = vmatpush1.msra.mxu0 0.0
  %2584 = vmatprep.subr.mxu0 0.0
  %2585 = vmatpush1.msra.mxu0 0.0
  %2586 = vmatprep.subr.mxu0 0.0
  %2587 = vmatpush1.msra.mxu0 0.0
  %2588 = vmatprep.subr.mxu0 0.0
  %2589 = vmatpush1.msra.mxu0 0.0
  %2590 = vmatprep.subr.mxu0 0.0
  %2591 = vmatpush1.msra.mxu0 0.0
  %2592 = vmatprep.subr.mxu0 0.0
  %2593 = vmatpush1.msra.mxu0 0.0
  %2594 = vmatprep.subr.mxu0 0.0
  %2595 = vmatpush1.msra.mxu0 0.0
  %2596 = vmatprep.subr.mxu0 0.0
  %2597 = vmatpush1.msra.mxu0 0.0
  %2598 = vmatprep.subr.mxu0 0.0
  %2599 = vmatpush1.msra.mxu0 0.0
  %2600 = vmatprep.subr.mxu0 0.0
  %2601 = vmatpush1.msra.mxu0 0.0
  %2602 = vmatprep.subr.mxu0 0.0
  %2603 = vmatpush1.msra.mxu0 0.0
  %2604 = vmatprep.subr.mxu0 0.0
  %2605 = vmatpush1.msra.mxu0 0.0
  %2606 = vmatprep.subr.mxu0 0.0
  %2607 = vmatpush1.msra.mxu0 0.0
  %2608 = vmatprep.subr.mxu0 0.0
  %2609 = vmatpush1.msra.mxu0 0.0
  %2610 = vmatprep.subr.mxu0 0.0
  %2611 = vmatpush1.msra.mxu0 0.0
  %2612 = vmatprep.subr.mxu0 0.0
  %2613 = vmatpush1.msra.mxu0 0.0
  %2614 = vmatprep.subr.mxu0 0.0
  %2615 = vmatpush1.msra.mxu0 0.0
  %2616 = vmatprep.subr.mxu0 0.0
  %2617 = vmatpush1.msra.mxu0 0.0
  %2618 = vmatprep.subr.mxu0 0.0
  %2619 = vmatpush1.msra.mxu0 0.0
  %2620 = vmatprep.subr.mxu0 0.0
  %2621 = vmatpush1.msra.mxu0 0.0
  %2622 = vmatprep.subr.mxu0 0.0
  %2623 = vmatpush1.msra.mxu0 0.0
  %2624 = vmatprep.subr.mxu0 0.0
  %2625 = vmatpush1.msra.mxu0 0.0
  %2626 = vmatprep.subr.mxu0 0.0
  %2627 = vmatpush1.msra.mxu0 0.0
  %2628 = vmatprep.subr.mxu0 0.0
  %2629 = vmatpush1.msra.mxu0 0.0
  %2630 = vmatprep.subr.mxu0 0.0
  %2631 = vmatpush1.msra.mxu0 0.0
  %2632 = vmatprep.subr.mxu0 0.0
  %2633 = vmatpush1.msra.mxu0 0.0
  %2634 = vmatprep.mubr.f32.mxu0 0.0
  %2635 = vmatmul.mubr.f32.gmra.mrb[0].mxu0 %v2568
  %v2636 = vpop.f32.mrb[0].mxu0
  %v2637 = vadd.f32 0.0, %v2636
  %v2638 = vpop.f32.mrb[0].mxu0
  %2639 = vdwg.mxu0
  %v2641 = vrot.slane %v2637, 6
  %v2643 = vadd.f32 %v2564, %v2641
  %v2644 = vxor.u32 %v2643, 2147483648
  %v2645 = vmul.f32 %v2644, 1.442695
  %v2646 = vpow.pop %v2645
  %v2647 = vadd.f32 %v2646, 1.0
  %v2648 = vrcp.pop %v2647
  %v2649 = vmul.f32 1.0, %v2648
  %v2650 = vtanh.pop %v2643
  %v2652 = vrot.slane %v2555, 6
  %v2654 = vmul.f32 %v2649, %v2652
  %2656 = vrot.lane.b32.xlu0 %v2650, 32
  %v2657 = vpop.permute.xlu0 %2656
  %v2659 = vmul.f32 %v2649, %v2657
  %2661 = vrot.lane.b32.xlu0 %v2659, 32
  %v2662 = vpop.permute.xlu0 %2661
  %v2664 = vadd.f32 %v2654, %v2662
  %v2665 = vtanh.pop %v2664
  %2667 = vrot.lane.b32.xlu0 %v2665, 32
  %v2668 = vpop.permute.xlu0 %2667
  %v2670 = vmul.f32 %v2649, %v2668
  %v2672 = vrot.slane %v2670, 2
  %2673 = vrot.lane.b32.xlu0 %v2672, 64
  %v2674 = vpop.permute.xlu0 %2673
  %v2675 = vsel %vm1288, %v2674, 0
  %2677 = vmatprep.subr.mxu0 0.0
  %2678 = vmatpush1.msra.mxu0 %v2459
  %2679 = vmatprep.subr.mxu0 0.0
  %2680 = vmatpush1.msra.mxu0 %v2460
  %2681 = vmatprep.subr.mxu0 0.0
  %2682 = vmatpush1.msra.mxu0 %v2461
  %2683 = vmatprep.subr.mxu0 0.0
  %2684 = vmatpush1.msra.mxu0 %v2462
  %2685 = vmatprep.subr.mxu0 0.0
  %2686 = vmatpush1.msra.mxu0 0.0
  %2687 = vmatprep.subr.mxu0 0.0
  %2688 = vmatpush1.msra.mxu0 0.0
  %2689 = vmatprep.subr.mxu0 0.0
  %2690 = vmatpush1.msra.mxu0 0.0
  %2691 = vmatprep.subr.mxu0 0.0
  %2692 = vmatpush1.msra.mxu0 0.0
  %2693 = vmatprep.subr.mxu0 0.0
  %2694 = vmatpush1.msra.mxu0 0.0
  %2695 = vmatprep.subr.mxu0 0.0
  %2696 = vmatpush1.msra.mxu0 0.0
  %2697 = vmatprep.subr.mxu0 0.0
  %2698 = vmatpush1.msra.mxu0 0.0
  %2699 = vmatprep.subr.mxu0 0.0
  %2700 = vmatpush1.msra.mxu0 0.0
  %2701 = vmatprep.subr.mxu0 0.0
  %2702 = vmatpush1.msra.mxu0 0.0
  %2703 = vmatprep.subr.mxu0 0.0
  %2704 = vmatpush1.msra.mxu0 0.0
  %2705 = vmatprep.subr.mxu0 0.0
  %2706 = vmatpush1.msra.mxu0 0.0
  %2707 = vmatprep.subr.mxu0 0.0
  %2708 = vmatpush1.msra.mxu0 0.0
  %2709 = vmatprep.subr.mxu0 0.0
  %2710 = vmatpush1.msra.mxu0 0.0
  %2711 = vmatprep.subr.mxu0 0.0
  %2712 = vmatpush1.msra.mxu0 0.0
  %2713 = vmatprep.subr.mxu0 0.0
  %2714 = vmatpush1.msra.mxu0 0.0
  %2715 = vmatprep.subr.mxu0 0.0
  %2716 = vmatpush1.msra.mxu0 0.0
  %2717 = vmatprep.subr.mxu0 0.0
  %2718 = vmatpush1.msra.mxu0 0.0
  %2719 = vmatprep.subr.mxu0 0.0
  %2720 = vmatpush1.msra.mxu0 0.0
  %2721 = vmatprep.subr.mxu0 0.0
  %2722 = vmatpush1.msra.mxu0 0.0
  %2723 = vmatprep.subr.mxu0 0.0
  %2724 = vmatpush1.msra.mxu0 0.0
  %2725 = vmatprep.subr.mxu0 0.0
  %2726 = vmatpush1.msra.mxu0 0.0
  %2727 = vmatprep.subr.mxu0 0.0
  %2728 = vmatpush1.msra.mxu0 0.0
  %2729 = vmatprep.subr.mxu0 0.0
  %2730 = vmatpush1.msra.mxu0 0.0
  %2731 = vmatprep.subr.mxu0 0.0
  %2732 = vmatpush1.msra.mxu0 0.0
  %2733 = vmatprep.subr.mxu0 0.0
  %2734 = vmatpush1.msra.mxu0 0.0
  %2735 = vmatprep.subr.mxu0 0.0
  %2736 = vmatpush1.msra.mxu0 0.0
  %2737 = vmatprep.subr.mxu0 0.0
  %2738 = vmatpush1.msra.mxu0 0.0
  %2739 = vmatprep.subr.mxu0 0.0
  %2740 = vmatpush1.msra.mxu0 0.0
  %2741 = vmatprep.mubr.f32.mxu0 0.0
  %2742 = vmatmul.mubr.f32.gmra.mrb[0].mxu0 %v2675
  %v2743 = vpop.f32.mrb[0].mxu0
  %v2744 = vadd.f32 0.0, %v2743
  %v2745 = vpop.f32.mrb[0].mxu0
  %2746 = vdwg.mxu0
  %v2748 = vrot.slane %v2744, 4
  %v2750 = vadd.f32 %v2466, %v2748
  %v2751 = vxor.u32 %v2750, 2147483648
  %v2752 = vmul.f32 %v2751, 1.442695
  %v2753 = vpow.pop %v2752
  %v2754 = vadd.f32 %v2753, 1.0
  %v2755 = vrcp.pop %v2754
  %v2756 = vmul.f32 1.0, %v2755
  %v2757 = vtanh.pop %v2750
  %v2759 = vrot.slane %v2664, 6
  %v2761 = vmul.f32 %v2756, %v2759
  %2763 = vrot.lane.b32.xlu0 %v2757, 32
  %v2764 = vpop.permute.xlu0 %2763
  %v2766 = vmul.f32 %v2756, %v2764
  %2768 = vrot.lane.b32.xlu0 %v2766, 32
  %v2769 = vpop.permute.xlu0 %2768
  %v2771 = vadd.f32 %v2761, %v2769
  %v2772 = vtanh.pop %v2771
  %2774 = vrot.lane.b32.xlu0 %v2772, 32
  %v2775 = vpop.permute.xlu0 %2774
  %v2777 = vmul.f32 %v2756, %v2775
  %v2779 = vrot.slane %v2777, 4
  %2780 = vrot.lane.b32.xlu0 %v2779, 64
  %v2781 = vpop.permute.xlu0 %2780
  %v2782 = vsel %vm1288, %v2781, 0
  %2784 = vmatprep.subr.mxu0 0.0
  %2785 = vmatpush1.msra.mxu0 %v2459
  %2786 = vmatprep.subr.mxu0 0.0
  %2787 = vmatpush1.msra.mxu0 %v2460
  %2788 = vmatprep.subr.mxu0 0.0
  %2789 = vmatpush1.msra.mxu0 %v2461
  %2790 = vmatprep.subr.mxu0 0.0
  %2791 = vmatpush1.msra.mxu0 %v2462
  %2792 = vmatprep.subr.mxu0 0.0
  %2793 = vmatpush1.msra.mxu0 0.0
  %2794 = vmatprep.subr.mxu0 0.0
  %2795 = vmatpush1.msra.mxu0 0.0
  %2796 = vmatprep.subr.mxu0 0.0
  %2797 = vmatpush1.msra.mxu0 0.0
  %2798 = vmatprep.subr.mxu0 0.0
  %2799 = vmatpush1.msra.mxu0 0.0
  %2800 = vmatprep.subr.mxu0 0.0
  %2801 = vmatpush1.msra.mxu0 0.0
  %2802 = vmatprep.subr.mxu0 0.0
  %2803 = vmatpush1.msra.mxu0 0.0
  %2804 = vmatprep.subr.mxu0 0.0
  %2805 = vmatpush1.msra.mxu0 0.0
  %2806 = vmatprep.subr.mxu0 0.0
  %2807 = vmatpush1.msra.mxu0 0.0
  %2808 = vmatprep.subr.mxu0 0.0
  %2809 = vmatpush1.msra.mxu0 0.0
  %2810 = vmatprep.subr.mxu0 0.0
  %2811 = vmatpush1.msra.mxu0 0.0
  %2812 = vmatprep.subr.mxu0 0.0
  %2813 = vmatpush1.msra.mxu0 0.0
  %2814 = vmatprep.subr.mxu0 0.0
  %2815 = vmatpush1.msra.mxu0 0.0
  %2816 = vmatprep.subr.mxu0 0.0
  %2817 = vmatpush1.msra.mxu0 0.0
  %2818 = vmatprep.subr.mxu0 0.0
  %2819 = vmatpush1.msra.mxu0 0.0
  %2820 = vmatprep.subr.mxu0 0.0
  %2821 = vmatpush1.msra.mxu0 0.0
  %2822 = vmatprep.subr.mxu0 0.0
  %2823 = vmatpush1.msra.mxu0 0.0
  %2824 = vmatprep.subr.mxu0 0.0
  %2825 = vmatpush1.msra.mxu0 0.0
  %2826 = vmatprep.subr.mxu0 0.0
  %2827 = vmatpush1.msra.mxu0 0.0
  %2828 = vmatprep.subr.mxu0 0.0
  %2829 = vmatpush1.msra.mxu0 0.0
  %2830 = vmatprep.subr.mxu0 0.0
  %2831 = vmatpush1.msra.mxu0 0.0
  %2832 = vmatprep.subr.mxu0 0.0
  %2833 = vmatpush1.msra.mxu0 0.0
  %2834 = vmatprep.subr.mxu0 0.0
  %2835 = vmatpush1.msra.mxu0 0.0
  %2836 = vmatprep.subr.mxu0 0.0
  %2837 = vmatpush1.msra.mxu0 0.0
  %2838 = vmatprep.subr.mxu0 0.0
  %2839 = vmatpush1.msra.mxu0 0.0
  %2840 = vmatprep.subr.mxu0 0.0
  %2841 = vmatpush1.msra.mxu0 0.0
  %2842 = vmatprep.subr.mxu0 0.0
  %2843 = vmatpush1.msra.mxu0 0.0
  %2844 = vmatprep.subr.mxu0 0.0
  %2845 = vmatpush1.msra.mxu0 0.0
  %2846 = vmatprep.subr.mxu0 0.0
  %2847 = vmatpush1.msra.mxu0 0.0
  %2848 = vmatprep.mubr.f32.mxu0 0.0
  %2849 = vmatmul.mubr.f32.gmra.mrb[0].mxu0 %v2782
  %v2850 = vpop.f32.mrb[0].mxu0
  %v2851 = vadd.f32 0.0, %v2850
  %v2852 = vpop.f32.mrb[0].mxu0
  %2853 = vdwg.mxu0
  %v2855 = vrot.slane %v2851, 2
  %v2857 = vadd.f32 %v2564, %v2855
  %v2858 = vxor.u32 %v2857, 2147483648
  %v2859 = vmul.f32 %v2858, 1.442695
  %v2860 = vpow.pop %v2859
  %v2861 = vadd.f32 %v2860, 1.0
  %v2862 = vrcp.pop %v2861
  %v2863 = vmul.f32 1.0, %v2862
  %v2864 = vtanh.pop %v2857
  %v2866 = vrot.slane %v2771, 6
  %v2868 = vmul.f32 %v2863, %v2866
  %2870 = vrot.lane.b32.xlu0 %v2864, 32
  %v2871 = vpop.permute.xlu0 %2870
  %v2873 = vmul.f32 %v2863, %v2871
  %2875 = vrot.lane.b32.xlu0 %v2873, 32
  %v2876 = vpop.permute.xlu0 %2875
  %v2878 = vadd.f32 %v2868, %v2876
  %v2879 = vtanh.pop %v2878
  %2881 = vrot.lane.b32.xlu0 %v2879, 32
  %v2882 = vpop.permute.xlu0 %2881
  %v2884 = vmul.f32 %v2863, %v2882
  %v2886 = vrot.slane %v2456, 6
  %v2888 = vadd.f32 %v2457, %v2886
  %v2890 = vrot.slane %v2884, 6
  %2891 = vrot.lane.b32.xlu0 %v2890, 64
  %v2892 = vpop.permute.xlu0 %2891
  %v2893 = vsel %vm1288, %v2892, 0
  %2895 = vmatprep.subr.mxu0 0.0
  %2896 = vmatpush1.msra.mxu0 %v2459
  %2897 = vmatprep.subr.mxu0 0.0
  %2898 = vmatpush1.msra.mxu0 %v2460
  %2899 = vmatprep.subr.mxu0 0.0
  %2900 = vmatpush1.msra.mxu0 %v2461
  %2901 = vmatprep.subr.mxu0 0.0
  %2902 = vmatpush1.msra.mxu0 %v2462
  %2903 = vmatprep.subr.mxu0 0.0
  %2904 = vmatpush1.msra.mxu0 0.0
  %2905 = vmatprep.subr.mxu0 0.0
  %2906 = vmatpush1.msra.mxu0 0.0
  %2907 = vmatprep.subr.mxu0 0.0
  %2908 = vmatpush1.msra.mxu0 0.0
  %2909 = vmatprep.subr.mxu0 0.0
  %2910 = vmatpush1.msra.mxu0 0.0
  %2911 = vmatprep.subr.mxu0 0.0
  %2912 = vmatpush1.msra.mxu0 0.0
  %2913 = vmatprep.subr.mxu0 0.0
  %2914 = vmatpush1.msra.mxu0 0.0
  %2915 = vmatprep.subr.mxu0 0.0
  %2916 = vmatpush1.msra.mxu0 0.0
  %2917 = vmatprep.subr.mxu0 0.0
  %2918 = vmatpush1.msra.mxu0 0.0
  %2919 = vmatprep.subr.mxu0 0.0
  %2920 = vmatpush1.msra.mxu0 0.0
  %2921 = vmatprep.subr.mxu0 0.0
  %2922 = vmatpush1.msra.mxu0 0.0
  %2923 = vmatprep.subr.mxu0 0.0
  %2924 = vmatpush1.msra.mxu0 0.0
  %2925 = vmatprep.subr.mxu0 0.0
  %2926 = vmatpush1.msra.mxu0 0.0
  %2927 = vmatprep.subr.mxu0 0.0
  %2928 = vmatpush1.msra.mxu0 0.0
  %2929 = vmatprep.subr.mxu0 0.0
  %2930 = vmatpush1.msra.mxu0 0.0
  %2931 = vmatprep.subr.mxu0 0.0
  %2932 = vmatpush1.msra.mxu0 0.0
  %2933 = vmatprep.subr.mxu0 0.0
  %2934 = vmatpush1.msra.mxu0 0.0
  %2935 = vmatprep.subr.mxu0 0.0
  %2936 = vmatpush1.msra.mxu0 0.0
  %2937 = vmatprep.subr.mxu0 0.0
  %2938 = vmatpush1.msra.mxu0 0.0
  %2939 = vmatprep.subr.mxu0 0.0
  %2940 = vmatpush1.msra.mxu0 0.0
  %2941 = vmatprep.subr.mxu0 0.0
  %2942 = vmatpush1.msra.mxu0 0.0
  %2943 = vmatprep.subr.mxu0 0.0
  %2944 = vmatpush1.msra.mxu0 0.0
  %2945 = vmatprep.subr.mxu0 0.0
  %2946 = vmatpush1.msra.mxu0 0.0
  %2947 = vmatprep.subr.mxu0 0.0
  %2948 = vmatpush1.msra.mxu0 0.0
  %2949 = vmatprep.subr.mxu0 0.0
  %2950 = vmatpush1.msra.mxu0 0.0
  %2951 = vmatprep.subr.mxu0 0.0
  %2952 = vmatpush1.msra.mxu0 0.0
  %2953 = vmatprep.subr.mxu0 0.0
  %2954 = vmatpush1.msra.mxu0 0.0
  %2955 = vmatprep.subr.mxu0 0.0
  %2956 = vmatpush1.msra.mxu0 0.0
  %2957 = vmatprep.subr.mxu0 0.0
  %2958 = vmatpush1.msra.mxu0 0.0
  %2959 = vmatprep.mubr.f32.mxu0 0.0
  %2960 = vmatmul.mubr.f32.gmra.mrb[0].mxu0 %v2893
  %v2961 = vpop.f32.mrb[0].mxu0
  %v2962 = vadd.f32 0.0, %v2961
  %v2963 = vpop.f32.mrb[0].mxu0
  %2964 = vdwg.mxu0
  %v2965 = vadd.f32 %v2888, %v2962
  %v2966 = vxor.u32 %v2965, 2147483648
  %v2967 = vmul.f32 %v2966, 1.442695
  %v2968 = vpow.pop %v2967
  %v2969 = vadd.f32 %v2968, 1.0
  %v2970 = vrcp.pop %v2969
  %v2971 = vmul.f32 1.0, %v2970
  %v2972 = vtanh.pop %v2965
  %v2974 = vrot.slane %v2878, 6
  %v2976 = vmul.f32 %v2971, %v2974
  %2978 = vrot.lane.b32.xlu0 %v2972, 32
  %v2979 = vpop.permute.xlu0 %2978
  %v2981 = vmul.f32 %v2971, %v2979
  %2983 = vrot.lane.b32.xlu0 %v2981, 32
  %v2984 = vpop.permute.xlu0 %2983
  %v2986 = vadd.f32 %v2976, %v2984
  %v2987 = vtanh.pop %v2986
  %2989 = vrot.lane.b32.xlu0 %v2987, 32
  %v2990 = vpop.permute.xlu0 %2989
  %v2992 = vmul.f32 %v2971, %v2990
  %v2993 = vrot.slane %v2456, 2
  %v2995 = vadd.f32 %v2457, %v2993
  %2997 = vrot.lane.b32.xlu0 %v2992, 64
  %v2998 = vpop.permute.xlu0 %2997
  %v2999 = vsel %vm1288, %v2998, 0
  %3001 = vmatprep.subr.mxu0 0.0
  %3002 = vmatpush1.msra.mxu0 %v2459
  %3003 = vmatprep.subr.mxu0 0.0
  %3004 = vmatpush1.msra.mxu0 %v2460
  %3005 = vmatprep.subr.mxu0 0.0
  %3006 = vmatpush1.msra.mxu0 %v2461
  %3007 = vmatprep.subr.mxu0 0.0
  %3008 = vmatpush1.msra.mxu0 %v2462
  %3009 = vmatprep.subr.mxu0 0.0
  %3010 = vmatpush1.msra.mxu0 0.0
  %3011 = vmatprep.subr.mxu0 0.0
  %3012 = vmatpush1.msra.mxu0 0.0
  %3013 = vmatprep.subr.mxu0 0.0
  %3014 = vmatpush1.msra.mxu0 0.0
  %3015 = vmatprep.subr.mxu0 0.0
  %3016 = vmatpush1.msra.mxu0 0.0
  %3017 = vmatprep.subr.mxu0 0.0
  %3018 = vmatpush1.msra.mxu0 0.0
  %3019 = vmatprep.subr.mxu0 0.0
  %3020 = vmatpush1.msra.mxu0 0.0
  %3021 = vmatprep.subr.mxu0 0.0
  %3022 = vmatpush1.msra.mxu0 0.0
  %3023 = vmatprep.subr.mxu0 0.0
  %3024 = vmatpush1.msra.mxu0 0.0
  %3025 = vmatprep.subr.mxu0 0.0
  %3026 = vmatpush1.msra.mxu0 0.0
  %3027 = vmatprep.subr.mxu0 0.0
  %3028 = vmatpush1.msra.mxu0 0.0
  %3029 = vmatprep.subr.mxu0 0.0
  %3030 = vmatpush1.msra.mxu0 0.0
  %3031 = vmatprep.subr.mxu0 0.0
  %3032 = vmatpush1.msra.mxu0 0.0
  %3033 = vmatprep.subr.mxu0 0.0
  %3034 = vmatpush1.msra.mxu0 0.0
  %3035 = vmatprep.subr.mxu0 0.0
  %3036 = vmatpush1.msra.mxu0 0.0
  %3037 = vmatprep.subr.mxu0 0.0
  %3038 = vmatpush1.msra.mxu0 0.0
  %3039 = vmatprep.subr.mxu0 0.0
  %3040 = vmatpush1.msra.mxu0 0.0
  %3041 = vmatprep.subr.mxu0 0.0
  %3042 = vmatpush1.msra.mxu0 0.0
  %3043 = vmatprep.subr.mxu0 0.0
  %3044 = vmatpush1.msra.mxu0 0.0
  %3045 = vmatprep.subr.mxu0 0.0
  %3046 = vmatpush1.msra.mxu0 0.0
  %3047 = vmatprep.subr.mxu0 0.0
  %3048 = vmatpush1.msra.mxu0 0.0
  %3049 = vmatprep.subr.mxu0 0.0
  %3050 = vmatpush1.msra.mxu0 0.0
  %3051 = vmatprep.subr.mxu0 0.0
  %3052 = vmatpush1.msra.mxu0 0.0
  %3053 = vmatprep.subr.mxu0 0.0
  %3054 = vmatpush1.msra.mxu0 0.0
  %3055 = vmatprep.subr.mxu0 0.0
  %3056 = vmatpush1.msra.mxu0 0.0
  %3057 = vmatprep.subr.mxu0 0.0
  %3058 = vmatpush1.msra.mxu0 0.0
  %3059 = vmatprep.subr.mxu0 0.0
  %3060 = vmatpush1.msra.mxu0 0.0
  %3061 = vmatprep.subr.mxu0 0.0
  %3062 = vmatpush1.msra.mxu0 0.0
  %3063 = vmatprep.subr.mxu0 0.0
  %3064 = vmatpush1.msra.mxu0 0.0
  %3065 = vmatprep.mubr.f32.mxu0 0.0
  %3066 = vmatmul.mubr.f32.gmra.mrb[0].mxu0 %v2999
  %v3067 = vpop.f32.mrb[0].mxu0
  %v3068 = vadd.f32 0.0, %v3067
  %v3069 = vpop.f32.mrb[0].mxu0
  %3070 = vdwg.mxu0
  %v3072 = vrot.slane %v3068, 6
  %v3074 = vadd.f32 %v2995, %v3072
  %v3075 = vxor.u32 %v3074, 2147483648
  %v3076 = vmul.f32 %v3075, 1.442695
  %v3077 = vpow.pop %v3076
  %v3078 = vadd.f32 %v3077, 1.0
  %v3079 = vrcp.pop %v3078
  %v3080 = vmul.f32 1.0, %v3079
  %v3081 = vtanh.pop %v3074
  %v3083 = vrot.slane %v2986, 6
  %v3085 = vmul.f32 %v3080, %v3083
  %3087 = vrot.lane.b32.xlu0 %v3081, 32
  %v3088 = vpop.permute.xlu0 %3087
  %v3090 = vmul.f32 %v3080, %v3088
  %3092 = vrot.lane.b32.xlu0 %v3090, 32
  %v3093 = vpop.permute.xlu0 %3092
  %v3095 = vadd.f32 %v3085, %v3093
  %v3096 = vtanh.pop %v3095
  %3098 = vrot.lane.b32.xlu0 %v3096, 32
  %v3099 = vpop.permute.xlu0 %3098
  %v3101 = vmul.f32 %v3080, %v3099
  %v3103 = vrot.slane %v3101, 2
  %3104 = vrot.lane.b32.xlu0 %v3103, 64
  %v3105 = vpop.permute.xlu0 %3104
  %v3106 = vsel %vm1288, %v3105, 0
  %3108 = vmatprep.subr.mxu0 0.0
  %3109 = vmatpush1.msra.mxu0 %v2459
  %3110 = vmatprep.subr.mxu0 0.0
  %3111 = vmatpush1.msra.mxu0 %v2460
  %3112 = vmatprep.subr.mxu0 0.0
  %3113 = vmatpush1.msra.mxu0 %v2461
  %3114 = vmatprep.subr.mxu0 0.0
  %3115 = vmatpush1.msra.mxu0 %v2462
  %3116 = vmatprep.subr.mxu0 0.0
  %3117 = vmatpush1.msra.mxu0 0.0
  %3118 = vmatprep.subr.mxu0 0.0
  %3119 = vmatpush1.msra.mxu0 0.0
  %3120 = vmatprep.subr.mxu0 0.0
  %3121 = vmatpush1.msra.mxu0 0.0
  %3122 = vmatprep.subr.mxu0 0.0
  %3123 = vmatpush1.msra.mxu0 0.0
  %3124 = vmatprep.subr.mxu0 0.0
  %3125 = vmatpush1.msra.mxu0 0.0
  %3126 = vmatprep.subr.mxu0 0.0
  %3127 = vmatpush1.msra.mxu0 0.0
  %3128 = vmatprep.subr.mxu0 0.0
  %3129 = vmatpush1.msra.mxu0 0.0
  %3130 = vmatprep.subr.mxu0 0.0
  %3131 = vmatpush1.msra.mxu0 0.0
  %3132 = vmatprep.subr.mxu0 0.0
  %3133 = vmatpush1.msra.mxu0 0.0
  %3134 = vmatprep.subr.mxu0 0.0
  %3135 = vmatpush1.msra.mxu0 0.0
  %3136 = vmatprep.subr.mxu0 0.0
  %3137 = vmatpush1.msra.mxu0 0.0
  %3138 = vmatprep.subr.mxu0 0.0
  %3139 = vmatpush1.msra.mxu0 0.0
  %3140 = vmatprep.subr.mxu0 0.0
  %3141 = vmatpush1.msra.mxu0 0.0
  %3142 = vmatprep.subr.mxu0 0.0
  %3143 = vmatpush1.msra.mxu0 0.0
  %3144 = vmatprep.subr.mxu0 0.0
  %3145 = vmatpush1.msra.mxu0 0.0
  %3146 = vmatprep.subr.mxu0 0.0
  %3147 = vmatpush1.msra.mxu0 0.0
  %3148 = vmatprep.subr.mxu0 0.0
  %3149 = vmatpush1.msra.mxu0 0.0
  %3150 = vmatprep.subr.mxu0 0.0
  %3151 = vmatpush1.msra.mxu0 0.0
  %3152 = vmatprep.subr.mxu0 0.0
  %3153 = vmatpush1.msra.mxu0 0.0
  %3154 = vmatprep.subr.mxu0 0.0
  %3155 = vmatpush1.msra.mxu0 0.0
  %3156 = vmatprep.subr.mxu0 0.0
  %3157 = vmatpush1.msra.mxu0 0.0
  %3158 = vmatprep.subr.mxu0 0.0
  %3159 = vmatpush1.msra.mxu0 0.0
  %3160 = vmatprep.subr.mxu0 0.0
  %3161 = vmatpush1.msra.mxu0 0.0
  %3162 = vmatprep.subr.mxu0 0.0
  %3163 = vmatpush1.msra.mxu0 0.0
  %3164 = vmatprep.subr.mxu0 0.0
  %3165 = vmatpush1.msra.mxu0 0.0
  %3166 = vmatprep.subr.mxu0 0.0
  %3167 = vmatpush1.msra.mxu0 0.0
  %3168 = vmatprep.subr.mxu0 0.0
  %3169 = vmatpush1.msra.mxu0 0.0
  %3170 = vmatprep.subr.mxu0 0.0
  %3171 = vmatpush1.msra.mxu0 0.0
  %3172 = vmatprep.mubr.f32.mxu0 0.0
  %3173 = vmatmul.mubr.f32.gmra.mrb[0].mxu0 %v3106
  %v3174 = vpop.f32.mrb[0].mxu0
  %v3175 = vadd.f32 0.0, %v3174
  %v3176 = vpop.f32.mrb[0].mxu0
  %3177 = vdwg.mxu0
  %v3179 = vrot.slane %v3175, 4
  %v3181 = vadd.f32 %v2888, %v3179
  %v3182 = vxor.u32 %v3181, 2147483648
  %v3183 = vmul.f32 %v3182, 1.442695
  %v3184 = vpow.pop %v3183
  %v3185 = vadd.f32 %v3184, 1.0
  %v3186 = vrcp.pop %v3185
  %v3187 = vmul.f32 1.0, %v3186
  %v3188 = vtanh.pop %v3181
  %v3190 = vrot.slane %v3095, 6
  %v3192 = vmul.f32 %v3187, %v3190
  %3194 = vrot.lane.b32.xlu0 %v3188, 32
  %v3195 = vpop.permute.xlu0 %3194
  %v3197 = vmul.f32 %v3187, %v3195
  %3199 = vrot.lane.b32.xlu0 %v3197, 32
  %v3200 = vpop.permute.xlu0 %3199
  %v3202 = vadd.f32 %v3192, %v3200
  %v3203 = vtanh.pop %v3202
  %3205 = vrot.lane.b32.xlu0 %v3203, 32
  %v3206 = vpop.permute.xlu0 %3205
  %v3208 = vmul.f32 %v3187, %v3206
  %v3210 = vrot.slane %v3208, 4
  %3211 = vrot.lane.b32.xlu0 %v3210, 64
  %v3212 = vpop.permute.xlu0 %3211
  %v3213 = vsel %vm1288, %v3212, 0
  %3215 = vmatprep.subr.mxu0 0.0
  %3216 = vmatpush1.msra.mxu0 %v2459
  %3217 = vmatprep.subr.mxu0 0.0
  %3218 = vmatpush1.msra.mxu0 %v2460
  %3219 = vmatprep.subr.mxu0 0.0
  %3220 = vmatpush1.msra.mxu0 %v2461
  %3221 = vmatprep.subr.mxu0 0.0
  %3222 = vmatpush1.msra.mxu0 %v2462
  %3223 = vmatprep.subr.mxu0 0.0
  %3224 = vmatpush1.msra.mxu0 0.0
  %3225 = vmatprep.subr.mxu0 0.0
  %3226 = vmatpush1.msra.mxu0 0.0
  %3227 = vmatprep.subr.mxu0 0.0
  %3228 = vmatpush1.msra.mxu0 0.0
  %3229 = vmatprep.subr.mxu0 0.0
  %3230 = vmatpush1.msra.mxu0 0.0
  %3231 = vmatprep.subr.mxu0 0.0
  %3232 = vmatpush1.msra.mxu0 0.0
  %3233 = vmatprep.subr.mxu0 0.0
  %3234 = vmatpush1.msra.mxu0 0.0
  %3235 = vmatprep.subr.mxu0 0.0
  %3236 = vmatpush1.msra.mxu0 0.0
  %3237 = vmatprep.subr.mxu0 0.0
  %3238 = vmatpush1.msra.mxu0 0.0
  %3239 = vmatprep.subr.mxu0 0.0
  %3240 = vmatpush1.msra.mxu0 0.0
  %3241 = vmatprep.subr.mxu0 0.0
  %3242 = vmatpush1.msra.mxu0 0.0
  %3243 = vmatprep.subr.mxu0 0.0
  %3244 = vmatpush1.msra.mxu0 0.0
  %3245 = vmatprep.subr.mxu0 0.0
  %3246 = vmatpush1.msra.mxu0 0.0
  %3247 = vmatprep.subr.mxu0 0.0
  %3248 = vmatpush1.msra.mxu0 0.0
  %3249 = vmatprep.subr.mxu0 0.0
  %3250 = vmatpush1.msra.mxu0 0.0
  %3251 = vmatprep.subr.mxu0 0.0
  %3252 = vmatpush1.msra.mxu0 0.0
  %3253 = vmatprep.subr.mxu0 0.0
  %3254 = vmatpush1.msra.mxu0 0.0
  %3255 = vmatprep.subr.mxu0 0.0
  %3256 = vmatpush1.msra.mxu0 0.0
  %3257 = vmatprep.subr.mxu0 0.0
  %3258 = vmatpush1.msra.mxu0 0.0
  %3259 = vmatprep.subr.mxu0 0.0
  %3260 = vmatpush1.msra.mxu0 0.0
  %3261 = vmatprep.subr.mxu0 0.0
  %3262 = vmatpush1.msra.mxu0 0.0
  %3263 = vmatprep.subr.mxu0 0.0
  %3264 = vmatpush1.msra.mxu0 0.0
  %3265 = vmatprep.subr.mxu0 0.0
  %3266 = vmatpush1.msra.mxu0 0.0
  %3267 = vmatprep.subr.mxu0 0.0
  %3268 = vmatpush1.msra.mxu0 0.0
  %3269 = vmatprep.subr.mxu0 0.0
  %3270 = vmatpush1.msra.mxu0 0.0
  %3271 = vmatprep.subr.mxu0 0.0
  %3272 = vmatpush1.msra.mxu0 0.0
  %3273 = vmatprep.subr.mxu0 0.0
  %3274 = vmatpush1.msra.mxu0 0.0
  %3275 = vmatprep.subr.mxu0 0.0
  %3276 = vmatpush1.msra.mxu0 0.0
  %3277 = vmatprep.subr.mxu0 0.0
  %3278 = vmatpush1.msra.mxu0 0.0
  %3279 = vmatprep.mubr.f32.mxu0 0.0
  %3280 = vmatmul.mubr.f32.gmra.mrb[0].mxu0 %v3213
  %v3281 = vpop.f32.mrb[0].mxu0
  %v3282 = vadd.f32 0.0, %v3281
  %v3283 = vpop.f32.mrb[0].mxu0
  %3284 = vdwg.mxu0
  %v3286 = vrot.slane %v3282, 2
  %v3288 = vadd.f32 %v2995, %v3286
  %v3289 = vxor.u32 %v3288, 2147483648
  %v3290 = vmul.f32 %v3289, 1.442695
  %v3291 = vpow.pop %v3290
  %v3292 = vadd.f32 %v3291, 1.0
  %v3293 = vrcp.pop %v3292
  %v3294 = vmul.f32 1.0, %v3293
  %v3295 = vtanh.pop %v3288
  %v3297 = vrot.slane %v3202, 6
  %v3299 = vmul.f32 %v3294, %v3297
  %3301 = vrot.lane.b32.xlu0 %v3295, 32
  %v3302 = vpop.permute.xlu0 %3301
  %v3304 = vmul.f32 %v3294, %v3302
  %3306 = vrot.lane.b32.xlu0 %v3304, 32
  %v3307 = vpop.permute.xlu0 %3306
  %v3309 = vadd.f32 %v3299, %v3307
  %v3310 = vtanh.pop %v3309
  %3312 = vrot.lane.b32.xlu0 %v3310, 32
  %v3313 = vpop.permute.xlu0 %3312
  %v3315 = vmul.f32 %v3294, %v3313
  %v3316 = vsel %vm87, %v2561, %v2670
  %v3317 = vsel %vm2232, %v3316, %v2777
  %v3318 = vsel %vm2234, %v3317, %v2884
  %v3319 = vsel %vm87, %v2992, %v3101
  %v3320 = vsel %vm2232, %v3319, %v3208
  %v3321 = vsel %vm2234, %v3320, %v3315
  %v3323 = vrot.slane %v3315, 6
  %v3325 = vrot.slane %v3208, 2
  %v3327 = vrot.slane %v3101, 6
  %v3329 = vrot.slane %v2992, 2
  %v3332 = vrot.slane %v2777, 2
  %v3334 = vrot.slane %v2670, 6
  %v3336 = vrot.slane %v2561, 2
  %v3338 = vsel %vm87, %v3323, %v3325
  %v3339 = vsel %vm2232, %v3338, %v3327
  %v3340 = vsel %vm2234, %v3339, %v3329
  %v3341 = vsel %vm87, %v2890, %v3332
  %v3342 = vsel %vm2232, %v3341, %v3334
  %v3343 = vsel %vm2234, %v3342, %v3336
  %v3344 = vld [vmem:[%s12] sm:$0xff]
  %v3345 = vld [vmem:[%s12 + $0x8] sm:$0xff]
  %v3346 = vld [vmem:[%s12 + $0x10] sm:$0xff]
  %v3347 = vld [vmem:[%s12 + $0x18] sm:$0xff]
  %3350 = vrot.lane.b32.xlu0 %v3340, 48
  %v3351 = vpop.permute.xlu0 %3350
  %3352 = vrot.lane.b32.xlu0 %v3343, 48
  %v3353 = vpop.permute.xlu0 %3352
  %v3354 = vsel %vm1262, %v3351, 0
  %v3356 = vsel %vm1262, %v3353, 0
  %3358 = vmatprep.subr.mxu0 0.0
  %3359 = vmatpush1.msra.mxu0 %v3346
  %3360 = vmatprep.subr.mxu0 0.0
  %3361 = vmatpush1.msra.mxu0 %v3347
  %3362 = vmatprep.subr.mxu0 0.0
  %3363 = vmatpush1.msra.mxu0 0.0
  %3364 = vmatprep.subr.mxu0 0.0
  %3365 = vmatpush1.msra.mxu0 0.0
  %3366 = vmatprep.subr.mxu0 0.0
  %3367 = vmatpush1.msra.mxu0 0.0
  %3368 = vmatprep.subr.mxu0 0.0
  %3369 = vmatpush1.msra.mxu0 0.0
  %3370 = vmatprep.subr.mxu0 0.0
  %3371 = vmatpush1.msra.mxu0 0.0
  %3372 = vmatprep.subr.mxu0 0.0
  %3373 = vmatpush1.msra.mxu0 0.0
  %3374 = vmatprep.subr.mxu0 0.0
  %3375 = vmatpush1.msra.mxu0 0.0
  %3376 = vmatprep.subr.mxu0 0.0
  %3377 = vmatpush1.msra.mxu0 0.0
  %3378 = vmatprep.subr.mxu0 0.0
  %3379 = vmatpush1.msra.mxu0 0.0
  %3380 = vmatprep.subr.mxu0 0.0
  %3381 = vmatpush1.msra.mxu0 0.0
  %3382 = vmatprep.subr.mxu0 0.0
  %3383 = vmatpush1.msra.mxu0 0.0
  %3384 = vmatprep.subr.mxu0 0.0
  %3385 = vmatpush1.msra.mxu0 0.0
  %3386 = vmatprep.subr.mxu0 0.0
  %3387 = vmatpush1.msra.mxu0 0.0
  %3388 = vmatprep.subr.mxu0 0.0
  %3389 = vmatpush1.msra.mxu0 0.0
  %3390 = vmatprep.subr.mxu0 0.0
  %3391 = vmatpush1.msra.mxu0 0.0
  %3392 = vmatprep.subr.mxu0 0.0
  %3393 = vmatpush1.msra.mxu0 0.0
  %3394 = vmatprep.subr.mxu0 0.0
  %3395 = vmatpush1.msra.mxu0 0.0
  %3396 = vmatprep.subr.mxu0 0.0
  %3397 = vmatpush1.msra.mxu0 0.0
  %3398 = vmatprep.subr.mxu0 0.0
  %3399 = vmatpush1.msra.mxu0 0.0
  %3400 = vmatprep.subr.mxu0 0.0
  %3401 = vmatpush1.msra.mxu0 0.0
  %3402 = vmatprep.subr.mxu0 0.0
  %3403 = vmatpush1.msra.mxu0 0.0
  %3404 = vmatprep.subr.mxu0 0.0
  %3405 = vmatpush1.msra.mxu0 0.0
  %3406 = vmatprep.subr.mxu0 0.0
  %3407 = vmatpush1.msra.mxu0 0.0
  %3408 = vmatprep.subr.mxu0 0.0
  %3409 = vmatpush1.msra.mxu0 0.0
  %3410 = vmatprep.subr.mxu0 0.0
  %3411 = vmatpush1.msra.mxu0 0.0
  %3412 = vmatprep.subr.mxu0 0.0
  %3413 = vmatpush1.msra.mxu0 0.0
  %3414 = vmatprep.subr.mxu0 0.0
  %3415 = vmatpush1.msra.mxu0 0.0
  %3416 = vmatprep.subr.mxu0 0.0
  %3417 = vmatpush1.msra.mxu0 0.0
  %3418 = vmatprep.subr.mxu0 0.0
  %3419 = vmatpush1.msra.mxu0 0.0
  %3420 = vmatprep.subr.mxu0 0.0
  %3421 = vmatpush1.msra.mxu0 0.0
  %3422 = vmatprep.mubr.f32.mxu0 0.0
  %3423 = vmatmul.mubr.f32.gmra.mrb[0].mxu0 %v3354
  %v3424 = vpop.f32.mrb[0].mxu0
  %v3425 = vadd.f32 0.0, %v3424
  %v3426 = vpop.f32.mrb[0].mxu0
  %3427 = vmatprep.mubr.f32.mxu0 0.0
  %3428 = vmatmul.mubr.f32.gmra.mrb[0].mxu0 %v3356
  %v3429 = vpop.f32.mrb[0].mxu0
  %v3430 = vadd.f32 0.0, %v3429
  %v3431 = vpop.f32.mrb[0].mxu0
  %3432 = vdwg.mxu0
  %3435 = vrot.lane.b32.xlu0 %v3318, 64
  %v3436 = vpop.permute.xlu0 %3435
  %3437 = vrot.lane.b32.xlu0 %v3321, 64
  %v3438 = vpop.permute.xlu0 %3437
  %v3439 = vsel %vm1262, %v3436, 0
  %v3441 = vsel %vm1262, %v3438, 0
  %3443 = vmatprep.subr.mxu0 0.0
  %3444 = vmatpush1.msra.mxu0 %v3344
  %3445 = vmatprep.subr.mxu0 0.0
  %3446 = vmatpush1.msra.mxu0 %v3345
  %3447 = vmatprep.subr.mxu0 0.0
  %3448 = vmatpush1.msra.mxu0 0.0
  %3449 = vmatprep.subr.mxu0 0.0
  %3450 = vmatpush1.msra.mxu0 0.0
  %3451 = vmatprep.subr.mxu0 0.0
  %3452 = vmatpush1.msra.mxu0 0.0
  %3453 = vmatprep.subr.mxu0 0.0
  %3454 = vmatpush1.msra.mxu0 0.0
  %3455 = vmatprep.subr.mxu0 0.0
  %3456 = vmatpush1.msra.mxu0 0.0
  %3457 = vmatprep.subr.mxu0 0.0
  %3458 = vmatpush1.msra.mxu0 0.0
  %3459 = vmatprep.subr.mxu0 0.0
  %3460 = vmatpush1.msra.mxu0 0.0
  %3461 = vmatprep.subr.mxu0 0.0
  %3462 = vmatpush1.msra.mxu0 0.0
  %3463 = vmatprep.subr.mxu0 0.0
  %3464 = vmatpush1.msra.mxu0 0.0
  %3465 = vmatprep.subr.mxu0 0.0
  %3466 = vmatpush1.msra.mxu0 0.0
  %3467 = vmatprep.subr.mxu0 0.0
  %3468 = vmatpush1.msra.mxu0 0.0
  %3469 = vmatprep.subr.mxu0 0.0
  %3470 = vmatpush1.msra.mxu0 0.0
  %3471 = vmatprep.subr.mxu0 0.0
  %3472 = vmatpush1.msra.mxu0 0.0
  %3473 = vmatprep.subr.mxu0 0.0
  %3474 = vmatpush1.msra.mxu0 0.0
  %3475 = vmatprep.subr.mxu0 0.0
  %3476 = vmatpush1.msra.mxu0 0.0
  %3477 = vmatprep.subr.mxu0 0.0
  %3478 = vmatpush1.msra.mxu0 0.0
  %3479 = vmatprep.subr.mxu0 0.0
  %3480 = vmatpush1.msra.mxu0 0.0
  %3481 = vmatprep.subr.mxu0 0.0
  %3482 = vmatpush1.msra.mxu0 0.0
  %3483 = vmatprep.subr.mxu0 0.0
  %3484 = vmatpush1.msra.mxu0 0.0
  %3485 = vmatprep.subr.mxu0 0.0
  %3486 = vmatpush1.msra.mxu0 0.0
  %3487 = vmatprep.subr.mxu0 0.0
  %3488 = vmatpush1.msra.mxu0 0.0
  %3489 = vmatprep.subr.mxu0 0.0
  %3490 = vmatpush1.msra.mxu0 0.0
  %3491 = vmatprep.subr.mxu0 0.0
  %3492 = vmatpush1.msra.mxu0 0.0
  %3493 = vmatprep.subr.mxu0 0.0
  %3494 = vmatpush1.msra.mxu0 0.0
  %3495 = vmatprep.subr.mxu0 0.0
  %3496 = vmatpush1.msra.mxu0 0.0
  %3497 = vmatprep.subr.mxu0 0.0
  %3498 = vmatpush1.msra.mxu0 0.0
  %3499 = vmatprep.subr.mxu0 0.0
  %3500 = vmatpush1.msra.mxu0 0.0
  %3501 = vmatprep.subr.mxu0 0.0
  %3502 = vmatpush1.msra.mxu0 0.0
  %3503 = vmatprep.subr.mxu0 0.0
  %3504 = vmatpush1.msra.mxu0 0.0
  %3505 = vmatprep.subr.mxu0 0.0
  %3506 = vmatpush1.msra.mxu0 0.0
  %3507 = vmatprep.mubr.f32.mxu0 0.0
  %3508 = vmatmul.mubr.f32.gmra.mrb[0].mxu0 %v3439
  %v3509 = vpop.f32.mrb[0].mxu0
  %v3510 = vadd.f32 %v3425, %v3509
  %v3511 = vpop.f32.mrb[0].mxu0
  %3512 = vmatprep.mubr.f32.mxu0 0.0
  %3513 = vmatmul.mubr.f32.gmra.mrb[0].mxu0 %v3441
  %v3514 = vpop.f32.mrb[0].mxu0
  %v3515 = vadd.f32 %v3430, %v3514
  %v3516 = vpop.f32.mrb[0].mxu0
  %3517 = vdwg.mxu0
  %v3518 = vld [vmem:[%s13] sm:$0x1]
  %v3520 = vlaneseq
  %v3521 = vshrl.u32 %v3520, 7
  %v3522 = vsub.s32 0, %v3521
  %v3523 = vrot.slane %v3518, %v3522
  %v3525 = vadd.f32 %v3510, %v3523
  %v3526 = vadd.f32 %v3515, %v3523
  %v3527 = vld [vmem:[%s14] sm:$0x1]
  %v3528 = vld [vmem:[%s15] sm:$0x1]
  %v3529 = vsel %vm1288, %v3525, 0.0
  %3530 = vadd.xlane.f32.xlu0 %v3529
  %v3531 = vpop.xlane.xlu0 %3530
  %v3532 = vsel %vm1288, %v3526, 0.0
  %3533 = vadd.xlane.f32.xlu0 %v3532
  %v3534 = vpop.xlane.xlu0 %3533
  %v3535 = vrcp.pop 32.0
  %v3536 = vmul.f32 %v3531, %v3535
  %v3537 = vmul.f32 %v3534, %v3535
  %v3538 = vsub.f32 %v3525, %v3536
  %v3539 = vsub.f32 %v3526, %v3537
  %v3540 = vmul.f32 %v3538, %v3538
  %v3541 = vmul.f32 %v3539, %v3539
  %v3542 = vsel %vm1288, %v3540, 0.0
  %3543 = vadd.xlane.f32.xlu0 %v3542
  %v3544 = vpop.xlane.xlu0 %3543
  %v3545 = vsel %vm1288, %v3541, 0.0
  %3546 = vadd.xlane.f32.xlu0 %v3545
  %v3547 = vpop.xlane.xlu0 %3546
  %v3548 = vmul.f32 %v3544, %v3535
  %v3549 = vmul.f32 %v3547, %v3535
  %v3550 = vadd.f32 %v3548, 1e-05
  %v3551 = vadd.f32 %v3549, 1e-05
  %v3552 = vrsqrt.pop %v3550
  %v3553 = vrsqrt.pop %v3551
  %v3554 = vmul.f32 %v3538, %v3552
  %v3555 = vmul.f32 %v3539, %v3553
  %v3557 = vlaneseq
  %v3558 = vshrl.u32 %v3557, 7
  %v3559 = vsub.s32 0, %v3558
  %v3560 = vrot.slane %v3527, %v3559
  %v3562 = vmul.f32 %v3554, %v3560
  %v3563 = vmul.f32 %v3555, %v3560
  %v3565 = vlaneseq
  %v3566 = vshrl.u32 %v3565, 7
  %v3567 = vsub.s32 0, %v3566
  %v3568 = vrot.slane %v3528, %v3567
  %v3570 = vadd.f32 %v3562, %v3568
  %v3571 = vadd.f32 %v3563, %v3568
  %v3572 = vld [vmem:[%s16] sm:$0x1]
  %v3573 = vld [vmem:[%s17] sm:$0x1]
  %3576 = vrot.lane.b32.xlu0 %v3525, 96
  %v3577 = vpop.permute.xlu0 %3576
  %3578 = vrot.lane.b32.xlu0 %v3526, 96
  %v3579 = vpop.permute.xlu0 %3578
  %v3582 = vsel %vm414, %v3577, 0.0
  %3583 = vadd.xlane.f32.xlu0 %v3582
  %v3584 = vpop.xlane.xlu0 %3583
  %v3585 = vsel %vm414, %v3579, 0.0
  %3586 = vadd.xlane.f32.xlu0 %v3585
  %v3587 = vpop.xlane.xlu0 %3586
  %v3588 = vrcp.pop 8.0
  %v3589 = vmul.f32 %v3584, %v3588
  %v3590 = vmul.f32 %v3587, %v3588
  %v3591 = vsub.f32 %v3525, %v3589
  %v3592 = vsub.f32 %v3526, %v3590
  %v3593 = vmul.f32 %v3591, %v3591
  %v3594 = vmul.f32 %v3592, %v3592
  %3597 = vrot.lane.b32.xlu0 %v3593, 96
  %v3598 = vpop.permute.xlu0 %3597
  %3599 = vrot.lane.b32.xlu0 %v3594, 96
  %v3600 = vpop.permute.xlu0 %3599
  %v3603 = vsel %vm414, %v3598, 0.0
  %3604 = vadd.xlane.f32.xlu0 %v3603
  %v3605 = vpop.xlane.xlu0 %3604
  %v3606 = vsel %vm414, %v3600, 0.0
  %3607 = vadd.xlane.f32.xlu0 %v3606
  %v3608 = vpop.xlane.xlu0 %3607
  %v3609 = vmul.f32 %v3605, %v3588
  %v3610 = vmul.f32 %v3608, %v3588
  %v3611 = vadd.f32 %v3609, 1e-05
  %v3612 = vadd.f32 %v3610, 1e-05
  %v3613 = vrsqrt.pop %v3611
  %v3614 = vrsqrt.pop %v3612
  %v3615 = vmul.f32 %v3591, %v3613
  %v3616 = vmul.f32 %v3592, %v3614
  %v3618 = vlaneseq
  %v3619 = vshrl.u32 %v3618, 7
  %v3620 = vsub.s32 0, %v3619
  %v3621 = vrot.slane %v3572, %v3620
  %3622 = vrot.lane.b32.xlu0 %v3621, 32
  %v3623 = vpop.permute.xlu0 %3622
  %v3625 = vmul.f32 %v3615, %v3623
  %v3626 = vmul.f32 %v3616, %v3623
  %v3628 = vlaneseq
  %v3629 = vshrl.u32 %v3628, 7
  %v3630 = vsub.s32 0, %v3629
  %v3631 = vrot.slane %v3573, %v3630
  %3632 = vrot.lane.b32.xlu0 %v3631, 32
  %v3633 = vpop.permute.xlu0 %3632
  %v3635 = vadd.f32 %v3625, %v3633
  %v3636 = vadd.f32 %v3626, %v3633
  %vm3637 = vcmask 326912
  %v3638 = vsel %vm3637, %v3635, -inf
  %3639 = vmax.xlane.f32.xlu0 %v3638
  %v3640 = vpop.xlane.xlu0 %3639
  %v3641 = vsel %vm3637, %v3636, -inf
  %3642 = vmax.xlane.f32.xlu0 %v3641
  %v3643 = vpop.xlane.xlu0 %3642
  %v3644 = vsub.f32 %v3635, %v3640
  %v3645 = vsub.f32 %v3636, %v3643
  %v3646 = vmul.f32 %v3644, 1.442695
  %v3647 = vpow.pop %v3646
  %v3648 = vmul.f32 %v3645, 1.442695
  %v3649 = vpow.pop %v3648
  %3652 = vrot.lane.b32.xlu0 %v3647, 96
  %v3653 = vpop.permute.xlu0 %3652
  %3654 = vrot.lane.b32.xlu0 %v3649, 96
  %v3655 = vpop.permute.xlu0 %3654
  %v3658 = vsel %vm414, %v3653, 0.0
  %3659 = vadd.xlane.f32.xlu0 %v3658
  %v3660 = vpop.xlane.xlu0 %3659
  %v3661 = vsel %vm414, %v3655, 0.0
  %3662 = vadd.xlane.f32.xlu0 %v3661
  %v3663 = vpop.xlane.xlu0 %3662
  %v3664 = vrcp.pop %v3660
  %v3665 = vmul.f32 %v3647, %v3664
  %v3666 = vrcp.pop %v3663
  %v3667 = vmul.f32 %v3649, %v3666
  %v3668 = vsel %vm3637, %v3665, -inf
  %3669 = vmax.xlane.f32.xlu0 %v3668
  %v3670 = vpop.xlane.xlu0 %3669
  %v3671 = vsel %vm3637, %v3667, -inf
  %3672 = vmax.xlane.f32.xlu0 %v3671
  %v3673 = vpop.xlane.xlu0 %3672
  %vm3674 = vcmp.eq.f32.partialorder %v3665, %v3670
  %vm3675 = vcmp.eq.f32.partialorder %v3667, %v3673
  %v3676 = vsel %vm3674, %v3665, 0.0
  %v3677 = vsel %vm3675, %v3667, 0.0
  %3680 = vrot.lane.b32.xlu0 %v3570, 32
  %v3681 = vpop.permute.xlu0 %3680
  %3682 = vrot.lane.b32.xlu0 %v3571, 32
  %v3683 = vpop.permute.xlu0 %3682
  %3688 = vrot.lane.b32.xlu0 %v3676, 32
  %v3689 = vpop.permute.xlu0 %3688
  %3690 = vrot.lane.b32.xlu0 %v3677, 32
  %v3691 = vpop.permute.xlu0 %3690
  %v3694 = vsel %vm1288, %v1266, %v3681
  %v3695 = vsel %vm1288, %v1267, %v3683
  %vm3696 = vcmask 523264
  %v3697 = vsel %vm3696, %v3694, %v3689
  %v3698 = vsel %vm3696, %v3695, %v3691
  %vm3699 = vcmask 588800
  %3700 = vst.msk [vmem:[%s18] sm:$0xff] %vm3699, %v3697
  %3701 = vst.msk [vmem:[%s18 + $0x8] sm:$0xff] %vm3699, %v3698
  // Predicated region
  $region74: #{do_forward.1} parent=0 // pred_check
    _
  $region75: #{do_forward.1} parent=0 // pred_check_branch
    %3703 = sbr.rel (0) target = $region77
  $region76: #{do_forward.1} parent=0 // pred_region
    _
  $region77: #{do_forward.1} parent=0 // pred_fallthru
    _
  // Predicated region
  $region78: #{do_forward.1} parent=0 // pred_check
    _
  $region79: #{do_forward.1} parent=0 // pred_check_branch
    %3705 = sbr.rel (0) target = $region81
  $region80: #{do_forward.1} parent=0 // pred_region
    _
  $region81: #{do_forward.1} parent=0 // pred_fallthru
    _

</llo_original>
